<compile_context>
chip_gen: v7x
topology: tpu7x:2x2x1
jax: 0.10.0
libtpu: 0.0.40
codegen_flags: <defaults>
</compile_context>

<pallas_src>
import jax
import jax.numpy as jnp
from jax import lax
from jax.experimental import pallas as pl
from jax.experimental.pallas import tpu as pltpu


def _make_attention_kernel(TB, S, A, D2, *, approx_recip, batched_contraction):
    def kernel(lens_ref, x_ref, w1_ref, b1_ref, w2_ref, b2_ref, o_ref):
        x = x_ref[...]                              # (TB, S, 2H) compute dtype
        cdt = x.dtype

        # --- fused feed-forward over all TB*S rows (one big MXU M-dim) ------
        x2 = x.reshape(TB * S, D2)                  # leading-dim collapse (free)
        h = jnp.dot(x2, w1_ref[...], preferred_element_type=jnp.float32)
        h = jnp.maximum(h + b1_ref[...], 0.0)       # f32
        scores = jnp.dot(h.astype(cdt), w2_ref[...],
                         preferred_element_type=jnp.float32) + b2_ref[...]
        scores = scores.reshape(TB, S, A)           # leading-dim split (free)

        # --- batched, length-masked softmax over the sequence axis (f32) ----
        lens = lens_ref[...]                        # (TB, 1, 1) int32
        seq_idx = lax.broadcasted_iota(jnp.int32, (S, A), 0)
        valid = seq_idx[None, :, :] < lens          # (TB, S, A) bool
        s_m = jnp.where(valid, scores, -1e30)       # scores stay f32 -> safe fill
        m = jnp.max(s_m, axis=1, keepdims=True)     # (TB, 1, A)
        e = jnp.where(valid, jnp.exp(s_m - m), 0.0)
        denom = jnp.maximum(jnp.sum(e, axis=1, keepdims=True), 1e-30)
        wts = e * pl.reciprocal(denom, approx=approx_recip)   # (TB, S, A) f32
        wts = wts.astype(cdt)

        # --- contraction over S: out[t, d, a] = sum_s x[t,s,d] * wts[t,s,a] --
        if batched_contraction:
            out = lax.dot_general(
                x, wts,
                dimension_numbers=(((1,), (1,)), ((0,), (0,))),
                preferred_element_type=jnp.float32)            # (TB, 2H, A)
            o_ref[...] = out.astype(o_ref.dtype)                # single store
        else:
            # Fallback (older Mosaic without batched dot_general support).
            for t in range(TB):
                out_t = lax.dot_general(
                    x[t], wts[t],
                    dimension_numbers=(((0,), (0,)), ((), ())),
                    preferred_element_type=jnp.float32)         # (2H, A)
                o_ref[t] = out_t.astype(o_ref.dtype)

    return kernel


def _tpu_vmem_limit_bytes():
    """Per-generation scoped-VMEM budget (None -> leave compiler default)."""
    try:
        kind = jax.devices()[0].device_kind.lower()
    except Exception:
        return None
    if "v7" in kind:
        return 48 * 1024 * 1024          # 64 MiB physical per TC -> headroom
    if any(v in kind for v in ("v4", "v5", "v6")):
        return 112 * 1024 * 1024         # 128 MiB physical -> headroom
    return None


def _auto_block_b(B, S, D2, I, A, x_bytes, vmem_limit_bytes):
    """Pick TB: VMEM-capped, multiple of 8, >=1024 fused-GEMM rows if possible,
    and keep >=2 grid steps so v7x megacore can split the batch axis."""
    budget = vmem_limit_bytes or (48 * 1024 * 1024)
    per_b = (2 * S * D2 * x_bytes        # x block (double-buffered)
             + S * I * 4                 # h intermediate (f32)
             + 4 * S * A * 4             # scores / mask / exp / weights (f32)
             + 2 * D2 * A * 4)           # out block (double-buffered, f32)
    fixed = 2 * ((D2 * I + I * A) * x_bytes + (I + A) * 4) + (8 << 20)
    avail = max(budget - fixed, per_b)
    tb_vmem = max(1, avail // per_b)
    tb_rows = -(-1024 // S)              # aim for >=1024 rows in the fused GEMM
    tb = int(min(B, tb_vmem, max(8, tb_rows)))
    if tb >= 8:
        tb = (tb // 8) * 8               # sublane-aligned batch blocks
    if tb >= B and B > 8:                # keep >=2 grid steps (v7x megacore)
        tb = max(8, ((B // 2) // 8) * 8)
    return max(1, min(tb, B))


def attention_layers_forward(encoded_batch, text_lengths, w1, b1, w2, b2,
                             *, block_b=None, compute_dtype=jnp.bfloat16):
    """encoded_batch: (B, S, 2H) f32, text_lengths: (B,) int.
    Returns (B, 2H * A) f32, matching the PyTorch module."""
    B, S, D2 = encoded_batch.shape
    I = w1.shape[1]
    A = w2.shape[1]

    use_bf16 = (compute_dtype != jnp.float32)
    x_bytes = 2 if use_bf16 else 4

    vmem_limit = _tpu_vmem_limit_bytes()
    TB = block_b if block_b is not None else _auto_block_b(
        B, S, D2, I, A, x_bytes, vmem_limit)
    TB = max(1, min(TB, B))
    num_blocks = -(-B // TB)
    Bp = num_blocks * TB

    # S padded to a multiple of 8 -> in-kernel reshapes stay tile-aligned.
    Sp = -(-S // 8) * 8

    xk = encoded_batch
    lens = text_lengths.astype(jnp.int32)
    pad_b, pad_s = Bp - B, Sp - S
    if pad_b or pad_s:
        xk = jnp.pad(xk, ((0, pad_b), (0, pad_s), (0, 0)))
    if pad_b:
        lens = jnp.pad(lens, (0, pad_b))             # padded batch rows: length 0
    lens3 = lens.reshape(Bp, 1, 1)

    if use_bf16:
        # halves HBM->VMEM traffic for x (dominant bytes term) + bf16 MXU rate
        xk = xk.astype(compute_dtype)
        w1k = w1.astype(compute_dtype)
        w2k = w2.astype(compute_dtype)
    else:
        w1k, w2k = w1, w2
    b1k = b1.astype(jnp.float32).reshape(1, I)
    b2k = b2.astype(jnp.float32).reshape(1, A)

    cp_kwargs = dict(dimension_semantics=("parallel",))
    if vmem_limit is not None:
        cp_kwargs["vmem_limit_bytes"] = int(vmem_limit)
    compiler_params = pltpu.CompilerParams(**cp_kwargs)

    def build(batched_contraction):
        kernel = _make_attention_kernel(
            TB, Sp, A, D2, approx_recip=use_bf16,
            batched_contraction=batched_contraction)
        return pl.pallas_call(
            kernel,
            out_shape=jax.ShapeDtypeStruct((Bp, D2, A), jnp.float32),
            grid=(num_blocks,),
            in_specs=[
                pl.BlockSpec((TB, 1, 1),   lambda i: (i, 0, 0)),   # lengths
                pl.BlockSpec((TB, Sp, D2), lambda i: (i, 0, 0)),   # x
                pl.BlockSpec((D2, I),      lambda i: (0, 0)),      # W1
                pl.BlockSpec((1, I),       lambda i: (0, 0)),      # b1
                pl.BlockSpec((I, A),       lambda i: (0, 0)),      # W2
                pl.BlockSpec((1, A),       lambda i: (0, 0)),      # b2
            ],
            out_specs=pl.BlockSpec((TB, D2, A), lambda i: (i, 0, 0)),
            compiler_params=compiler_params,
        )

    args = (lens3, xk, w1k, b1k, w2k, b2k)
    try:
        out = build(True)(*args)       # preferred: fully batched contraction
    except Exception:
        out = build(False)(*args)      # fallback: per-sequence contraction

    # (Bp, 2H, A) -> drop padding -> FREE row-major flatten (no transpose).
    return out[:B].reshape(B, D2 * A)


def _reference(encoded_batch, text_lengths, w1, b1, w2, b2):
    """Pure-JAX f32 reference mirroring the PyTorch per-sentence loop."""
    B, S, D2 = encoded_batch.shape
    outs = []
    for bi in range(B):
        L = int(text_lengths[bi])
        x = encoded_batch[bi, :L, :]                   # (L, 2H)
        h = jnp.maximum(x @ w1 + b1[0], 0.0)
        s = h @ w2 + b2[0]                             # (L, A)
        w = jax.nn.softmax(s, axis=0)
        outs.append((x.T @ w).reshape(-1))
    return jnp.stack(outs, axis=0)


if __name__ == "__main__":
    # Small deterministic setup
    encoding_hidden_size = 16            # 2H = 32
    attention_intermediate_size = 32
    number_of_attention_heads = 4
    B, S = 16, 8                         # auto TB -> 8 -> 2 grid steps
    D2 = encoding_hidden_size * 2

    key = jax.random.PRNGKey(0)
    k1, k2, k3, k4, k5, k6 = jax.random.split(key, 6)

    # Linear(2H -> I), Linear(I -> A), stored as (in, out) so kernel does x@W+b.
    w1 = (jax.random.normal(k1, (D2, attention_intermediate_size), jnp.float32)
          * (1.0 / jnp.sqrt(D2)))
    b1 = jax.random.normal(k2, (1, attention_intermediate_size), jnp.float32) * 0.01
    w2 = (jax.random.normal(k3, (attention_intermediate_size,
                                 number_of_attention_heads), jnp.float32)
          * (1.0 / jnp.sqrt(attention_intermediate_size)))
    b2 = jax.random.normal(k4, (1, number_of_attention_heads), jnp.float32) * 0.01

    # Inputs: zero-padded beyond each sentence length (matches PyTorch assert)
    text_lengths = (1 + jax.random.randint(k6, (B,), 0, S)).astype(jnp.int32)
    text_lengths = text_lengths.at[0].set(S)           # include a full-length seq
    x = jax.random.normal(k5, (B, S, D2), jnp.float32)
    seq_mask = (jnp.arange(S)[None, :, None] < text_lengths[:, None, None])
    encoded_batch = jnp.where(seq_mask, x, 0.0)

    ref = _reference(encoded_batch, text_lengths, w1, b1, w2, b2)

    # Full-precision path (exact reciprocal): tight check.
    out_f32 = attention_layers_forward(
        encoded_batch, text_lengths, w1, b1, w2, b2, compute_dtype=jnp.float32)
    out_f32 = jax.block_until_ready(out_f32)
    assert out_f32.shape == (B, D2 * number_of_attention_heads)
    assert jnp.allclose(out_f32, ref, atol=1e-4, rtol=1e-4)

    # Fast bf16-MXU path (default): looser tolerance for bf16 operands.
    out_bf16 = attention_layers_forward(
        encoded_batch, text_lengths, w1, b1, w2, b2, compute_dtype=jnp.bfloat16)
    out_bf16 = jax.block_until_ready(out_bf16)
    assert out_bf16.shape == (B, D2 * number_of_attention_heads)
    assert jnp.allclose(out_bf16, ref, atol=3e-2, rtol=3e-2)

    print("KERNEL_OK")
</pallas_src>

<mosaic_0001>
module attributes {stable_mosaic.version = 11 : i64} {
  func.func @kernel(%arg0: i32, %arg1: memref<8x1x1xi32, #tpu.memory_space<vmem>>, %arg2: memref<8x8x32xf32, #tpu.memory_space<vmem>>, %arg3: memref<32x32xf32, #tpu.memory_space<vmem>>, %arg4: memref<1x32xf32, #tpu.memory_space<vmem>>, %arg5: memref<32x4xf32, #tpu.memory_space<vmem>>, %arg6: memref<1x4xf32, #tpu.memory_space<vmem>>, %arg7: memref<8x32x4xf32, #tpu.memory_space<vmem>>) attributes {dimension_semantics = [#tpu.dimension_semantics<parallel>], iteration_bounds = array<i64: 2>, scalar_prefetch = 0 : i64, scratch_operands = 0 : i64, tpu.core_type = #tpu.core_type<tc>, window_params = [{transform_indices = @transform_0, window_bounds = array<i64: 8, 1, 1>}, {transform_indices = @transform_1, window_bounds = array<i64: 8, 8, 32>}, {pipeline_mode = #tpu.pipeline_mode<synchronous>, transform_indices = @transform_2, window_bounds = array<i64: 32, 32>}, {pipeline_mode = #tpu.pipeline_mode<synchronous>, transform_indices = @transform_3, window_bounds = array<i64: 1, 32>}, {pipeline_mode = #tpu.pipeline_mode<synchronous>, transform_indices = @transform_4, window_bounds = array<i64: 32, 4>}, {pipeline_mode = #tpu.pipeline_mode<synchronous>, transform_indices = @transform_5, window_bounds = array<i64: 1, 4>}, {transform_indices = @transform_6, window_bounds = array<i64: 8, 32, 4>}]} {
    %c0 = arith.constant 0 : index
    %c0_0 = arith.constant 0 : index
    %c0_1 = arith.constant 0 : index
    %0 = vector.load %arg2[%c0, %c0_0, %c0_1] : memref<8x8x32xf32, #tpu.memory_space<vmem>>, vector<8x8x32xf32>
    %1 = vector.shape_cast %0 : vector<8x8x32xf32> to vector<64x32xf32>
    %c0_2 = arith.constant 0 : index
    %c0_3 = arith.constant 0 : index
    %2 = vector.load %arg3[%c0_2, %c0_3] : memref<32x32xf32, #tpu.memory_space<vmem>>, vector<32x32xf32>
    %cst = arith.constant dense<0.000000e+00> : vector<64x32xf32>
    %3 = tpu.matmul %1, %2, %cst {dimension_numbers = #tpu.dot_dimension_numbers<[1], [0], [0], [1], [0, 0, 1, 1], [], []>} : vector<64x32xf32>, vector<32x32xf32>, vector<64x32xf32> -> vector<64x32xf32>
    %c0_4 = arith.constant 0 : index
    %c0_5 = arith.constant 0 : index
    %4 = vector.load %arg4[%c0_4, %c0_5] : memref<1x32xf32, #tpu.memory_space<vmem>>, vector<1x32xf32>
    %5 = vector.broadcast %4 : vector<1x32xf32> to vector<64x32xf32>
    %6 = arith.addf %3, %5 : vector<64x32xf32>
    %cst_6 = arith.constant 0.000000e+00 : f32
    %7 = vector.broadcast %cst_6 : f32 to vector<64x32xf32>
    %8 = arith.maximumf %6, %7 : vector<64x32xf32>
    %c0_7 = arith.constant 0 : index
    %c0_8 = arith.constant 0 : index
    %9 = vector.load %arg5[%c0_7, %c0_8] : memref<32x4xf32, #tpu.memory_space<vmem>>, vector<32x4xf32>
    %cst_9 = arith.constant dense<0.000000e+00> : vector<64x4xf32>
    %10 = tpu.matmul %8, %9, %cst_9 {dimension_numbers = #tpu.dot_dimension_numbers<[1], [0], [0], [1], [0, 0, 1, 1], [], []>} : vector<64x32xf32>, vector<32x4xf32>, vector<64x4xf32> -> vector<64x4xf32>
    %c0_10 = arith.constant 0 : index
    %c0_11 = arith.constant 0 : index
    %11 = vector.load %arg6[%c0_10, %c0_11] : memref<1x4xf32, #tpu.memory_space<vmem>>, vector<1x4xf32>
    %12 = vector.broadcast %11 : vector<1x4xf32> to vector<64x4xf32>
    %13 = arith.addf %10, %12 : vector<64x4xf32>
    %14 = vector.shape_cast %13 : vector<64x4xf32> to vector<8x8x4xf32>
    %c0_12 = arith.constant 0 : index
    %c0_13 = arith.constant 0 : index
    %c0_14 = arith.constant 0 : index
    %15 = vector.load %arg1[%c0_12, %c0_13, %c0_14] : memref<8x1x1xi32, #tpu.memory_space<vmem>>, vector<8x1x1xi32>
    %16 = tpu.iota {dimensions = array<i32: 0>} : vector<8x4xi32>
    %17 = vector.shape_cast %16 : vector<8x4xi32> to vector<1x8x4xi32>
    %18 = vector.broadcast %17 : vector<1x8x4xi32> to vector<8x8x4xi32>
    %19 = vector.broadcast %15 : vector<8x1x1xi32> to vector<8x8x4xi32>
    %20 = arith.cmpi slt, %18, %19 : vector<8x8x4xi32>
    %cst_15 = arith.constant -1.000000e+30 : f32
    %21 = vector.broadcast %cst_15 : f32 to vector<8x8x4xf32>
    %22 = arith.select %20, %14, %21 : vector<8x8x4xi1>, vector<8x8x4xf32>
    %cst_16 = arith.constant dense<0xFF800000> : vector<8x4xf32>
    %23 = vector.multi_reduction <maximumf>, %22, %cst_16 [1] : vector<8x8x4xf32> to vector<8x4xf32>
    %24 = vector.shape_cast %23 : vector<8x4xf32> to vector<8x1x4xf32>
    %25 = vector.broadcast %24 : vector<8x1x4xf32> to vector<8x8x4xf32>
    %26 = arith.subf %22, %25 : vector<8x8x4xf32>
    %27 = math.exp %26 : vector<8x8x4xf32>
    %cst_17 = arith.constant 0.000000e+00 : f32
    %28 = vector.broadcast %cst_17 : f32 to vector<8x8x4xf32>
    %29 = arith.select %20, %27, %28 : vector<8x8x4xi1>, vector<8x8x4xf32>
    %cst_18 = arith.constant dense<0.000000e+00> : vector<8x4xf32>
    %30 = vector.multi_reduction <add>, %29, %cst_18 [1] : vector<8x8x4xf32> to vector<8x4xf32>
    %31 = vector.shape_cast %30 : vector<8x4xf32> to vector<8x1x4xf32>
    %cst_19 = arith.constant 1.000000e-30 : f32
    %32 = vector.broadcast %cst_19 : f32 to vector<8x1x4xf32>
    %33 = arith.maximumf %31, %32 : vector<8x1x4xf32>
    %34 = tpu.reciprocal %33 : vector<8x1x4xf32> -> vector<8x1x4xf32>
    %35 = vector.broadcast %34 : vector<8x1x4xf32> to vector<8x8x4xf32>
    %36 = arith.mulf %29, %35 : vector<8x8x4xf32>
    %cst_20 = arith.constant dense<0.000000e+00> : vector<8x32x4xf32>
    %37 = tpu.matmul %0, %36, %cst_20 {dimension_numbers = #tpu.dot_dimension_numbers<[1], [1], [2], [2], [0, 0, 0, 2, 1, 2], [0], [0]>} : vector<8x8x32xf32>, vector<8x8x4xf32>, vector<8x32x4xf32> -> vector<8x32x4xf32>
    %c0_21 = arith.constant 0 : index
    %c0_22 = arith.constant 0 : index
    %c0_23 = arith.constant 0 : index
    %38 = vector.load %arg7[%c0_21, %c0_22, %c0_23] : memref<8x32x4xf32, #tpu.memory_space<vmem>>, vector<8x32x4xf32>
    tpu.vector_store %arg7[%c0_21, %c0_22, %c0_23], %37 {strides = array<i32>} : memref<8x32x4xf32, #tpu.memory_space<vmem>>, vector<8x32x4xf32>,
    return
  }
  func.func @transform_0(%arg0: i32) -> (i32, i32, i32) {
    %c0_i32 = arith.constant 0 : i32
    %c0_i32_0 = arith.constant 0 : i32
    %c0_i32_1 = arith.constant 0 : i32
    return %arg0, %c0_i32, %c0_i32_0 : i32, i32, i32
  }
  func.func @transform_1(%arg0: i32) -> (i32, i32, i32) {
    %c0_i32 = arith.constant 0 : i32
    %c0_i32_0 = arith.constant 0 : i32
    %c0_i32_1 = arith.constant 0 : i32
    return %arg0, %c0_i32, %c0_i32_0 : i32, i32, i32
  }
  func.func @transform_2(%arg0: i32) -> (i32, i32) {
    %c0_i32 = arith.constant 0 : i32
    %c0_i32_0 = arith.constant 0 : i32
    %c0_i32_1 = arith.constant 0 : i32
    return %c0_i32, %c0_i32_0 : i32, i32
  }
  func.func @transform_3(%arg0: i32) -> (i32, i32) {
    %c0_i32 = arith.constant 0 : i32
    %c0_i32_0 = arith.constant 0 : i32
    %c0_i32_1 = arith.constant 0 : i32
    return %c0_i32, %c0_i32_0 : i32, i32
  }
  func.func @transform_4(%arg0: i32) -> (i32, i32) {
    %c0_i32 = arith.constant 0 : i32
    %c0_i32_0 = arith.constant 0 : i32
    %c0_i32_1 = arith.constant 0 : i32
    return %c0_i32, %c0_i32_0 : i32, i32
  }
  func.func @transform_5(%arg0: i32) -> (i32, i32) {
    %c0_i32 = arith.constant 0 : i32
    %c0_i32_0 = arith.constant 0 : i32
    %c0_i32_1 = arith.constant 0 : i32
    return %c0_i32, %c0_i32_0 : i32, i32
  }
  func.func @transform_6(%arg0: i32) -> (i32, i32, i32) {
    %c0_i32 = arith.constant 0 : i32
    %c0_i32_0 = arith.constant 0 : i32
    %c0_i32_1 = arith.constant 0 : i32
    return %arg0, %c0_i32, %c0_i32_0 : i32, i32, i32
  }
}

module attributes {stable_mosaic.version = 11 : i64} {
  func.func @kernel(%arg0: i32, %arg1: memref<8x1x1xi32, #tpu.memory_space<vmem>>, %arg2: memref<8x8x32xf32, #tpu.memory_space<vmem>>, %arg3: memref<32x32xf32, #tpu.memory_space<vmem>>, %arg4: memref<1x32xf32, #tpu.memory_space<vmem>>, %arg5: memref<32x4xf32, #tpu.memory_space<vmem>>, %arg6: memref<1x4xf32, #tpu.memory_space<vmem>>, %arg7: memref<8x32x4xf32, #tpu.memory_space<vmem>>) attributes {dimension_semantics = [#tpu.dimension_semantics<parallel>], iteration_bounds = array<i64: 2>, scalar_prefetch = 0 : i64, scratch_operands = 0 : i64, tpu.core_type = #tpu.core_type<tc>, window_params = [{transform_indices = @transform_0, window_bounds = array<i64: 8, 1, 1>}, {transform_indices = @transform_1, window_bounds = array<i64: 8, 8, 32>}, {pipeline_mode = #tpu.pipeline_mode<synchronous>, transform_indices = @transform_2, window_bounds = array<i64: 32, 32>}, {pipeline_mode = #tpu.pipeline_mode<synchronous>, transform_indices = @transform_3, window_bounds = array<i64: 1, 32>}, {pipeline_mode = #tpu.pipeline_mode<synchronous>, transform_indices = @transform_4, window_bounds = array<i64: 32, 4>}, {pipeline_mode = #tpu.pipeline_mode<synchronous>, transform_indices = @transform_5, window_bounds = array<i64: 1, 4>}, {transform_indices = @transform_6, window_bounds = array<i64: 8, 32, 4>}]} {
    %c0 = arith.constant 0 : index
    %c0_0 = arith.constant 0 : index
    %c0_1 = arith.constant 0 : index
    %0 = vector.load %arg2[%c0, %c0_0, %c0_1] : memref<8x8x32xf32, #tpu.memory_space<vmem>>, vector<8x8x32xf32>
    %1 = vector.shape_cast %0 : vector<8x8x32xf32> to vector<64x32xf32>
    %c0_2 = arith.constant 0 : index
    %c0_3 = arith.constant 0 : index
    %2 = vector.load %arg3[%c0_2, %c0_3] : memref<32x32xf32, #tpu.memory_space<vmem>>, vector<32x32xf32>
    %cst = arith.constant dense<0.000000e+00> : vector<64x32xf32>
    %3 = tpu.matmul %1, %2, %cst {dimension_numbers = #tpu.dot_dimension_numbers<[1], [0], [0], [1], [0, 0, 1, 1], [], []>} : vector<64x32xf32>, vector<32x32xf32>, vector<64x32xf32> -> vector<64x32xf32>
    %c0_4 = arith.constant 0 : index
    %c0_5 = arith.constant 0 : index
    %4 = vector.load %arg4[%c0_4, %c0_5] : memref<1x32xf32, #tpu.memory_space<vmem>>, vector<1x32xf32>
    %5 = vector.broadcast %4 : vector<1x32xf32> to vector<64x32xf32>
    %6 = arith.addf %3, %5 : vector<64x32xf32>
    %cst_6 = arith.constant 0.000000e+00 : f32
    %7 = vector.broadcast %cst_6 : f32 to vector<64x32xf32>
    %8 = arith.maximumf %6, %7 : vector<64x32xf32>
    %c0_7 = arith.constant 0 : index
    %c0_8 = arith.constant 0 : index
    %9 = vector.load %arg5[%c0_7, %c0_8] : memref<32x4xf32, #tpu.memory_space<vmem>>, vector<32x4xf32>
    %cst_9 = arith.constant dense<0.000000e+00> : vector<64x4xf32>
    %10 = tpu.matmul %8, %9, %cst_9 {dimension_numbers = #tpu.dot_dimension_numbers<[1], [0], [0], [1], [0, 0, 1, 1], [], []>} : vector<64x32xf32>, vector<32x4xf32>, vector<64x4xf32> -> vector<64x4xf32>
    %c0_10 = arith.constant 0 : index
    %c0_11 = arith.constant 0 : index
    %11 = vector.load %arg6[%c0_10, %c0_11] : memref<1x4xf32, #tpu.memory_space<vmem>>, vector<1x4xf32>
    %12 = vector.broadcast %11 : vector<1x4xf32> to vector<64x4xf32>
    %13 = arith.addf %10, %12 : vector<64x4xf32>
    %14 = vector.shape_cast %13 : vector<64x4xf32> to vector<8x8x4xf32>
    %c0_12 = arith.constant 0 : index
    %c0_13 = arith.constant 0 : index
    %c0_14 = arith.constant 0 : index
    %15 = vector.load %arg1[%c0_12, %c0_13, %c0_14] : memref<8x1x1xi32, #tpu.memory_space<vmem>>, vector<8x1x1xi32>
    %16 = tpu.iota {dimensions = array<i32: 0>} : vector<8x4xi32>
    %17 = vector.shape_cast %16 : vector<8x4xi32> to vector<1x8x4xi32>
    %18 = vector.broadcast %17 : vector<1x8x4xi32> to vector<8x8x4xi32>
    %19 = vector.broadcast %15 : vector<8x1x1xi32> to vector<8x8x4xi32>
    %20 = arith.cmpi slt, %18, %19 : vector<8x8x4xi32>
    %cst_15 = arith.constant -1.000000e+30 : f32
    %21 = vector.broadcast %cst_15 : f32 to vector<8x8x4xf32>
    %22 = arith.select %20, %14, %21 : vector<8x8x4xi1>, vector<8x8x4xf32>
    %cst_16 = arith.constant dense<0xFF800000> : vector<8x4xf32>
    %23 = vector.multi_reduction <maximumf>, %22, %cst_16 [1] : vector<8x8x4xf32> to vector<8x4xf32>
    %24 = vector.shape_cast %23 : vector<8x4xf32> to vector<8x1x4xf32>
    %25 = vector.broadcast %24 : vector<8x1x4xf32> to vector<8x8x4xf32>
    %26 = arith.subf %22, %25 : vector<8x8x4xf32>
    %27 = math.exp %26 : vector<8x8x4xf32>
    %cst_17 = arith.constant 0.000000e+00 : f32
    %28 = vector.broadcast %cst_17 : f32 to vector<8x8x4xf32>
    %29 = arith.select %20, %27, %28 : vector<8x8x4xi1>, vector<8x8x4xf32>
    %cst_18 = arith.constant dense<0.000000e+00> : vector<8x4xf32>
    %30 = vector.multi_reduction <add>, %29, %cst_18 [1] : vector<8x8x4xf32> to vector<8x4xf32>
    %31 = vector.shape_cast %30 : vector<8x4xf32> to vector<8x1x4xf32>
    %cst_19 = arith.constant 1.000000e-30 : f32
    %32 = vector.broadcast %cst_19 : f32 to vector<8x1x4xf32>
    %33 = arith.maximumf %31, %32 : vector<8x1x4xf32>
    %34 = tpu.reciprocal %33 : vector<8x1x4xf32> -> vector<8x1x4xf32>
    %35 = vector.broadcast %34 : vector<8x1x4xf32> to vector<8x8x4xf32>
    %36 = arith.mulf %29, %35 : vector<8x8x4xf32>
    %37 = vector.extract_strided_slice %0 {offsets = [0, 0, 0], sizes = [1, 8, 32], strides = [1, 1, 1]} : vector<8x8x32xf32> to vector<1x8x32xf32>
    %38 = vector.shape_cast %37 : vector<1x8x32xf32> to vector<8x32xf32>
    %39 = vector.extract_strided_slice %36 {offsets = [0, 0, 0], sizes = [1, 8, 4], strides = [1, 1, 1]} : vector<8x8x4xf32> to vector<1x8x4xf32>
    %40 = vector.shape_cast %39 : vector<1x8x4xf32> to vector<8x4xf32>
    %cst_20 = arith.constant dense<0.000000e+00> : vector<32x4xf32>
    %41 = tpu.matmul %38, %40, %cst_20 {dimension_numbers = #tpu.dot_dimension_numbers<[0], [0], [1], [1], [0, 1, 1, 1], [], []>} : vector<8x32xf32>, vector<8x4xf32>, vector<32x4xf32> -> vector<32x4xf32>
    %c0_21 = arith.constant 0 : index
    %c0_22 = arith.constant 0 : index
    %c0_23 = arith.constant 0 : index
    %42 = vector.load %arg7[%c0_21, %c0_22, %c0_23] : memref<8x32x4xf32, #tpu.memory_space<vmem>>, vector<1x32x4xf32>
    %43 = vector.shape_cast %42 : vector<1x32x4xf32> to vector<32x4xf32>
    %44 = vector.shape_cast %41 : vector<32x4xf32> to vector<1x32x4xf32>
    tpu.vector_store %arg7[%c0_21, %c0_22, %c0_23], %44 {strides = array<i32>} : memref<8x32x4xf32, #tpu.memory_space<vmem>>, vector<1x32x4xf32>,
    %45 = vector.extract_strided_slice %0 {offsets = [1, 0, 0], sizes = [1, 8, 32], strides = [1, 1, 1]} : vector<8x8x32xf32> to vector<1x8x32xf32>
    %46 = vector.shape_cast %45 : vector<1x8x32xf32> to vector<8x32xf32>
    %47 = vector.extract_strided_slice %36 {offsets = [1, 0, 0], sizes = [1, 8, 4], strides = [1, 1, 1]} : vector<8x8x4xf32> to vector<1x8x4xf32>
    %48 = vector.shape_cast %47 : vector<1x8x4xf32> to vector<8x4xf32>
    %cst_24 = arith.constant dense<0.000000e+00> : vector<32x4xf32>
    %49 = tpu.matmul %46, %48, %cst_24 {dimension_numbers = #tpu.dot_dimension_numbers<[0], [0], [1], [1], [0, 1, 1, 1], [], []>} : vector<8x32xf32>, vector<8x4xf32>, vector<32x4xf32> -> vector<32x4xf32>
    %c1 = arith.constant 1 : index
    %c0_25 = arith.constant 0 : index
    %c0_26 = arith.constant 0 : index
    %50 = vector.load %arg7[%c1, %c0_25, %c0_26] : memref<8x32x4xf32, #tpu.memory_space<vmem>>, vector<1x32x4xf32>
    %51 = vector.shape_cast %50 : vector<1x32x4xf32> to vector<32x4xf32>
    %52 = vector.shape_cast %49 : vector<32x4xf32> to vector<1x32x4xf32>
    tpu.vector_store %arg7[%c1, %c0_25, %c0_26], %52 {strides = array<i32>} : memref<8x32x4xf32, #tpu.memory_space<vmem>>, vector<1x32x4xf32>,
    %53 = vector.extract_strided_slice %0 {offsets = [2, 0, 0], sizes = [1, 8, 32], strides = [1, 1, 1]} : vector<8x8x32xf32> to vector<1x8x32xf32>
    %54 = vector.shape_cast %53 : vector<1x8x32xf32> to vector<8x32xf32>
    %55 = vector.extract_strided_slice %36 {offsets = [2, 0, 0], sizes = [1, 8, 4], strides = [1, 1, 1]} : vector<8x8x4xf32> to vector<1x8x4xf32>
    %56 = vector.shape_cast %55 : vector<1x8x4xf32> to vector<8x4xf32>
    %cst_27 = arith.constant dense<0.000000e+00> : vector<32x4xf32>
    %57 = tpu.matmul %54, %56, %cst_27 {dimension_numbers = #tpu.dot_dimension_numbers<[0], [0], [1], [1], [0, 1, 1, 1], [], []>} : vector<8x32xf32>, vector<8x4xf32>, vector<32x4xf32> -> vector<32x4xf32>
    %c2 = arith.constant 2 : index
    %c0_28 = arith.constant 0 : index
    %c0_29 = arith.constant 0 : index
    %58 = vector.load %arg7[%c2, %c0_28, %c0_29] : memref<8x32x4xf32, #tpu.memory_space<vmem>>, vector<1x32x4xf32>
    %59 = vector.shape_cast %58 : vector<1x32x4xf32> to vector<32x4xf32>
    %60 = vector.shape_cast %57 : vector<32x4xf32> to vector<1x32x4xf32>
    tpu.vector_store %arg7[%c2, %c0_28, %c0_29], %60 {strides = array<i32>} : memref<8x32x4xf32, #tpu.memory_space<vmem>>, vector<1x32x4xf32>,
    %61 = vector.extract_strided_slice %0 {offsets = [3, 0, 0], sizes = [1, 8, 32], strides = [1, 1, 1]} : vector<8x8x32xf32> to vector<1x8x32xf32>
    %62 = vector.shape_cast %61 : vector<1x8x32xf32> to vector<8x32xf32>
    %63 = vector.extract_strided_slice %36 {offsets = [3, 0, 0], sizes = [1, 8, 4], strides = [1, 1, 1]} : vector<8x8x4xf32> to vector<1x8x4xf32>
    %64 = vector.shape_cast %63 : vector<1x8x4xf32> to vector<8x4xf32>
    %cst_30 = arith.constant dense<0.000000e+00> : vector<32x4xf32>
    %65 = tpu.matmul %62, %64, %cst_30 {dimension_numbers = #tpu.dot_dimension_numbers<[0], [0], [1], [1], [0, 1, 1, 1], [], []>} : vector<8x32xf32>, vector<8x4xf32>, vector<32x4xf32> -> vector<32x4xf32>
    %c3 = arith.constant 3 : index
    %c0_31 = arith.constant 0 : index
    %c0_32 = arith.constant 0 : index
    %66 = vector.load %arg7[%c3, %c0_31, %c0_32] : memref<8x32x4xf32, #tpu.memory_space<vmem>>, vector<1x32x4xf32>
    %67 = vector.shape_cast %66 : vector<1x32x4xf32> to vector<32x4xf32>
    %68 = vector.shape_cast %65 : vector<32x4xf32> to vector<1x32x4xf32>
    tpu.vector_store %arg7[%c3, %c0_31, %c0_32], %68 {strides = array<i32>} : memref<8x32x4xf32, #tpu.memory_space<vmem>>, vector<1x32x4xf32>,
    %69 = vector.extract_strided_slice %0 {offsets = [4, 0, 0], sizes = [1, 8, 32], strides = [1, 1, 1]} : vector<8x8x32xf32> to vector<1x8x32xf32>
    %70 = vector.shape_cast %69 : vector<1x8x32xf32> to vector<8x32xf32>
    %71 = vector.extract_strided_slice %36 {offsets = [4, 0, 0], sizes = [1, 8, 4], strides = [1, 1, 1]} : vector<8x8x4xf32> to vector<1x8x4xf32>
    %72 = vector.shape_cast %71 : vector<1x8x4xf32> to vector<8x4xf32>
    %cst_33 = arith.constant dense<0.000000e+00> : vector<32x4xf32>
    %73 = tpu.matmul %70, %72, %cst_33 {dimension_numbers = #tpu.dot_dimension_numbers<[0], [0], [1], [1], [0, 1, 1, 1], [], []>} : vector<8x32xf32>, vector<8x4xf32>, vector<32x4xf32> -> vector<32x4xf32>
    %c4 = arith.constant 4 : index
    %c0_34 = arith.constant 0 : index
    %c0_35 = arith.constant 0 : index
    %74 = vector.load %arg7[%c4, %c0_34, %c0_35] : memref<8x32x4xf32, #tpu.memory_space<vmem>>, vector<1x32x4xf32>
    %75 = vector.shape_cast %74 : vector<1x32x4xf32> to vector<32x4xf32>
    %76 = vector.shape_cast %73 : vector<32x4xf32> to vector<1x32x4xf32>
    tpu.vector_store %arg7[%c4, %c0_34, %c0_35], %76 {strides = array<i32>} : memref<8x32x4xf32, #tpu.memory_space<vmem>>, vector<1x32x4xf32>,
    %77 = vector.extract_strided_slice %0 {offsets = [5, 0, 0], sizes = [1, 8, 32], strides = [1, 1, 1]} : vector<8x8x32xf32> to vector<1x8x32xf32>
    %78 = vector.shape_cast %77 : vector<1x8x32xf32> to vector<8x32xf32>
    %79 = vector.extract_strided_slice %36 {offsets = [5, 0, 0], sizes = [1, 8, 4], strides = [1, 1, 1]} : vector<8x8x4xf32> to vector<1x8x4xf32>
    %80 = vector.shape_cast %79 : vector<1x8x4xf32> to vector<8x4xf32>
    %cst_36 = arith.constant dense<0.000000e+00> : vector<32x4xf32>
    %81 = tpu.matmul %78, %80, %cst_36 {dimension_numbers = #tpu.dot_dimension_numbers<[0], [0], [1], [1], [0, 1, 1, 1], [], []>} : vector<8x32xf32>, vector<8x4xf32>, vector<32x4xf32> -> vector<32x4xf32>
    %c5 = arith.constant 5 : index
    %c0_37 = arith.constant 0 : index
    %c0_38 = arith.constant 0 : index
    %82 = vector.load %arg7[%c5, %c0_37, %c0_38] : memref<8x32x4xf32, #tpu.memory_space<vmem>>, vector<1x32x4xf32>
    %83 = vector.shape_cast %82 : vector<1x32x4xf32> to vector<32x4xf32>
    %84 = vector.shape_cast %81 : vector<32x4xf32> to vector<1x32x4xf32>
    tpu.vector_store %arg7[%c5, %c0_37, %c0_38], %84 {strides = array<i32>} : memref<8x32x4xf32, #tpu.memory_space<vmem>>, vector<1x32x4xf32>,
    %85 = vector.extract_strided_slice %0 {offsets = [6, 0, 0], sizes = [1, 8, 32], strides = [1, 1, 1]} : vector<8x8x32xf32> to vector<1x8x32xf32>
    %86 = vector.shape_cast %85 : vector<1x8x32xf32> to vector<8x32xf32>
    %87 = vector.extract_strided_slice %36 {offsets = [6, 0, 0], sizes = [1, 8, 4], strides = [1, 1, 1]} : vector<8x8x4xf32> to vector<1x8x4xf32>
    %88 = vector.shape_cast %87 : vector<1x8x4xf32> to vector<8x4xf32>
    %cst_39 = arith.constant dense<0.000000e+00> : vector<32x4xf32>
    %89 = tpu.matmul %86, %88, %cst_39 {dimension_numbers = #tpu.dot_dimension_numbers<[0], [0], [1], [1], [0, 1, 1, 1], [], []>} : vector<8x32xf32>, vector<8x4xf32>, vector<32x4xf32> -> vector<32x4xf32>
    %c6 = arith.constant 6 : index
    %c0_40 = arith.constant 0 : index
    %c0_41 = arith.constant 0 : index
    %90 = vector.load %arg7[%c6, %c0_40, %c0_41] : memref<8x32x4xf32, #tpu.memory_space<vmem>>, vector<1x32x4xf32>
    %91 = vector.shape_cast %90 : vector<1x32x4xf32> to vector<32x4xf32>
    %92 = vector.shape_cast %89 : vector<32x4xf32> to vector<1x32x4xf32>
    tpu.vector_store %arg7[%c6, %c0_40, %c0_41], %92 {strides = array<i32>} : memref<8x32x4xf32, #tpu.memory_space<vmem>>, vector<1x32x4xf32>,
    %93 = vector.extract_strided_slice %0 {offsets = [7, 0, 0], sizes = [1, 8, 32], strides = [1, 1, 1]} : vector<8x8x32xf32> to vector<1x8x32xf32>
    %94 = vector.shape_cast %93 : vector<1x8x32xf32> to vector<8x32xf32>
    %95 = vector.extract_strided_slice %36 {offsets = [7, 0, 0], sizes = [1, 8, 4], strides = [1, 1, 1]} : vector<8x8x4xf32> to vector<1x8x4xf32>
    %96 = vector.shape_cast %95 : vector<1x8x4xf32> to vector<8x4xf32>
    %cst_42 = arith.constant dense<0.000000e+00> : vector<32x4xf32>
    %97 = tpu.matmul %94, %96, %cst_42 {dimension_numbers = #tpu.dot_dimension_numbers<[0], [0], [1], [1], [0, 1, 1, 1], [], []>} : vector<8x32xf32>, vector<8x4xf32>, vector<32x4xf32> -> vector<32x4xf32>
    %c7 = arith.constant 7 : index
    %c0_43 = arith.constant 0 : index
    %c0_44 = arith.constant 0 : index
    %98 = vector.load %arg7[%c7, %c0_43, %c0_44] : memref<8x32x4xf32, #tpu.memory_space<vmem>>, vector<1x32x4xf32>
    %99 = vector.shape_cast %98 : vector<1x32x4xf32> to vector<32x4xf32>
    %100 = vector.shape_cast %97 : vector<32x4xf32> to vector<1x32x4xf32>
    tpu.vector_store %arg7[%c7, %c0_43, %c0_44], %100 {strides = array<i32>} : memref<8x32x4xf32, #tpu.memory_space<vmem>>, vector<1x32x4xf32>,
    return
  }
  func.func @transform_0(%arg0: i32) -> (i32, i32, i32) {
    %c0_i32 = arith.constant 0 : i32
    %c0_i32_0 = arith.constant 0 : i32
    %c0_i32_1 = arith.constant 0 : i32
    return %arg0, %c0_i32, %c0_i32_0 : i32, i32, i32
  }
  func.func @transform_1(%arg0: i32) -> (i32, i32, i32) {
    %c0_i32 = arith.constant 0 : i32
    %c0_i32_0 = arith.constant 0 : i32
    %c0_i32_1 = arith.constant 0 : i32
    return %arg0, %c0_i32, %c0_i32_0 : i32, i32, i32
  }
  func.func @transform_2(%arg0: i32) -> (i32, i32) {
    %c0_i32 = arith.constant 0 : i32
    %c0_i32_0 = arith.constant 0 : i32
    %c0_i32_1 = arith.constant 0 : i32
    return %c0_i32, %c0_i32_0 : i32, i32
  }
  func.func @transform_3(%arg0: i32) -> (i32, i32) {
    %c0_i32 = arith.constant 0 : i32
    %c0_i32_0 = arith.constant 0 : i32
    %c0_i32_1 = arith.constant 0 : i32
    return %c0_i32, %c0_i32_0 : i32, i32
  }
  func.func @transform_4(%arg0: i32) -> (i32, i32) {
    %c0_i32 = arith.constant 0 : i32
    %c0_i32_0 = arith.constant 0 : i32
    %c0_i32_1 = arith.constant 0 : i32
    return %c0_i32, %c0_i32_0 : i32, i32
  }
  func.func @transform_5(%arg0: i32) -> (i32, i32) {
    %c0_i32 = arith.constant 0 : i32
    %c0_i32_0 = arith.constant 0 : i32
    %c0_i32_1 = arith.constant 0 : i32
    return %c0_i32, %c0_i32_0 : i32, i32
  }
  func.func @transform_6(%arg0: i32) -> (i32, i32, i32) {
    %c0_i32 = arith.constant 0 : i32
    %c0_i32_0 = arith.constant 0 : i32
    %c0_i32_1 = arith.constant 0 : i32
    return %arg0, %c0_i32, %c0_i32_0 : i32, i32, i32
  }
}

</mosaic_0001>

<llo_original>
// kernel: tpu_custom_call.1
$region0: #{tpu_custom_call.1}
  #allocation0 [shape = 'u32[]', space=smem, size = 0x4, offset = 0x4, fixed_abs, tag = 'smem constant byte address 0x4 - core index']
  #allocation1 [shape = 'u32[144,128]{1,0:T(1,128)}', space=vmem, size = 0x12000, scoped, tag = 'internal scratch']
  %s0 = inlined_call_operand.vmem [shape: s32[16,1,1], index: 0, kind: input, shape index: {}]
  %s1 = inlined_call_operand.hbm [shape: f32[16,8,32], index: 1, kind: input, shape index: {}]
  %s2 = inlined_call_operand.vmem [shape: f32[32,32], index: 2, kind: input, shape index: {}]
  %s3 = inlined_call_operand.vmem [shape: f32[1,32], index: 3, kind: input, shape index: {}]
  %s4 = inlined_call_operand.vmem [shape: f32[32,4], index: 4, kind: input, shape index: {}]
  %s5 = inlined_call_operand.vmem [shape: f32[1,4], index: 5, kind: input, shape index: {}]
  %s6 = inlined_call_operand.vmem [shape: f32[16,32,4], index: 6, kind: output, shape index: {}]
  %s7 = sld [smem:[#allocation0]]
  $region61: #{tpu_custom_call.1} parent=0
    _
  %s9 = ssub.s32 1, %s7
  %s10 = scalar_select 0, %s9, %s7
  $region1: #{tpu_custom_call.1} parent=0
    #allocation2 [shape = 'u8[65536]{0}', space=vmem, size = 0x10000, scoped, tag = 'input window, operand 1']
    #allocation3 [shape = 's32[2]{0}', space=sflag, size = 0x8, scoped, tag = 'scoped memory for tpu_custom_call.1']
    %11 = vsyncpa [#allocation3], 0
    %s12 = scalar_lea.sflag [#allocation3], 1
    %13 = vsyncpa %s12, 0
    loop: start=0, step=1, limit=4
    $region2: #{tpu_custom_call.1} parent=1 // loop_pre_header
      _
    $region3: #{tpu_custom_call.1} parent=1 // loop_header
      %s15 = sphi 0, %s19
      %p16 = scmp.ge.s32.totalorder %s15, 4
      %s25 = sphi 0, %s27
      %s28 = sphi 0, %s25
      %s29 = sphi 0, %s28
      %s45 = sphi 0, %s29
      %s51 = sphi 0, %s53
      %s54 = sphi 0, %s51
      %s55 = sphi 0, %s54
      %s71 = sphi 0, %s55
      %s75 = sphi 0, %s75
      %s77 = sphi 0, %s75
      %s78 = sphi 0, %s77
      %s92 = sphi 0, %s78
      %s96 = sphi 0, %s96
      %s98 = sphi 0, %s96
      %s99 = sphi 0, %s98
      %s113 = sphi 0, %s99
      %s117 = sphi 0, %s117
      %s119 = sphi 0, %s117
      %s120 = sphi 0, %s119
      %s134 = sphi 0, %s120
      %s138 = sphi 0, %s138
      %s140 = sphi 0, %s138
      %s141 = sphi 0, %s140
      %s155 = sphi 0, %s141
      %s161 = sphi 0, %s163
      %s164 = sphi 0, %s161
      %s165 = sphi 0, %s164
      %s181 = sphi 0, %s165
    $region4: #{tpu_custom_call.1} parent=1 // loop_header_branch
      %18 = sbr.rel (%p16) target = $region8
    $region5: #{tpu_custom_call.1} parent=1 // loop_body
      %s20 = ssub.s32 %s15, 1
      %s21 = ssub.s32 %s15, 2
      %s22 = sadd.s32 %s15, 1
      %s23 = ssub.s32 %s15, %s22
      %p24 = scmp.eq.s32.totalorder %s23, 0
      %s26 = sadd.s32 %s25, 1
      %s27 = scalar_select %p24, %s25, %s26
      %p30 = pneg %p24
      %p31 = scmp.eq.s32.totalorder %s15, 1
      %p32 = por %p30, %p31
      %p33 = scmp.ne.s32.totalorder %s25, %s28
      %p34 = scmp.eq.s32.totalorder %s15, 0
      %p35 = por %p33, %p34
      %p36 = scmp.ne.s32.totalorder %s25, %s28
      %p37 = scmp.eq.s32.totalorder %s20, 1
      %p38 = por %p36, %p37
      %p39 = scmp.ne.s32.totalorder %s28, %s29
      %p40 = scmp.eq.s32.totalorder %s20, 0
      %p41 = por %p39, %p40
      %p42 = scmp.ne.s32.totalorder %s28, %s29
      %p43 = scmp.eq.s32.totalorder %s21, 1
      %p44 = por %p42, %p43
      %p46 = scmp.ne.s32.totalorder %s29, %s45
      %p47 = scmp.eq.s32.totalorder %s21, 0
      %p48 = por %p46, %p47
      %s49 = ssub.s32 %s15, %s22
      %p50 = scmp.eq.s32.totalorder %s49, 0
      %s52 = sadd.s32 %s51, 1
      %s53 = scalar_select %p50, %s51, %s52
      %p56 = pneg %p50
      %p57 = scmp.eq.s32.totalorder %s15, 1
      %p58 = por %p56, %p57
      %p59 = scmp.ne.s32.totalorder %s51, %s54
      %p60 = scmp.eq.s32.totalorder %s15, 0
      %p61 = por %p59, %p60
      %p62 = scmp.ne.s32.totalorder %s51, %s54
      %p63 = scmp.eq.s32.totalorder %s20, 1
      %p64 = por %p62, %p63
      %p65 = scmp.ne.s32.totalorder %s54, %s55
      %p66 = scmp.eq.s32.totalorder %s20, 0
      %p67 = por %p65, %p66
      %p68 = scmp.ne.s32.totalorder %s54, %s55
      %p69 = scmp.eq.s32.totalorder %s21, 1
      %p70 = por %p68, %p69
      %p72 = scmp.ne.s32.totalorder %s55, %s71
      %p73 = scmp.eq.s32.totalorder %s21, 0
      %p74 = por %p72, %p73
      %s76 = sadd.s32 %s75, 1
      %p79 = scmp.eq.s32.totalorder %s15, 1
      %p80 = scmp.ne.s32.totalorder %s75, %s77
      %p81 = scmp.eq.s32.totalorder %s15, 0
      %p82 = por %p80, %p81
      %p83 = scmp.ne.s32.totalorder %s75, %s77
      %p84 = scmp.eq.s32.totalorder %s20, 1
      %p85 = por %p83, %p84
      %p86 = scmp.ne.s32.totalorder %s77, %s78
      %p87 = scmp.eq.s32.totalorder %s20, 0
      %p88 = por %p86, %p87
      %p89 = scmp.ne.s32.totalorder %s77, %s78
      %p90 = scmp.eq.s32.totalorder %s21, 1
      %p91 = por %p89, %p90
      %p93 = scmp.ne.s32.totalorder %s78, %s92
      %p94 = scmp.eq.s32.totalorder %s21, 0
      %p95 = por %p93, %p94
      %s97 = sadd.s32 %s96, 1
      %p100 = scmp.eq.s32.totalorder %s15, 1
      %p101 = scmp.ne.s32.totalorder %s96, %s98
      %p102 = scmp.eq.s32.totalorder %s15, 0
      %p103 = por %p101, %p102
      %p104 = scmp.ne.s32.totalorder %s96, %s98
      %p105 = scmp.eq.s32.totalorder %s20, 1
      %p106 = por %p104, %p105
      %p107 = scmp.ne.s32.totalorder %s98, %s99
      %p108 = scmp.eq.s32.totalorder %s20, 0
      %p109 = por %p107, %p108
      %p110 = scmp.ne.s32.totalorder %s98, %s99
      %p111 = scmp.eq.s32.totalorder %s21, 1
      %p112 = por %p110, %p111
      %p114 = scmp.ne.s32.totalorder %s99, %s113
      %p115 = scmp.eq.s32.totalorder %s21, 0
      %p116 = por %p114, %p115
      %s118 = sadd.s32 %s117, 1
      %p121 = scmp.eq.s32.totalorder %s15, 1
      %p122 = scmp.ne.s32.totalorder %s117, %s119
      %p123 = scmp.eq.s32.totalorder %s15, 0
      %p124 = por %p122, %p123
      %p125 = scmp.ne.s32.totalorder %s117, %s119
      %p126 = scmp.eq.s32.totalorder %s20, 1
      %p127 = por %p125, %p126
      %p128 = scmp.ne.s32.totalorder %s119, %s120
      %p129 = scmp.eq.s32.totalorder %s20, 0
      %p130 = por %p128, %p129
      %p131 = scmp.ne.s32.totalorder %s119, %s120
      %p132 = scmp.eq.s32.totalorder %s21, 1
      %p133 = por %p131, %p132
      %p135 = scmp.ne.s32.totalorder %s120, %s134
      %p136 = scmp.eq.s32.totalorder %s21, 0
      %p137 = por %p135, %p136
      %s139 = sadd.s32 %s138, 1
      %p142 = scmp.eq.s32.totalorder %s15, 1
      %p143 = scmp.ne.s32.totalorder %s138, %s140
      %p144 = scmp.eq.s32.totalorder %s15, 0
      %p145 = por %p143, %p144
      %p146 = scmp.ne.s32.totalorder %s138, %s140
      %p147 = scmp.eq.s32.totalorder %s20, 1
      %p148 = por %p146, %p147
      %p149 = scmp.ne.s32.totalorder %s140, %s141
      %p150 = scmp.eq.s32.totalorder %s20, 0
      %p151 = por %p149, %p150
      %p152 = scmp.ne.s32.totalorder %s140, %s141
      %p153 = scmp.eq.s32.totalorder %s21, 1
      %p154 = por %p152, %p153
      %p156 = scmp.ne.s32.totalorder %s141, %s155
      %p157 = scmp.eq.s32.totalorder %s21, 0
      %p158 = por %p156, %p157
      %s159 = ssub.s32 %s15, %s22
      %p160 = scmp.eq.s32.totalorder %s159, 0
      %s162 = sadd.s32 %s161, 1
      %s163 = scalar_select %p160, %s161, %s162
      %p166 = pneg %p160
      %p167 = scmp.eq.s32.totalorder %s15, 1
      %p168 = por %p166, %p167
      %p169 = scmp.ne.s32.totalorder %s161, %s164
      %p170 = scmp.eq.s32.totalorder %s15, 0
      %p171 = por %p169, %p170
      %p172 = scmp.ne.s32.totalorder %s161, %s164
      %p173 = scmp.eq.s32.totalorder %s20, 1
      %p174 = por %p172, %p173
      %p175 = scmp.ne.s32.totalorder %s164, %s165
      %p176 = scmp.eq.s32.totalorder %s20, 0
      %p177 = por %p175, %p176
      %p178 = scmp.ne.s32.totalorder %s164, %s165
      %p179 = scmp.eq.s32.totalorder %s21, 1
      %p180 = por %p178, %p179
      %p182 = scmp.ne.s32.totalorder %s165, %s181
      %p183 = scmp.eq.s32.totalorder %s21, 0
      %p184 = por %p182, %p183
      %p185 = scmp.le.s32.totalorder 1, %s15
      %p186 = scmp.lt.s32.totalorder %s15, 3
      %p187 = pnand %p185, %p186
      %p188 = pneg %p187
      // Predicated region
      $region9: #{tpu_custom_call.1} parent=5 // pred_check
        _
      $region10: #{tpu_custom_call.1} parent=5 // pred_check_branch
        %190 = sbr.rel (%p187) target = $region12
      $region11: #{tpu_custom_call.1} parent=5 // pred_region
        %s191 = ssub.s32 %s15, 1
        // Predicated region
        $region13: #{tpu_custom_call.1} parent=11 // pred_check
          %p192 = pneg %p88
        $region14: #{tpu_custom_call.1} parent=11 // pred_check_branch
          %194 = sbr.rel (%p192) target = $region16
        $region15: #{tpu_custom_call.1} parent=11 // pred_region
          _
        $region16: #{tpu_custom_call.1} parent=11 // pred_fallthru
          _
        // Predicated region
        $region17: #{tpu_custom_call.1} parent=11 // pred_check
          %p195 = pneg %p109
        $region18: #{tpu_custom_call.1} parent=11 // pred_check_branch
          %197 = sbr.rel (%p195) target = $region20
        $region19: #{tpu_custom_call.1} parent=11 // pred_region
          _
        $region20: #{tpu_custom_call.1} parent=11 // pred_fallthru
          _
        // Predicated region
        $region21: #{tpu_custom_call.1} parent=11 // pred_check
          %p198 = pneg %p130
        $region22: #{tpu_custom_call.1} parent=11 // pred_check_branch
          %200 = sbr.rel (%p198) target = $region24
        $region23: #{tpu_custom_call.1} parent=11 // pred_region
          _
        $region24: #{tpu_custom_call.1} parent=11 // pred_fallthru
          _
        // Predicated region
        $region25: #{tpu_custom_call.1} parent=11 // pred_check
          %p201 = pneg %p151
        $region26: #{tpu_custom_call.1} parent=11 // pred_check_branch
          %203 = sbr.rel (%p201) target = $region28
        $region27: #{tpu_custom_call.1} parent=11 // pred_region
          _
        $region28: #{tpu_custom_call.1} parent=11 // pred_fallthru
          _
      $region12: #{tpu_custom_call.1} parent=5 // pred_fallthru
        _
      %p204 = scmp.lt.s32.totalorder %s15, 2
      // Predicated region
      $region29: #{tpu_custom_call.1} parent=5 // pred_check
        %p205 = pneg %p204
      $region30: #{tpu_custom_call.1} parent=5 // pred_check_branch
        %207 = sbr.rel (%p205) target = $region32
      $region31: #{tpu_custom_call.1} parent=5 // pred_region
        // Predicated region
        $region33: #{tpu_custom_call.1} parent=31 // pred_check
          %p208 = pneg %p35
        $region34: #{tpu_custom_call.1} parent=31 // pred_check_branch
          %210 = sbr.rel (%p208) target = $region36
        $region35: #{tpu_custom_call.1} parent=31 // pred_region
          %s211 = smul.u32 8, %s15
          %p212 = scmp.lt.s32.totalorder %s211, 15
          %s213 = scalar_select %p212, %s211, 15
          %s214 = scalar_lea.vmem %s0, %s213
          %s215 = smul.u32 8, %s15
        $region36: #{tpu_custom_call.1} parent=31 // pred_fallthru
          _
        // Predicated region
        $region37: #{tpu_custom_call.1} parent=31 // pred_check
          %p216 = pneg %p61
        $region38: #{tpu_custom_call.1} parent=31 // pred_check_branch
          %218 = sbr.rel (%p216) target = $region40
        $region39: #{tpu_custom_call.1} parent=31 // pred_region
          %s219 = sand.u32 %s51, 1
          %s220 = scalar_lea.sflag [#allocation3], %s219
          %s221 = sand.u32 %s51, 1
          %s222 = smul.addr %s221, 64
          %s223 = scalar_lea.vmem [#allocation2], %s222
          %s224 = smul.u32 8, %s15
          %s226 = ssub.s32 1024, 1024
          %227 = vsyncadd %s220, %s226
          %s228 = smul.addr %s224, 128
          %s229 = scalar_lea.hbm %s1, %s228
          %s230 = sshll.u32 %s223, 4
          %s231 = int_to_ptr.vmem [resolvable:$true] %s230
          %236 = dma.hbm_to_vmem [thread:$0]  %s229, 1024, %s231, %s220, 128, 128, 8
        $region40: #{tpu_custom_call.1} parent=31 // pred_fallthru
          _
      $region32: #{tpu_custom_call.1} parent=5 // pred_fallthru
        _
      %p237 = scmp.le.s32.totalorder 1, %s15
      %p238 = scmp.lt.s32.totalorder %s15, 3
      %p239 = pnand %p237, %p238
      %p240 = pneg %p239
      // Predicated region
      $region41: #{tpu_custom_call.1} parent=5 // pred_check
        _
      $region42: #{tpu_custom_call.1} parent=5 // pred_check_branch
        %242 = sbr.rel (%p239) target = $region44
      $region43: #{tpu_custom_call.1} parent=5 // pred_region
        %s243 = ssub.s32 %s15, 1
        %s244 = sand.u32 %s54, 1
        %s245 = scalar_lea.sflag [#allocation3], %s244
        %s246 = sand.u32 %s54, 1
        %s247 = smul.addr %s246, 64
        %s248 = scalar_lea.vmem [#allocation2], %s247
        // Predicated region
        $region45: #{tpu_custom_call.1} parent=43 // pred_check
          %p249 = pneg %p67
        $region46: #{tpu_custom_call.1} parent=43 // pred_check_branch
          %251 = sbr.rel (%p249) target = $region48
        $region47: #{tpu_custom_call.1} parent=43 // pred_region
          %252 = dma.done %s245, 1024
        $region48: #{tpu_custom_call.1} parent=43 // pred_fallthru
          _
        %s253 = smul.u32 8, %s20
        %p254 = scmp.lt.s32.totalorder %s253, 15
        %s255 = scalar_select %p254, %s253, 15
        %s256 = scalar_lea.vmem %s0, %s255
        %p257 = pneg %p41
        %p258 = pneg %p38
        %s259 = sand.u32 %s54, 1
        %s260 = scalar_lea.sflag [#allocation3], %s259
        %s261 = sand.u32 %s54, 1
        %s262 = smul.addr %s261, 64
        %s263 = scalar_lea.vmem [#allocation2], %s262
        %p264 = pneg %p67
        %p265 = pneg %p64
        %p266 = pneg %p88
        %p267 = pneg %p85
        %p268 = pneg %p109
        %p269 = pneg %p106
        %p270 = pneg %p130
        %p271 = pneg %p127
        %p272 = pneg %p151
        %p273 = pneg %p148
        %p274 = pneg %p177
        %p275 = pneg %p174
        %s276 = smul.u32 8, %s20
        %p277 = scmp.lt.s32.totalorder %s276, 15
        %s278 = scalar_select %p277, %s276, 15
        %s279 = smul.addr %s278, 4
        %s280 = smul.addr %s279, 8
        %s281 = scalar_lea.vmem %s6, %s280
        %s282 = smul.u32 8, %s20
        %p283 = scmp.lt.s32.totalorder %s282, 15
        %s284 = scalar_select %p283, %s282, 15
        %s285 = scalar_lea.vmem %s0, %s284
        %s286 = smul.u32 8, %s20
        %s287 = smul.u32 8, %s20
        %s288 = smul.u32 8, %s20
        %p289 = scmp.lt.s32.totalorder %s288, 15
        %s290 = scalar_select %p289, %s288, 15
        %s291 = smul.addr %s290, 4
        %s292 = smul.addr %s291, 8
        %s293 = scalar_lea.vmem %s6, %s292
        %s294 = smul.u32 8, %s20
        %v295 = vld [vmem:[%s248] sm:$0xff]
        %v296 = vld [vmem:[%s248 + $0x8] sm:$0xff]
        %v297 = vld [vmem:[%s248 + $0x10] sm:$0xff]
        %v298 = vld [vmem:[%s248 + $0x18] sm:$0xff]
        %v299 = vld [vmem:[%s248 + $0x20] sm:$0xff]
        %v300 = vld [vmem:[%s248 + $0x28] sm:$0xff]
        %v301 = vld [vmem:[%s248 + $0x30] sm:$0xff]
        %v302 = vld [vmem:[%s248 + $0x38] sm:$0xff]
        %v303 = vld [vmem:[%s2] sm:$0xff]
        %v304 = vld [vmem:[%s2 + $0x8] sm:$0xff]
        %v305 = vld [vmem:[%s2 + $0x10] sm:$0xff]
        %v306 = vld [vmem:[%s2 + $0x18] sm:$0xff]
        %v307 = vld [vmem:[%s3] sm:$0x1]
        %v309 = vlaneseq
        %v310 = vshrl.u32 %v309, 7
        %v311 = vsub.s32 0, %v310
        %v312 = vrot.slane %v307, %v311
        %vm314 = vcmask 261120
        %v316 = vsel %vm314, %v295, 0
        %v319 = vsel %vm314, %v296, 0
        %v322 = vsel %vm314, %v297, 0
        %v325 = vsel %vm314, %v298, 0
        %v328 = vsel %vm314, %v299, 0
        %v331 = vsel %vm314, %v300, 0
        %v334 = vsel %vm314, %v301, 0
        %v337 = vsel %vm314, %v302, 0
        %339 = vmatprep.subr.mxu0 0.0
        %340 = vmatpush1.msra.mxu0 %v303
        %341 = vmatprep.subr.mxu0 0.0
        %342 = vmatpush1.msra.mxu0 %v304
        %343 = vmatprep.subr.mxu0 0.0
        %344 = vmatpush1.msra.mxu0 %v305
        %345 = vmatprep.subr.mxu0 0.0
        %346 = vmatpush1.msra.mxu0 %v306
        %347 = vmatprep.subr.mxu0 0.0
        %348 = vmatpush1.msra.mxu0 0.0
        %349 = vmatprep.subr.mxu0 0.0
        %350 = vmatpush1.msra.mxu0 0.0
        %351 = vmatprep.subr.mxu0 0.0
        %352 = vmatpush1.msra.mxu0 0.0
        %353 = vmatprep.subr.mxu0 0.0
        %354 = vmatpush1.msra.mxu0 0.0
        %355 = vmatprep.subr.mxu0 0.0
        %356 = vmatpush1.msra.mxu0 0.0
        %357 = vmatprep.subr.mxu0 0.0
        %358 = vmatpush1.msra.mxu0 0.0
        %359 = vmatprep.subr.mxu0 0.0
        %360 = vmatpush1.msra.mxu0 0.0
        %361 = vmatprep.subr.mxu0 0.0
        %362 = vmatpush1.msra.mxu0 0.0
        %363 = vmatprep.subr.mxu0 0.0
        %364 = vmatpush1.msra.mxu0 0.0
        %365 = vmatprep.subr.mxu0 0.0
        %366 = vmatpush1.msra.mxu0 0.0
        %367 = vmatprep.subr.mxu0 0.0
        %368 = vmatpush1.msra.mxu0 0.0
        %369 = vmatprep.subr.mxu0 0.0
        %370 = vmatpush1.msra.mxu0 0.0
        %371 = vmatprep.subr.mxu0 0.0
        %372 = vmatpush1.msra.mxu0 0.0
        %373 = vmatprep.subr.mxu0 0.0
        %374 = vmatpush1.msra.mxu0 0.0
        %375 = vmatprep.subr.mxu0 0.0
        %376 = vmatpush1.msra.mxu0 0.0
        %377 = vmatprep.subr.mxu0 0.0
        %378 = vmatpush1.msra.mxu0 0.0
        %379 = vmatprep.subr.mxu0 0.0
        %380 = vmatpush1.msra.mxu0 0.0
        %381 = vmatprep.subr.mxu0 0.0
        %382 = vmatpush1.msra.mxu0 0.0
        %383 = vmatprep.subr.mxu0 0.0
        %384 = vmatpush1.msra.mxu0 0.0
        %385 = vmatprep.subr.mxu0 0.0
        %386 = vmatpush1.msra.mxu0 0.0
        %387 = vmatprep.subr.mxu0 0.0
        %388 = vmatpush1.msra.mxu0 0.0
        %389 = vmatprep.subr.mxu0 0.0
        %390 = vmatpush1.msra.mxu0 0.0
        %391 = vmatprep.subr.mxu0 0.0
        %392 = vmatpush1.msra.mxu0 0.0
        %393 = vmatprep.subr.mxu0 0.0
        %394 = vmatpush1.msra.mxu0 0.0
        %395 = vmatprep.subr.mxu0 0.0
        %396 = vmatpush1.msra.mxu0 0.0
        %397 = vmatprep.subr.mxu0 0.0
        %398 = vmatpush1.msra.mxu0 0.0
        %399 = vmatprep.subr.mxu0 0.0
        %400 = vmatpush1.msra.mxu0 0.0
        %401 = vmatprep.subr.mxu0 0.0
        %402 = vmatpush1.msra.mxu0 0.0
        %403 = vmatprep.mubr.f32.mxu0 0.0
        %404 = vmatmul.mubr.f32.gmra.mrb[0].mxu0 %v316
        %v405 = vpop.f32.mrb[0].mxu0
        %v406 = vadd.f32 %v312, %v405
        %v407 = vpop.f32.mrb[0].mxu0
        %408 = vmatprep.mubr.f32.mxu0 0.0
        %409 = vmatmul.mubr.f32.gmra.mrb[0].mxu0 %v319
        %v410 = vpop.f32.mrb[0].mxu0
        %v411 = vadd.f32 %v312, %v410
        %v412 = vpop.f32.mrb[0].mxu0
        %413 = vmatprep.mubr.f32.mxu0 0.0
        %414 = vmatmul.mubr.f32.gmra.mrb[0].mxu0 %v322
        %v415 = vpop.f32.mrb[0].mxu0
        %v416 = vadd.f32 %v312, %v415
        %v417 = vpop.f32.mrb[0].mxu0
        %418 = vmatprep.mubr.f32.mxu0 0.0
        %419 = vmatmul.mubr.f32.gmra.mrb[0].mxu0 %v325
        %v420 = vpop.f32.mrb[0].mxu0
        %v421 = vadd.f32 %v312, %v420
        %v422 = vpop.f32.mrb[0].mxu0
        %423 = vmatprep.mubr.f32.mxu0 0.0
        %424 = vmatmul.mubr.f32.gmra.mrb[0].mxu0 %v328
        %v425 = vpop.f32.mrb[0].mxu0
        %v426 = vadd.f32 %v312, %v425
        %v427 = vpop.f32.mrb[0].mxu0
        %428 = vmatprep.mubr.f32.mxu0 0.0
        %429 = vmatmul.mubr.f32.gmra.mrb[0].mxu0 %v331
        %v430 = vpop.f32.mrb[0].mxu0
        %v431 = vadd.f32 %v312, %v430
        %v432 = vpop.f32.mrb[0].mxu0
        %433 = vmatprep.mubr.f32.mxu0 0.0
        %434 = vmatmul.mubr.f32.gmra.mrb[0].mxu0 %v334
        %v435 = vpop.f32.mrb[0].mxu0
        %v436 = vadd.f32 %v312, %v435
        %v437 = vpop.f32.mrb[0].mxu0
        %438 = vmatprep.mubr.f32.mxu0 0.0
        %439 = vmatmul.mubr.f32.gmra.mrb[0].mxu0 %v337
        %v440 = vpop.f32.mrb[0].mxu0
        %v441 = vadd.f32 %v312, %v440
        %v442 = vpop.f32.mrb[0].mxu0
        %443 = vdwg.mxu0
        %v444 = vmax.f32 %v406, 0.0
        %v445 = vmax.f32 %v411, 0.0
        %v446 = vmax.f32 %v416, 0.0
        %v447 = vmax.f32 %v421, 0.0
        %v448 = vmax.f32 %v426, 0.0
        %v449 = vmax.f32 %v431, 0.0
        %v450 = vmax.f32 %v436, 0.0
        %v451 = vmax.f32 %v441, 0.0
        %v452 = vld [vmem:[%s4] sm:$0xff]
        %v453 = vld [vmem:[%s4 + $0x8] sm:$0xff]
        %v454 = vld [vmem:[%s4 + $0x10] sm:$0xff]
        %v455 = vld [vmem:[%s4 + $0x18] sm:$0xff]
        %v456 = vld [vmem:[%s5] sm:$0x1]
        %v458 = vlaneseq
        %v459 = vshrl.u32 %v458, 7
        %v460 = vsub.s32 0, %v459
        %v461 = vrot.slane %v456, %v460
        %v464 = vsel %vm314, %v444, 0
        %v467 = vsel %vm314, %v445, 0
        %v470 = vsel %vm314, %v446, 0
        %v473 = vsel %vm314, %v447, 0
        %v476 = vsel %vm314, %v448, 0
        %v479 = vsel %vm314, %v449, 0
        %v482 = vsel %vm314, %v450, 0
        %v485 = vsel %vm314, %v451, 0
        %487 = vmatprep.subr.mxu0 0.0
        %488 = vmatpush1.msra.mxu0 %v452
        %489 = vmatprep.subr.mxu0 0.0
        %490 = vmatpush1.msra.mxu0 %v453
        %491 = vmatprep.subr.mxu0 0.0
        %492 = vmatpush1.msra.mxu0 %v454
        %493 = vmatprep.subr.mxu0 0.0
        %494 = vmatpush1.msra.mxu0 %v455
        %495 = vmatprep.subr.mxu0 0.0
        %496 = vmatpush1.msra.mxu0 0.0
        %497 = vmatprep.subr.mxu0 0.0
        %498 = vmatpush1.msra.mxu0 0.0
        %499 = vmatprep.subr.mxu0 0.0
        %500 = vmatpush1.msra.mxu0 0.0
        %501 = vmatprep.subr.mxu0 0.0
        %502 = vmatpush1.msra.mxu0 0.0
        %503 = vmatprep.subr.mxu0 0.0
        %504 = vmatpush1.msra.mxu0 0.0
        %505 = vmatprep.subr.mxu0 0.0
        %506 = vmatpush1.msra.mxu0 0.0
        %507 = vmatprep.subr.mxu0 0.0
        %508 = vmatpush1.msra.mxu0 0.0
        %509 = vmatprep.subr.mxu0 0.0
        %510 = vmatpush1.msra.mxu0 0.0
        %511 = vmatprep.subr.mxu0 0.0
        %512 = vmatpush1.msra.mxu0 0.0
        %513 = vmatprep.subr.mxu0 0.0
        %514 = vmatpush1.msra.mxu0 0.0
        %515 = vmatprep.subr.mxu0 0.0
        %516 = vmatpush1.msra.mxu0 0.0
        %517 = vmatprep.subr.mxu0 0.0
        %518 = vmatpush1.msra.mxu0 0.0
        %519 = vmatprep.subr.mxu0 0.0
        %520 = vmatpush1.msra.mxu0 0.0
        %521 = vmatprep.subr.mxu0 0.0
        %522 = vmatpush1.msra.mxu0 0.0
        %523 = vmatprep.subr.mxu0 0.0
        %524 = vmatpush1.msra.mxu0 0.0
        %525 = vmatprep.subr.mxu0 0.0
        %526 = vmatpush1.msra.mxu0 0.0
        %527 = vmatprep.subr.mxu0 0.0
        %528 = vmatpush1.msra.mxu0 0.0
        %529 = vmatprep.subr.mxu0 0.0
        %530 = vmatpush1.msra.mxu0 0.0
        %531 = vmatprep.subr.mxu0 0.0
        %532 = vmatpush1.msra.mxu0 0.0
        %533 = vmatprep.subr.mxu0 0.0
        %534 = vmatpush1.msra.mxu0 0.0
        %535 = vmatprep.subr.mxu0 0.0
        %536 = vmatpush1.msra.mxu0 0.0
        %537 = vmatprep.subr.mxu0 0.0
        %538 = vmatpush1.msra.mxu0 0.0
        %539 = vmatprep.subr.mxu0 0.0
        %540 = vmatpush1.msra.mxu0 0.0
        %541 = vmatprep.subr.mxu0 0.0
        %542 = vmatpush1.msra.mxu0 0.0
        %543 = vmatprep.subr.mxu0 0.0
        %544 = vmatpush1.msra.mxu0 0.0
        %545 = vmatprep.subr.mxu0 0.0
        %546 = vmatpush1.msra.mxu0 0.0
        %547 = vmatprep.subr.mxu0 0.0
        %548 = vmatpush1.msra.mxu0 0.0
        %549 = vmatprep.subr.mxu0 0.0
        %550 = vmatpush1.msra.mxu0 0.0
        %551 = vmatprep.mubr.f32.mxu0 0.0
        %552 = vmatmul.mubr.f32.gmra.mrb[0].mxu0 %v464
        %v553 = vpop.f32.mrb[0].mxu0
        %v554 = vadd.f32 %v461, %v553
        %v555 = vpop.f32.mrb[0].mxu0
        %556 = vmatprep.mubr.f32.mxu0 0.0
        %557 = vmatmul.mubr.f32.gmra.mrb[0].mxu0 %v467
        %v558 = vpop.f32.mrb[0].mxu0
        %v559 = vadd.f32 %v461, %v558
        %v560 = vpop.f32.mrb[0].mxu0
        %561 = vmatprep.mubr.f32.mxu0 0.0
        %562 = vmatmul.mubr.f32.gmra.mrb[0].mxu0 %v470
        %v563 = vpop.f32.mrb[0].mxu0
        %v564 = vadd.f32 %v461, %v563
        %v565 = vpop.f32.mrb[0].mxu0
        %566 = vmatprep.mubr.f32.mxu0 0.0
        %567 = vmatmul.mubr.f32.gmra.mrb[0].mxu0 %v473
        %v568 = vpop.f32.mrb[0].mxu0
        %v569 = vadd.f32 %v461, %v568
        %v570 = vpop.f32.mrb[0].mxu0
        %571 = vmatprep.mubr.f32.mxu0 0.0
        %572 = vmatmul.mubr.f32.gmra.mrb[0].mxu0 %v476
        %v573 = vpop.f32.mrb[0].mxu0
        %v574 = vadd.f32 %v461, %v573
        %v575 = vpop.f32.mrb[0].mxu0
        %576 = vmatprep.mubr.f32.mxu0 0.0
        %577 = vmatmul.mubr.f32.gmra.mrb[0].mxu0 %v479
        %v578 = vpop.f32.mrb[0].mxu0
        %v579 = vadd.f32 %v461, %v578
        %v580 = vpop.f32.mrb[0].mxu0
        %581 = vmatprep.mubr.f32.mxu0 0.0
        %582 = vmatmul.mubr.f32.gmra.mrb[0].mxu0 %v482
        %v583 = vpop.f32.mrb[0].mxu0
        %v584 = vadd.f32 %v461, %v583
        %v585 = vpop.f32.mrb[0].mxu0
        %586 = vmatprep.mubr.f32.mxu0 0.0
        %587 = vmatmul.mubr.f32.gmra.mrb[0].mxu0 %v485
        %v588 = vpop.f32.mrb[0].mxu0
        %v589 = vadd.f32 %v461, %v588
        %v590 = vpop.f32.mrb[0].mxu0
        %591 = vdwg.mxu0
        %v592 = vld [vmem:[%s285] sm:$0x1]
        %v593 = vld [vmem:[%s285 + $0x1] sm:$0x1]
        %v594 = vld [vmem:[%s285 + $0x2] sm:$0x1]
        %v595 = vld [vmem:[%s285 + $0x3] sm:$0x1]
        %v596 = vld [vmem:[%s285 + $0x4] sm:$0x1]
        %v597 = vld [vmem:[%s285 + $0x5] sm:$0x1]
        %v598 = vld [vmem:[%s285 + $0x6] sm:$0x1]
        %v599 = vld [vmem:[%s285 + $0x7] sm:$0x1]
        %v600 = vlaneseq
        %v601 = vshrl.u32 %v600, 7
        %v602 = vlaneseq
        %v603 = vshrl.u32 %v602, 7
        %v604 = vsub.s32 0, %v603
        %v605 = vrot.slane %v592, %v604
        %v606 = vlaneseq
        %v607 = vshrl.u32 %v606, 7
        %v608 = vsub.s32 0, %v607
        %v609 = vrot.slane %v593, %v608
        %v610 = vlaneseq
        %v611 = vshrl.u32 %v610, 7
        %v612 = vsub.s32 0, %v611
        %v613 = vrot.slane %v594, %v612
        %v614 = vlaneseq
        %v615 = vshrl.u32 %v614, 7
        %v616 = vsub.s32 0, %v615
        %v617 = vrot.slane %v595, %v616
        %v618 = vlaneseq
        %v619 = vshrl.u32 %v618, 7
        %v620 = vsub.s32 0, %v619
        %v621 = vrot.slane %v596, %v620
        %v622 = vlaneseq
        %v623 = vshrl.u32 %v622, 7
        %v624 = vsub.s32 0, %v623
        %v625 = vrot.slane %v597, %v624
        %v626 = vlaneseq
        %v627 = vshrl.u32 %v626, 7
        %v628 = vsub.s32 0, %v627
        %v629 = vrot.slane %v598, %v628
        %v630 = vlaneseq
        %v631 = vshrl.u32 %v630, 7
        %v632 = vsub.s32 0, %v631
        %v633 = vrot.slane %v599, %v632
        %634 = vset.pattern.permute.xlu0 0
        %635 = vperm.xlu0 %634, %v605
        %v636 = vpop.permute.xlu0 %635
        %637 = vset.pattern.permute.xlu0 0
        %638 = vperm.xlu0 %637, %v609
        %v639 = vpop.permute.xlu0 %638
        %640 = vset.pattern.permute.xlu0 0
        %641 = vperm.xlu0 %640, %v613
        %v642 = vpop.permute.xlu0 %641
        %643 = vset.pattern.permute.xlu0 0
        %644 = vperm.xlu0 %643, %v617
        %v645 = vpop.permute.xlu0 %644
        %646 = vset.pattern.permute.xlu0 0
        %647 = vperm.xlu0 %646, %v621
        %v648 = vpop.permute.xlu0 %647
        %649 = vset.pattern.permute.xlu0 0
        %650 = vperm.xlu0 %649, %v625
        %v651 = vpop.permute.xlu0 %650
        %652 = vset.pattern.permute.xlu0 0
        %653 = vperm.xlu0 %652, %v629
        %v654 = vpop.permute.xlu0 %653
        %655 = vset.pattern.permute.xlu0 0
        %656 = vperm.xlu0 %655, %v633
        %v657 = vpop.permute.xlu0 %656
        %vm658 = vcmp.lt.s32.totalorder %v601, %v636
        %vm659 = vcmp.lt.s32.totalorder %v601, %v639
        %vm660 = vcmp.lt.s32.totalorder %v601, %v642
        %vm661 = vcmp.lt.s32.totalorder %v601, %v645
        %vm662 = vcmp.lt.s32.totalorder %v601, %v648
        %vm663 = vcmp.lt.s32.totalorder %v601, %v651
        %vm664 = vcmp.lt.s32.totalorder %v601, %v654
        %vm665 = vcmp.lt.s32.totalorder %v601, %v657
        %v666 = vsel %vm658, %v554, -1e+30
        %v667 = vsel %vm659, %v559, -1e+30
        %v668 = vsel %vm660, %v564, -1e+30
        %v669 = vsel %vm661, %v569, -1e+30
        %v670 = vsel %vm662, %v574, -1e+30
        %v671 = vsel %vm663, %v579, -1e+30
        %v672 = vsel %vm664, %v584, -1e+30
        %v673 = vsel %vm665, %v589, -1e+30
        %vm674 = vcmask 31744
        %v675 = vsel %vm674, %v666, -inf
        %v676 = vrot.slane %v675, 4
        %v677 = vmax.f32 %v675, %v676
        %v678 = vrot.slane %v677, 2
        %v679 = vmax.f32 %v677, %v678
        %v680 = vrot.slane %v679, 1
        %v681 = vmax.f32 %v679, %v680
        %v682 = vsel %vm674, %v667, -inf
        %v683 = vrot.slane %v682, 4
        %v684 = vmax.f32 %v682, %v683
        %v685 = vrot.slane %v684, 2
        %v686 = vmax.f32 %v684, %v685
        %v687 = vrot.slane %v686, 1
        %v688 = vmax.f32 %v686, %v687
        %v689 = vsel %vm674, %v668, -inf
        %v690 = vrot.slane %v689, 4
        %v691 = vmax.f32 %v689, %v690
        %v692 = vrot.slane %v691, 2
        %v693 = vmax.f32 %v691, %v692
        %v694 = vrot.slane %v693, 1
        %v695 = vmax.f32 %v693, %v694
        %v696 = vsel %vm674, %v669, -inf
        %v697 = vrot.slane %v696, 4
        %v698 = vmax.f32 %v696, %v697
        %v699 = vrot.slane %v698, 2
        %v700 = vmax.f32 %v698, %v699
        %v701 = vrot.slane %v700, 1
        %v702 = vmax.f32 %v700, %v701
        %v703 = vsel %vm674, %v670, -inf
        %v704 = vrot.slane %v703, 4
        %v705 = vmax.f32 %v703, %v704
        %v706 = vrot.slane %v705, 2
        %v707 = vmax.f32 %v705, %v706
        %v708 = vrot.slane %v707, 1
        %v709 = vmax.f32 %v707, %v708
        %v710 = vsel %vm674, %v671, -inf
        %v711 = vrot.slane %v710, 4
        %v712 = vmax.f32 %v710, %v711
        %v713 = vrot.slane %v712, 2
        %v714 = vmax.f32 %v712, %v713
        %v715 = vrot.slane %v714, 1
        %v716 = vmax.f32 %v714, %v715
        %v717 = vsel %vm674, %v672, -inf
        %v718 = vrot.slane %v717, 4
        %v719 = vmax.f32 %v717, %v718
        %v720 = vrot.slane %v719, 2
        %v721 = vmax.f32 %v719, %v720
        %v722 = vrot.slane %v721, 1
        %v723 = vmax.f32 %v721, %v722
        %v724 = vsel %vm674, %v673, -inf
        %v725 = vrot.slane %v724, 4
        %v726 = vmax.f32 %v724, %v725
        %v727 = vrot.slane %v726, 2
        %v728 = vmax.f32 %v726, %v727
        %v729 = vrot.slane %v728, 1
        %v730 = vmax.f32 %v728, %v729
        %v731 = vsub.f32 %v666, %v681
        %v732 = vsub.f32 %v667, %v688
        %v733 = vsub.f32 %v668, %v695
        %v734 = vsub.f32 %v669, %v702
        %v735 = vsub.f32 %v670, %v709
        %v736 = vsub.f32 %v671, %v716
        %v737 = vsub.f32 %v672, %v723
        %v738 = vsub.f32 %v673, %v730
        %v739 = vmul.f32 %v731, 1.442695
        %v740 = vpow.pop %v739
        %v741 = vmul.f32 %v732, 1.442695
        %v742 = vpow.pop %v741
        %v743 = vmul.f32 %v733, 1.442695
        %v744 = vpow.pop %v743
        %v745 = vmul.f32 %v734, 1.442695
        %v746 = vpow.pop %v745
        %v747 = vmul.f32 %v735, 1.442695
        %v748 = vpow.pop %v747
        %v749 = vmul.f32 %v736, 1.442695
        %v750 = vpow.pop %v749
        %v751 = vmul.f32 %v737, 1.442695
        %v752 = vpow.pop %v751
        %v753 = vmul.f32 %v738, 1.442695
        %v754 = vpow.pop %v753
        %v755 = vsel %vm658, %v740, 0.0
        %v756 = vsel %vm659, %v742, 0.0
        %v757 = vsel %vm660, %v744, 0.0
        %v758 = vsel %vm661, %v746, 0.0
        %v759 = vsel %vm662, %v748, 0.0
        %v760 = vsel %vm663, %v750, 0.0
        %v761 = vsel %vm664, %v752, 0.0
        %v762 = vsel %vm665, %v754, 0.0
        %v763 = vsel %vm674, %v755, 0.0
        %v764 = vrot.slane %v763, 4
        %v765 = vadd.f32 %v763, %v764
        %v766 = vrot.slane %v765, 2
        %v767 = vadd.f32 %v765, %v766
        %v768 = vrot.slane %v767, 1
        %v769 = vadd.f32 %v767, %v768
        %v770 = vsel %vm674, %v756, 0.0
        %v771 = vrot.slane %v770, 4
        %v772 = vadd.f32 %v770, %v771
        %v773 = vrot.slane %v772, 2
        %v774 = vadd.f32 %v772, %v773
        %v775 = vrot.slane %v774, 1
        %v776 = vadd.f32 %v774, %v775
        %v777 = vsel %vm674, %v757, 0.0
        %v778 = vrot.slane %v777, 4
        %v779 = vadd.f32 %v777, %v778
        %v780 = vrot.slane %v779, 2
        %v781 = vadd.f32 %v779, %v780
        %v782 = vrot.slane %v781, 1
        %v783 = vadd.f32 %v781, %v782
        %v784 = vsel %vm674, %v758, 0.0
        %v785 = vrot.slane %v784, 4
        %v786 = vadd.f32 %v784, %v785
        %v787 = vrot.slane %v786, 2
        %v788 = vadd.f32 %v786, %v787
        %v789 = vrot.slane %v788, 1
        %v790 = vadd.f32 %v788, %v789
        %v791 = vsel %vm674, %v759, 0.0
        %v792 = vrot.slane %v791, 4
        %v793 = vadd.f32 %v791, %v792
        %v794 = vrot.slane %v793, 2
        %v795 = vadd.f32 %v793, %v794
        %v796 = vrot.slane %v795, 1
        %v797 = vadd.f32 %v795, %v796
        %v798 = vsel %vm674, %v760, 0.0
        %v799 = vrot.slane %v798, 4
        %v800 = vadd.f32 %v798, %v799
        %v801 = vrot.slane %v800, 2
        %v802 = vadd.f32 %v800, %v801
        %v803 = vrot.slane %v802, 1
        %v804 = vadd.f32 %v802, %v803
        %v805 = vsel %vm674, %v761, 0.0
        %v806 = vrot.slane %v805, 4
        %v807 = vadd.f32 %v805, %v806
        %v808 = vrot.slane %v807, 2
        %v809 = vadd.f32 %v807, %v808
        %v810 = vrot.slane %v809, 1
        %v811 = vadd.f32 %v809, %v810
        %v812 = vsel %vm674, %v762, 0.0
        %v813 = vrot.slane %v812, 4
        %v814 = vadd.f32 %v812, %v813
        %v815 = vrot.slane %v814, 2
        %v816 = vadd.f32 %v814, %v815
        %v817 = vrot.slane %v816, 1
        %v818 = vadd.f32 %v816, %v817
        %v819 = vmax.f32 %v769, 1e-30
        %v820 = vmax.f32 %v776, 1e-30
        %v821 = vmax.f32 %v783, 1e-30
        %v822 = vmax.f32 %v790, 1e-30
        %v823 = vmax.f32 %v797, 1e-30
        %v824 = vmax.f32 %v804, 1e-30
        %v825 = vmax.f32 %v811, 1e-30
        %v826 = vmax.f32 %v818, 1e-30
        %v827 = vrcp.pop %v819
        %v828 = vrcp.pop %v820
        %v829 = vrcp.pop %v821
        %v830 = vrcp.pop %v822
        %v831 = vrcp.pop %v823
        %v832 = vrcp.pop %v824
        %v833 = vrcp.pop %v825
        %v834 = vrcp.pop %v826
        %v835 = vmul.f32 %v755, %v827
        %v836 = vmul.f32 %v756, %v828
        %v837 = vmul.f32 %v757, %v829
        %v838 = vmul.f32 %v758, %v830
        %v839 = vmul.f32 %v759, %v831
        %v840 = vmul.f32 %v760, %v832
        %v841 = vmul.f32 %v761, %v833
        %v842 = vmul.f32 %v762, %v834
        %843 = vxpose.xlu0.b32.start [1/16] %v295, 128
        %844 = vxpose.xlu0.b32.cont [2/16] 0.0, 128
        %845 = vxpose.xlu0.b32.cont [3/16] 0.0, 128
        %846 = vxpose.xlu0.b32.cont [4/16] 0.0, 128
        %847 = vxpose.xlu0.b32.cont [5/16] 0.0, 128
        %848 = vxpose.xlu0.b32.cont [6/16] 0.0, 128
        %849 = vxpose.xlu0.b32.cont [7/16] 0.0, 128
        %850 = vxpose.xlu0.b32.cont [8/16] 0.0, 128
        %851 = vxpose.xlu0.b32.cont [9/16] 0.0, 128
        %852 = vxpose.xlu0.b32.cont [10/16] 0.0, 128
        %853 = vxpose.xlu0.b32.cont [11/16] 0.0, 128
        %854 = vxpose.xlu0.b32.cont [12/16] 0.0, 128
        %855 = vxpose.xlu0.b32.cont [13/16] 0.0, 128
        %856 = vxpose.xlu0.b32.cont [14/16] 0.0, 128
        %857 = vxpose.xlu0.b32.cont [15/16] 0.0, 128
        %858 = vxpose.xlu0.b32.end [16/16] 0.0, 128
        %v859 = vpop.trf.xlu0
        %v860 = vpop.trf.xlu0
        %v861 = vpop.trf.xlu0
        %v862 = vpop.trf.xlu0
        %v863 = vpop.trf.xlu0
        %v864 = vpop.trf.xlu0
        %v865 = vpop.trf.xlu0
        %v866 = vpop.trf.xlu0
        %v867 = vpop.trf.xlu0
        %v868 = vpop.trf.xlu0
        %v869 = vpop.trf.xlu0
        %v870 = vpop.trf.xlu0
        %v871 = vpop.trf.xlu0
        %v872 = vpop.trf.xlu0
        %v873 = vpop.trf.xlu0
        %v874 = vpop.trf.xlu0
        %vm875 = vcmask 64512
        %v877 = vsel %vm875, %v859, 0
        %v880 = vsel %vm875, %v860, 0
        %v883 = vsel %vm875, %v861, 0
        %v886 = vsel %vm875, %v862, 0
        %888 = vmatprep.subr.mxu0 0.0
        %889 = vmatpush1.msra.mxu0 %v835
        %890 = vmatprep.subr.mxu0 0.0
        %891 = vmatpush1.msra.mxu0 0.0
        %892 = vmatprep.subr.mxu0 0.0
        %893 = vmatpush1.msra.mxu0 0.0
        %894 = vmatprep.subr.mxu0 0.0
        %895 = vmatpush1.msra.mxu0 0.0
        %896 = vmatprep.subr.mxu0 0.0
        %897 = vmatpush1.msra.mxu0 0.0
        %898 = vmatprep.subr.mxu0 0.0
        %899 = vmatpush1.msra.mxu0 0.0
        %900 = vmatprep.subr.mxu0 0.0
        %901 = vmatpush1.msra.mxu0 0.0
        %902 = vmatprep.subr.mxu0 0.0
        %903 = vmatpush1.msra.mxu0 0.0
        %904 = vmatprep.subr.mxu0 0.0
        %905 = vmatpush1.msra.mxu0 0.0
        %906 = vmatprep.subr.mxu0 0.0
        %907 = vmatpush1.msra.mxu0 0.0
        %908 = vmatprep.subr.mxu0 0.0
        %909 = vmatpush1.msra.mxu0 0.0
        %910 = vmatprep.subr.mxu0 0.0
        %911 = vmatpush1.msra.mxu0 0.0
        %912 = vmatprep.subr.mxu0 0.0
        %913 = vmatpush1.msra.mxu0 0.0
        %914 = vmatprep.subr.mxu0 0.0
        %915 = vmatpush1.msra.mxu0 0.0
        %916 = vmatprep.subr.mxu0 0.0
        %917 = vmatpush1.msra.mxu0 0.0
        %918 = vmatprep.subr.mxu0 0.0
        %919 = vmatpush1.msra.mxu0 0.0
        %920 = vmatprep.subr.mxu0 0.0
        %921 = vmatpush1.msra.mxu0 0.0
        %922 = vmatprep.subr.mxu0 0.0
        %923 = vmatpush1.msra.mxu0 0.0
        %924 = vmatprep.subr.mxu0 0.0
        %925 = vmatpush1.msra.mxu0 0.0
        %926 = vmatprep.subr.mxu0 0.0
        %927 = vmatpush1.msra.mxu0 0.0
        %928 = vmatprep.subr.mxu0 0.0
        %929 = vmatpush1.msra.mxu0 0.0
        %930 = vmatprep.subr.mxu0 0.0
        %931 = vmatpush1.msra.mxu0 0.0
        %932 = vmatprep.subr.mxu0 0.0
        %933 = vmatpush1.msra.mxu0 0.0
        %934 = vmatprep.subr.mxu0 0.0
        %935 = vmatpush1.msra.mxu0 0.0
        %936 = vmatprep.subr.mxu0 0.0
        %937 = vmatpush1.msra.mxu0 0.0
        %938 = vmatprep.subr.mxu0 0.0
        %939 = vmatpush1.msra.mxu0 0.0
        %940 = vmatprep.subr.mxu0 0.0
        %941 = vmatpush1.msra.mxu0 0.0
        %942 = vmatprep.subr.mxu0 0.0
        %943 = vmatpush1.msra.mxu0 0.0
        %944 = vmatprep.subr.mxu0 0.0
        %945 = vmatpush1.msra.mxu0 0.0
        %946 = vmatprep.subr.mxu0 0.0
        %947 = vmatpush1.msra.mxu0 0.0
        %948 = vmatprep.subr.mxu0 0.0
        %949 = vmatpush1.msra.mxu0 0.0
        %950 = vmatprep.subr.mxu0 0.0
        %951 = vmatpush1.msra.mxu0 0.0
        %952 = vmatprep.mubr.f32.mxu0 0.0
        %953 = vmatmul.mubr.f32.gmra.mrb[0].mxu0 %v877
        %v954 = vpop.f32.mrb[0].mxu0
        %v955 = vadd.f32 0.0, %v954
        %v956 = vpop.f32.mrb[0].mxu0
        %957 = vmatprep.mubr.f32.mxu0 0.0
        %958 = vmatmul.mubr.f32.gmra.mrb[0].mxu0 %v880
        %v959 = vpop.f32.mrb[0].mxu0
        %v960 = vadd.f32 0.0, %v959
        %v961 = vpop.f32.mrb[0].mxu0
        %962 = vmatprep.mubr.f32.mxu0 0.0
        %963 = vmatmul.mubr.f32.gmra.mrb[0].mxu0 %v883
        %v964 = vpop.f32.mrb[0].mxu0
        %v965 = vadd.f32 0.0, %v964
        %v966 = vpop.f32.mrb[0].mxu0
        %967 = vmatprep.mubr.f32.mxu0 0.0
        %968 = vmatmul.mubr.f32.gmra.mrb[0].mxu0 %v886
        %v969 = vpop.f32.mrb[0].mxu0
        %v970 = vadd.f32 0.0, %v969
        %v971 = vpop.f32.mrb[0].mxu0
        %972 = vdwg.mxu0
        %973 = vxpose.xlu0.b32.start [1/16] %v296, 128
        %974 = vxpose.xlu0.b32.cont [2/16] 0.0, 128
        %975 = vxpose.xlu0.b32.cont [3/16] 0.0, 128
        %976 = vxpose.xlu0.b32.cont [4/16] 0.0, 128
        %977 = vxpose.xlu0.b32.cont [5/16] 0.0, 128
        %978 = vxpose.xlu0.b32.cont [6/16] 0.0, 128
        %979 = vxpose.xlu0.b32.cont [7/16] 0.0, 128
        %980 = vxpose.xlu0.b32.cont [8/16] 0.0, 128
        %981 = vxpose.xlu0.b32.cont [9/16] 0.0, 128
        %982 = vxpose.xlu0.b32.cont [10/16] 0.0, 128
        %983 = vxpose.xlu0.b32.cont [11/16] 0.0, 128
        %984 = vxpose.xlu0.b32.cont [12/16] 0.0, 128
        %985 = vxpose.xlu0.b32.cont [13/16] 0.0, 128
        %986 = vxpose.xlu0.b32.cont [14/16] 0.0, 128
        %987 = vxpose.xlu0.b32.cont [15/16] 0.0, 128
        %988 = vxpose.xlu0.b32.end [16/16] 0.0, 128
        %v989 = vpop.trf.xlu0
        %v990 = vpop.trf.xlu0
        %v991 = vpop.trf.xlu0
        %v992 = vpop.trf.xlu0
        %v993 = vpop.trf.xlu0
        %v994 = vpop.trf.xlu0
        %v995 = vpop.trf.xlu0
        %v996 = vpop.trf.xlu0
        %v997 = vpop.trf.xlu0
        %v998 = vpop.trf.xlu0
        %v999 = vpop.trf.xlu0
        %v1000 = vpop.trf.xlu0
        %v1001 = vpop.trf.xlu0
        %v1002 = vpop.trf.xlu0
        %v1003 = vpop.trf.xlu0
        %v1004 = vpop.trf.xlu0
        %v1006 = vsel %vm875, %v989, 0
        %v1009 = vsel %vm875, %v990, 0
        %v1012 = vsel %vm875, %v991, 0
        %v1015 = vsel %vm875, %v992, 0
        %1017 = vmatprep.subr.mxu0 0.0
        %1018 = vmatpush1.msra.mxu0 %v836
        %1019 = vmatprep.subr.mxu0 0.0
        %1020 = vmatpush1.msra.mxu0 0.0
        %1021 = vmatprep.subr.mxu0 0.0
        %1022 = vmatpush1.msra.mxu0 0.0
        %1023 = vmatprep.subr.mxu0 0.0
        %1024 = vmatpush1.msra.mxu0 0.0
        %1025 = vmatprep.subr.mxu0 0.0
        %1026 = vmatpush1.msra.mxu0 0.0
        %1027 = vmatprep.subr.mxu0 0.0
        %1028 = vmatpush1.msra.mxu0 0.0
        %1029 = vmatprep.subr.mxu0 0.0
        %1030 = vmatpush1.msra.mxu0 0.0
        %1031 = vmatprep.subr.mxu0 0.0
        %1032 = vmatpush1.msra.mxu0 0.0
        %1033 = vmatprep.subr.mxu0 0.0
        %1034 = vmatpush1.msra.mxu0 0.0
        %1035 = vmatprep.subr.mxu0 0.0
        %1036 = vmatpush1.msra.mxu0 0.0
        %1037 = vmatprep.subr.mxu0 0.0
        %1038 = vmatpush1.msra.mxu0 0.0
        %1039 = vmatprep.subr.mxu0 0.0
        %1040 = vmatpush1.msra.mxu0 0.0
        %1041 = vmatprep.subr.mxu0 0.0
        %1042 = vmatpush1.msra.mxu0 0.0
        %1043 = vmatprep.subr.mxu0 0.0
        %1044 = vmatpush1.msra.mxu0 0.0
        %1045 = vmatprep.subr.mxu0 0.0
        %1046 = vmatpush1.msra.mxu0 0.0
        %1047 = vmatprep.subr.mxu0 0.0
        %1048 = vmatpush1.msra.mxu0 0.0
        %1049 = vmatprep.subr.mxu0 0.0
        %1050 = vmatpush1.msra.mxu0 0.0
        %1051 = vmatprep.subr.mxu0 0.0
        %1052 = vmatpush1.msra.mxu0 0.0
        %1053 = vmatprep.subr.mxu0 0.0
        %1054 = vmatpush1.msra.mxu0 0.0
        %1055 = vmatprep.subr.mxu0 0.0
        %1056 = vmatpush1.msra.mxu0 0.0
        %1057 = vmatprep.subr.mxu0 0.0
        %1058 = vmatpush1.msra.mxu0 0.0
        %1059 = vmatprep.subr.mxu0 0.0
        %1060 = vmatpush1.msra.mxu0 0.0
        %1061 = vmatprep.subr.mxu0 0.0
        %1062 = vmatpush1.msra.mxu0 0.0
        %1063 = vmatprep.subr.mxu0 0.0
        %1064 = vmatpush1.msra.mxu0 0.0
        %1065 = vmatprep.subr.mxu0 0.0
        %1066 = vmatpush1.msra.mxu0 0.0
        %1067 = vmatprep.subr.mxu0 0.0
        %1068 = vmatpush1.msra.mxu0 0.0
        %1069 = vmatprep.subr.mxu0 0.0
        %1070 = vmatpush1.msra.mxu0 0.0
        %1071 = vmatprep.subr.mxu0 0.0
        %1072 = vmatpush1.msra.mxu0 0.0
        %1073 = vmatprep.subr.mxu0 0.0
        %1074 = vmatpush1.msra.mxu0 0.0
        %1075 = vmatprep.subr.mxu0 0.0
        %1076 = vmatpush1.msra.mxu0 0.0
        %1077 = vmatprep.subr.mxu0 0.0
        %1078 = vmatpush1.msra.mxu0 0.0
        %1079 = vmatprep.subr.mxu0 0.0
        %1080 = vmatpush1.msra.mxu0 0.0
        %1081 = vmatprep.mubr.f32.mxu0 0.0
        %1082 = vmatmul.mubr.f32.gmra.mrb[0].mxu0 %v1006
        %v1083 = vpop.f32.mrb[0].mxu0
        %v1084 = vadd.f32 0.0, %v1083
        %v1085 = vpop.f32.mrb[0].mxu0
        %1086 = vmatprep.mubr.f32.mxu0 0.0
        %1087 = vmatmul.mubr.f32.gmra.mrb[0].mxu0 %v1009
        %v1088 = vpop.f32.mrb[0].mxu0
        %v1089 = vadd.f32 0.0, %v1088
        %v1090 = vpop.f32.mrb[0].mxu0
        %1091 = vmatprep.mubr.f32.mxu0 0.0
        %1092 = vmatmul.mubr.f32.gmra.mrb[0].mxu0 %v1012
        %v1093 = vpop.f32.mrb[0].mxu0
        %v1094 = vadd.f32 0.0, %v1093
        %v1095 = vpop.f32.mrb[0].mxu0
        %1096 = vmatprep.mubr.f32.mxu0 0.0
        %1097 = vmatmul.mubr.f32.gmra.mrb[0].mxu0 %v1015
        %v1098 = vpop.f32.mrb[0].mxu0
        %v1099 = vadd.f32 0.0, %v1098
        %v1100 = vpop.f32.mrb[0].mxu0
        %1101 = vdwg.mxu0
        %1102 = vxpose.xlu0.b32.start [1/16] %v297, 128
        %1103 = vxpose.xlu0.b32.cont [2/16] 0.0, 128
        %1104 = vxpose.xlu0.b32.cont [3/16] 0.0, 128
        %1105 = vxpose.xlu0.b32.cont [4/16] 0.0, 128
        %1106 = vxpose.xlu0.b32.cont [5/16] 0.0, 128
        %1107 = vxpose.xlu0.b32.cont [6/16] 0.0, 128
        %1108 = vxpose.xlu0.b32.cont [7/16] 0.0, 128
        %1109 = vxpose.xlu0.b32.cont [8/16] 0.0, 128
        %1110 = vxpose.xlu0.b32.cont [9/16] 0.0, 128
        %1111 = vxpose.xlu0.b32.cont [10/16] 0.0, 128
        %1112 = vxpose.xlu0.b32.cont [11/16] 0.0, 128
        %1113 = vxpose.xlu0.b32.cont [12/16] 0.0, 128
        %1114 = vxpose.xlu0.b32.cont [13/16] 0.0, 128
        %1115 = vxpose.xlu0.b32.cont [14/16] 0.0, 128
        %1116 = vxpose.xlu0.b32.cont [15/16] 0.0, 128
        %1117 = vxpose.xlu0.b32.end [16/16] 0.0, 128
        %v1118 = vpop.trf.xlu0
        %v1119 = vpop.trf.xlu0
        %v1120 = vpop.trf.xlu0
        %v1121 = vpop.trf.xlu0
        %v1122 = vpop.trf.xlu0
        %v1123 = vpop.trf.xlu0
        %v1124 = vpop.trf.xlu0
        %v1125 = vpop.trf.xlu0
        %v1126 = vpop.trf.xlu0
        %v1127 = vpop.trf.xlu0
        %v1128 = vpop.trf.xlu0
        %v1129 = vpop.trf.xlu0
        %v1130 = vpop.trf.xlu0
        %v1131 = vpop.trf.xlu0
        %v1132 = vpop.trf.xlu0
        %v1133 = vpop.trf.xlu0
        %v1135 = vsel %vm875, %v1118, 0
        %v1138 = vsel %vm875, %v1119, 0
        %v1141 = vsel %vm875, %v1120, 0
        %v1144 = vsel %vm875, %v1121, 0
        %1146 = vmatprep.subr.mxu0 0.0
        %1147 = vmatpush1.msra.mxu0 %v837
        %1148 = vmatprep.subr.mxu0 0.0
        %1149 = vmatpush1.msra.mxu0 0.0
        %1150 = vmatprep.subr.mxu0 0.0
        %1151 = vmatpush1.msra.mxu0 0.0
        %1152 = vmatprep.subr.mxu0 0.0
        %1153 = vmatpush1.msra.mxu0 0.0
        %1154 = vmatprep.subr.mxu0 0.0
        %1155 = vmatpush1.msra.mxu0 0.0
        %1156 = vmatprep.subr.mxu0 0.0
        %1157 = vmatpush1.msra.mxu0 0.0
        %1158 = vmatprep.subr.mxu0 0.0
        %1159 = vmatpush1.msra.mxu0 0.0
        %1160 = vmatprep.subr.mxu0 0.0
        %1161 = vmatpush1.msra.mxu0 0.0
        %1162 = vmatprep.subr.mxu0 0.0
        %1163 = vmatpush1.msra.mxu0 0.0
        %1164 = vmatprep.subr.mxu0 0.0
        %1165 = vmatpush1.msra.mxu0 0.0
        %1166 = vmatprep.subr.mxu0 0.0
        %1167 = vmatpush1.msra.mxu0 0.0
        %1168 = vmatprep.subr.mxu0 0.0
        %1169 = vmatpush1.msra.mxu0 0.0
        %1170 = vmatprep.subr.mxu0 0.0
        %1171 = vmatpush1.msra.mxu0 0.0
        %1172 = vmatprep.subr.mxu0 0.0
        %1173 = vmatpush1.msra.mxu0 0.0
        %1174 = vmatprep.subr.mxu0 0.0
        %1175 = vmatpush1.msra.mxu0 0.0
        %1176 = vmatprep.subr.mxu0 0.0
        %1177 = vmatpush1.msra.mxu0 0.0
        %1178 = vmatprep.subr.mxu0 0.0
        %1179 = vmatpush1.msra.mxu0 0.0
        %1180 = vmatprep.subr.mxu0 0.0
        %1181 = vmatpush1.msra.mxu0 0.0
        %1182 = vmatprep.subr.mxu0 0.0
        %1183 = vmatpush1.msra.mxu0 0.0
        %1184 = vmatprep.subr.mxu0 0.0
        %1185 = vmatpush1.msra.mxu0 0.0
        %1186 = vmatprep.subr.mxu0 0.0
        %1187 = vmatpush1.msra.mxu0 0.0
        %1188 = vmatprep.subr.mxu0 0.0
        %1189 = vmatpush1.msra.mxu0 0.0
        %1190 = vmatprep.subr.mxu0 0.0
        %1191 = vmatpush1.msra.mxu0 0.0
        %1192 = vmatprep.subr.mxu0 0.0
        %1193 = vmatpush1.msra.mxu0 0.0
        %1194 = vmatprep.subr.mxu0 0.0
        %1195 = vmatpush1.msra.mxu0 0.0
        %1196 = vmatprep.subr.mxu0 0.0
        %1197 = vmatpush1.msra.mxu0 0.0
        %1198 = vmatprep.subr.mxu0 0.0
        %1199 = vmatpush1.msra.mxu0 0.0
        %1200 = vmatprep.subr.mxu0 0.0
        %1201 = vmatpush1.msra.mxu0 0.0
        %1202 = vmatprep.subr.mxu0 0.0
        %1203 = vmatpush1.msra.mxu0 0.0
        %1204 = vmatprep.subr.mxu0 0.0
        %1205 = vmatpush1.msra.mxu0 0.0
        %1206 = vmatprep.subr.mxu0 0.0
        %1207 = vmatpush1.msra.mxu0 0.0
        %1208 = vmatprep.subr.mxu0 0.0
        %1209 = vmatpush1.msra.mxu0 0.0
        %1210 = vmatprep.mubr.f32.mxu0 0.0
        %1211 = vmatmul.mubr.f32.gmra.mrb[0].mxu0 %v1135
        %v1212 = vpop.f32.mrb[0].mxu0
        %v1213 = vadd.f32 0.0, %v1212
        %v1214 = vpop.f32.mrb[0].mxu0
        %1215 = vmatprep.mubr.f32.mxu0 0.0
        %1216 = vmatmul.mubr.f32.gmra.mrb[0].mxu0 %v1138
        %v1217 = vpop.f32.mrb[0].mxu0
        %v1218 = vadd.f32 0.0, %v1217
        %v1219 = vpop.f32.mrb[0].mxu0
        %1220 = vmatprep.mubr.f32.mxu0 0.0
        %1221 = vmatmul.mubr.f32.gmra.mrb[0].mxu0 %v1141
        %v1222 = vpop.f32.mrb[0].mxu0
        %v1223 = vadd.f32 0.0, %v1222
        %v1224 = vpop.f32.mrb[0].mxu0
        %1225 = vmatprep.mubr.f32.mxu0 0.0
        %1226 = vmatmul.mubr.f32.gmra.mrb[0].mxu0 %v1144
        %v1227 = vpop.f32.mrb[0].mxu0
        %v1228 = vadd.f32 0.0, %v1227
        %v1229 = vpop.f32.mrb[0].mxu0
        %1230 = vdwg.mxu0
        %1231 = vxpose.xlu0.b32.start [1/16] %v298, 128
        %1232 = vxpose.xlu0.b32.cont [2/16] 0.0, 128
        %1233 = vxpose.xlu0.b32.cont [3/16] 0.0, 128
        %1234 = vxpose.xlu0.b32.cont [4/16] 0.0, 128
        %1235 = vxpose.xlu0.b32.cont [5/16] 0.0, 128
        %1236 = vxpose.xlu0.b32.cont [6/16] 0.0, 128
        %1237 = vxpose.xlu0.b32.cont [7/16] 0.0, 128
        %1238 = vxpose.xlu0.b32.cont [8/16] 0.0, 128
        %1239 = vxpose.xlu0.b32.cont [9/16] 0.0, 128
        %1240 = vxpose.xlu0.b32.cont [10/16] 0.0, 128
        %1241 = vxpose.xlu0.b32.cont [11/16] 0.0, 128
        %1242 = vxpose.xlu0.b32.cont [12/16] 0.0, 128
        %1243 = vxpose.xlu0.b32.cont [13/16] 0.0, 128
        %1244 = vxpose.xlu0.b32.cont [14/16] 0.0, 128
        %1245 = vxpose.xlu0.b32.cont [15/16] 0.0, 128
        %1246 = vxpose.xlu0.b32.end [16/16] 0.0, 128
        %v1247 = vpop.trf.xlu0
        %v1248 = vpop.trf.xlu0
        %v1249 = vpop.trf.xlu0
        %v1250 = vpop.trf.xlu0
        %v1251 = vpop.trf.xlu0
        %v1252 = vpop.trf.xlu0
        %v1253 = vpop.trf.xlu0
        %v1254 = vpop.trf.xlu0
        %v1255 = vpop.trf.xlu0
        %v1256 = vpop.trf.xlu0
        %v1257 = vpop.trf.xlu0
        %v1258 = vpop.trf.xlu0
        %v1259 = vpop.trf.xlu0
        %v1260 = vpop.trf.xlu0
        %v1261 = vpop.trf.xlu0
        %v1262 = vpop.trf.xlu0
        %v1264 = vsel %vm875, %v1247, 0
        %v1267 = vsel %vm875, %v1248, 0
        %v1270 = vsel %vm875, %v1249, 0
        %v1273 = vsel %vm875, %v1250, 0
        %1275 = vmatprep.subr.mxu0 0.0
        %1276 = vmatpush1.msra.mxu0 %v838
        %1277 = vmatprep.subr.mxu0 0.0
        %1278 = vmatpush1.msra.mxu0 0.0
        %1279 = vmatprep.subr.mxu0 0.0
        %1280 = vmatpush1.msra.mxu0 0.0
        %1281 = vmatprep.subr.mxu0 0.0
        %1282 = vmatpush1.msra.mxu0 0.0
        %1283 = vmatprep.subr.mxu0 0.0
        %1284 = vmatpush1.msra.mxu0 0.0
        %1285 = vmatprep.subr.mxu0 0.0
        %1286 = vmatpush1.msra.mxu0 0.0
        %1287 = vmatprep.subr.mxu0 0.0
        %1288 = vmatpush1.msra.mxu0 0.0
        %1289 = vmatprep.subr.mxu0 0.0
        %1290 = vmatpush1.msra.mxu0 0.0
        %1291 = vmatprep.subr.mxu0 0.0
        %1292 = vmatpush1.msra.mxu0 0.0
        %1293 = vmatprep.subr.mxu0 0.0
        %1294 = vmatpush1.msra.mxu0 0.0
        %1295 = vmatprep.subr.mxu0 0.0
        %1296 = vmatpush1.msra.mxu0 0.0
        %1297 = vmatprep.subr.mxu0 0.0
        %1298 = vmatpush1.msra.mxu0 0.0
        %1299 = vmatprep.subr.mxu0 0.0
        %1300 = vmatpush1.msra.mxu0 0.0
        %1301 = vmatprep.subr.mxu0 0.0
        %1302 = vmatpush1.msra.mxu0 0.0
        %1303 = vmatprep.subr.mxu0 0.0
        %1304 = vmatpush1.msra.mxu0 0.0
        %1305 = vmatprep.subr.mxu0 0.0
        %1306 = vmatpush1.msra.mxu0 0.0
        %1307 = vmatprep.subr.mxu0 0.0
        %1308 = vmatpush1.msra.mxu0 0.0
        %1309 = vmatprep.subr.mxu0 0.0
        %1310 = vmatpush1.msra.mxu0 0.0
        %1311 = vmatprep.subr.mxu0 0.0
        %1312 = vmatpush1.msra.mxu0 0.0
        %1313 = vmatprep.subr.mxu0 0.0
        %1314 = vmatpush1.msra.mxu0 0.0
        %1315 = vmatprep.subr.mxu0 0.0
        %1316 = vmatpush1.msra.mxu0 0.0
        %1317 = vmatprep.subr.mxu0 0.0
        %1318 = vmatpush1.msra.mxu0 0.0
        %1319 = vmatprep.subr.mxu0 0.0
        %1320 = vmatpush1.msra.mxu0 0.0
        %1321 = vmatprep.subr.mxu0 0.0
        %1322 = vmatpush1.msra.mxu0 0.0
        %1323 = vmatprep.subr.mxu0 0.0
        %1324 = vmatpush1.msra.mxu0 0.0
        %1325 = vmatprep.subr.mxu0 0.0
        %1326 = vmatpush1.msra.mxu0 0.0
        %1327 = vmatprep.subr.mxu0 0.0
        %1328 = vmatpush1.msra.mxu0 0.0
        %1329 = vmatprep.subr.mxu0 0.0
        %1330 = vmatpush1.msra.mxu0 0.0
        %1331 = vmatprep.subr.mxu0 0.0
        %1332 = vmatpush1.msra.mxu0 0.0
        %1333 = vmatprep.subr.mxu0 0.0
        %1334 = vmatpush1.msra.mxu0 0.0
        %1335 = vmatprep.subr.mxu0 0.0
        %1336 = vmatpush1.msra.mxu0 0.0
        %1337 = vmatprep.subr.mxu0 0.0
        %1338 = vmatpush1.msra.mxu0 0.0
        %1339 = vmatprep.mubr.f32.mxu0 0.0
        %1340 = vmatmul.mubr.f32.gmra.mrb[0].mxu0 %v1264
        %v1341 = vpop.f32.mrb[0].mxu0
        %v1342 = vadd.f32 0.0, %v1341
        %v1343 = vpop.f32.mrb[0].mxu0
        %1344 = vmatprep.mubr.f32.mxu0 0.0
        %1345 = vmatmul.mubr.f32.gmra.mrb[0].mxu0 %v1267
        %v1346 = vpop.f32.mrb[0].mxu0
        %v1347 = vadd.f32 0.0, %v1346
        %v1348 = vpop.f32.mrb[0].mxu0
        %1349 = vmatprep.mubr.f32.mxu0 0.0
        %1350 = vmatmul.mubr.f32.gmra.mrb[0].mxu0 %v1270
        %v1351 = vpop.f32.mrb[0].mxu0
        %v1352 = vadd.f32 0.0, %v1351
        %v1353 = vpop.f32.mrb[0].mxu0
        %1354 = vmatprep.mubr.f32.mxu0 0.0
        %1355 = vmatmul.mubr.f32.gmra.mrb[0].mxu0 %v1273
        %v1356 = vpop.f32.mrb[0].mxu0
        %v1357 = vadd.f32 0.0, %v1356
        %v1358 = vpop.f32.mrb[0].mxu0
        %1359 = vdwg.mxu0
        %1360 = vxpose.xlu0.b32.start [1/16] %v299, 128
        %1361 = vxpose.xlu0.b32.cont [2/16] 0.0, 128
        %1362 = vxpose.xlu0.b32.cont [3/16] 0.0, 128
        %1363 = vxpose.xlu0.b32.cont [4/16] 0.0, 128
        %1364 = vxpose.xlu0.b32.cont [5/16] 0.0, 128
        %1365 = vxpose.xlu0.b32.cont [6/16] 0.0, 128
        %1366 = vxpose.xlu0.b32.cont [7/16] 0.0, 128
        %1367 = vxpose.xlu0.b32.cont [8/16] 0.0, 128
        %1368 = vxpose.xlu0.b32.cont [9/16] 0.0, 128
        %1369 = vxpose.xlu0.b32.cont [10/16] 0.0, 128
        %1370 = vxpose.xlu0.b32.cont [11/16] 0.0, 128
        %1371 = vxpose.xlu0.b32.cont [12/16] 0.0, 128
        %1372 = vxpose.xlu0.b32.cont [13/16] 0.0, 128
        %1373 = vxpose.xlu0.b32.cont [14/16] 0.0, 128
        %1374 = vxpose.xlu0.b32.cont [15/16] 0.0, 128
        %1375 = vxpose.xlu0.b32.end [16/16] 0.0, 128
        %v1376 = vpop.trf.xlu0
        %v1377 = vpop.trf.xlu0
        %v1378 = vpop.trf.xlu0
        %v1379 = vpop.trf.xlu0
        %v1380 = vpop.trf.xlu0
        %v1381 = vpop.trf.xlu0
        %v1382 = vpop.trf.xlu0
        %v1383 = vpop.trf.xlu0
        %v1384 = vpop.trf.xlu0
        %v1385 = vpop.trf.xlu0
        %v1386 = vpop.trf.xlu0
        %v1387 = vpop.trf.xlu0
        %v1388 = vpop.trf.xlu0
        %v1389 = vpop.trf.xlu0
        %v1390 = vpop.trf.xlu0
        %v1391 = vpop.trf.xlu0
        %v1393 = vsel %vm875, %v1376, 0
        %v1396 = vsel %vm875, %v1377, 0
        %v1399 = vsel %vm875, %v1378, 0
        %v1402 = vsel %vm875, %v1379, 0
        %1404 = vmatprep.subr.mxu0 0.0
        %1405 = vmatpush1.msra.mxu0 %v839
        %1406 = vmatprep.subr.mxu0 0.0
        %1407 = vmatpush1.msra.mxu0 0.0
        %1408 = vmatprep.subr.mxu0 0.0
        %1409 = vmatpush1.msra.mxu0 0.0
        %1410 = vmatprep.subr.mxu0 0.0
        %1411 = vmatpush1.msra.mxu0 0.0
        %1412 = vmatprep.subr.mxu0 0.0
        %1413 = vmatpush1.msra.mxu0 0.0
        %1414 = vmatprep.subr.mxu0 0.0
        %1415 = vmatpush1.msra.mxu0 0.0
        %1416 = vmatprep.subr.mxu0 0.0
        %1417 = vmatpush1.msra.mxu0 0.0
        %1418 = vmatprep.subr.mxu0 0.0
        %1419 = vmatpush1.msra.mxu0 0.0
        %1420 = vmatprep.subr.mxu0 0.0
        %1421 = vmatpush1.msra.mxu0 0.0
        %1422 = vmatprep.subr.mxu0 0.0
        %1423 = vmatpush1.msra.mxu0 0.0
        %1424 = vmatprep.subr.mxu0 0.0
        %1425 = vmatpush1.msra.mxu0 0.0
        %1426 = vmatprep.subr.mxu0 0.0
        %1427 = vmatpush1.msra.mxu0 0.0
        %1428 = vmatprep.subr.mxu0 0.0
        %1429 = vmatpush1.msra.mxu0 0.0
        %1430 = vmatprep.subr.mxu0 0.0
        %1431 = vmatpush1.msra.mxu0 0.0
        %1432 = vmatprep.subr.mxu0 0.0
        %1433 = vmatpush1.msra.mxu0 0.0
        %1434 = vmatprep.subr.mxu0 0.0
        %1435 = vmatpush1.msra.mxu0 0.0
        %1436 = vmatprep.subr.mxu0 0.0
        %1437 = vmatpush1.msra.mxu0 0.0
        %1438 = vmatprep.subr.mxu0 0.0
        %1439 = vmatpush1.msra.mxu0 0.0
        %1440 = vmatprep.subr.mxu0 0.0
        %1441 = vmatpush1.msra.mxu0 0.0
        %1442 = vmatprep.subr.mxu0 0.0
        %1443 = vmatpush1.msra.mxu0 0.0
        %1444 = vmatprep.subr.mxu0 0.0
        %1445 = vmatpush1.msra.mxu0 0.0
        %1446 = vmatprep.subr.mxu0 0.0
        %1447 = vmatpush1.msra.mxu0 0.0
        %1448 = vmatprep.subr.mxu0 0.0
        %1449 = vmatpush1.msra.mxu0 0.0
        %1450 = vmatprep.subr.mxu0 0.0
        %1451 = vmatpush1.msra.mxu0 0.0
        %1452 = vmatprep.subr.mxu0 0.0
        %1453 = vmatpush1.msra.mxu0 0.0
        %1454 = vmatprep.subr.mxu0 0.0
        %1455 = vmatpush1.msra.mxu0 0.0
        %1456 = vmatprep.subr.mxu0 0.0
        %1457 = vmatpush1.msra.mxu0 0.0
        %1458 = vmatprep.subr.mxu0 0.0
        %1459 = vmatpush1.msra.mxu0 0.0
        %1460 = vmatprep.subr.mxu0 0.0
        %1461 = vmatpush1.msra.mxu0 0.0
        %1462 = vmatprep.subr.mxu0 0.0
        %1463 = vmatpush1.msra.mxu0 0.0
        %1464 = vmatprep.subr.mxu0 0.0
        %1465 = vmatpush1.msra.mxu0 0.0
        %1466 = vmatprep.subr.mxu0 0.0
        %1467 = vmatpush1.msra.mxu0 0.0
        %1468 = vmatprep.mubr.f32.mxu0 0.0
        %1469 = vmatmul.mubr.f32.gmra.mrb[0].mxu0 %v1393
        %v1470 = vpop.f32.mrb[0].mxu0
        %v1471 = vadd.f32 0.0, %v1470
        %v1472 = vpop.f32.mrb[0].mxu0
        %1473 = vmatprep.mubr.f32.mxu0 0.0
        %1474 = vmatmul.mubr.f32.gmra.mrb[0].mxu0 %v1396
        %v1475 = vpop.f32.mrb[0].mxu0
        %v1476 = vadd.f32 0.0, %v1475
        %v1477 = vpop.f32.mrb[0].mxu0
        %1478 = vmatprep.mubr.f32.mxu0 0.0
        %1479 = vmatmul.mubr.f32.gmra.mrb[0].mxu0 %v1399
        %v1480 = vpop.f32.mrb[0].mxu0
        %v1481 = vadd.f32 0.0, %v1480
        %v1482 = vpop.f32.mrb[0].mxu0
        %1483 = vmatprep.mubr.f32.mxu0 0.0
        %1484 = vmatmul.mubr.f32.gmra.mrb[0].mxu0 %v1402
        %v1485 = vpop.f32.mrb[0].mxu0
        %v1486 = vadd.f32 0.0, %v1485
        %v1487 = vpop.f32.mrb[0].mxu0
        %1488 = vdwg.mxu0
        %1489 = vxpose.xlu0.b32.start [1/16] %v300, 128
        %1490 = vxpose.xlu0.b32.cont [2/16] 0.0, 128
        %1491 = vxpose.xlu0.b32.cont [3/16] 0.0, 128
        %1492 = vxpose.xlu0.b32.cont [4/16] 0.0, 128
        %1493 = vxpose.xlu0.b32.cont [5/16] 0.0, 128
        %1494 = vxpose.xlu0.b32.cont [6/16] 0.0, 128
        %1495 = vxpose.xlu0.b32.cont [7/16] 0.0, 128
        %1496 = vxpose.xlu0.b32.cont [8/16] 0.0, 128
        %1497 = vxpose.xlu0.b32.cont [9/16] 0.0, 128
        %1498 = vxpose.xlu0.b32.cont [10/16] 0.0, 128
        %1499 = vxpose.xlu0.b32.cont [11/16] 0.0, 128
        %1500 = vxpose.xlu0.b32.cont [12/16] 0.0, 128
        %1501 = vxpose.xlu0.b32.cont [13/16] 0.0, 128
        %1502 = vxpose.xlu0.b32.cont [14/16] 0.0, 128
        %1503 = vxpose.xlu0.b32.cont [15/16] 0.0, 128
        %1504 = vxpose.xlu0.b32.end [16/16] 0.0, 128
        %v1505 = vpop.trf.xlu0
        %v1506 = vpop.trf.xlu0
        %v1507 = vpop.trf.xlu0
        %v1508 = vpop.trf.xlu0
        %v1509 = vpop.trf.xlu0
        %v1510 = vpop.trf.xlu0
        %v1511 = vpop.trf.xlu0
        %v1512 = vpop.trf.xlu0
        %v1513 = vpop.trf.xlu0
        %v1514 = vpop.trf.xlu0
        %v1515 = vpop.trf.xlu0
        %v1516 = vpop.trf.xlu0
        %v1517 = vpop.trf.xlu0
        %v1518 = vpop.trf.xlu0
        %v1519 = vpop.trf.xlu0
        %v1520 = vpop.trf.xlu0
        %v1522 = vsel %vm875, %v1505, 0
        %v1525 = vsel %vm875, %v1506, 0
        %v1528 = vsel %vm875, %v1507, 0
        %v1531 = vsel %vm875, %v1508, 0
        %1533 = vmatprep.subr.mxu0 0.0
        %1534 = vmatpush1.msra.mxu0 %v840
        %1535 = vmatprep.subr.mxu0 0.0
        %1536 = vmatpush1.msra.mxu0 0.0
        %1537 = vmatprep.subr.mxu0 0.0
        %1538 = vmatpush1.msra.mxu0 0.0
        %1539 = vmatprep.subr.mxu0 0.0
        %1540 = vmatpush1.msra.mxu0 0.0
        %1541 = vmatprep.subr.mxu0 0.0
        %1542 = vmatpush1.msra.mxu0 0.0
        %1543 = vmatprep.subr.mxu0 0.0
        %1544 = vmatpush1.msra.mxu0 0.0
        %1545 = vmatprep.subr.mxu0 0.0
        %1546 = vmatpush1.msra.mxu0 0.0
        %1547 = vmatprep.subr.mxu0 0.0
        %1548 = vmatpush1.msra.mxu0 0.0
        %1549 = vmatprep.subr.mxu0 0.0
        %1550 = vmatpush1.msra.mxu0 0.0
        %1551 = vmatprep.subr.mxu0 0.0
        %1552 = vmatpush1.msra.mxu0 0.0
        %1553 = vmatprep.subr.mxu0 0.0
        %1554 = vmatpush1.msra.mxu0 0.0
        %1555 = vmatprep.subr.mxu0 0.0
        %1556 = vmatpush1.msra.mxu0 0.0
        %1557 = vmatprep.subr.mxu0 0.0
        %1558 = vmatpush1.msra.mxu0 0.0
        %1559 = vmatprep.subr.mxu0 0.0
        %1560 = vmatpush1.msra.mxu0 0.0
        %1561 = vmatprep.subr.mxu0 0.0
        %1562 = vmatpush1.msra.mxu0 0.0
        %1563 = vmatprep.subr.mxu0 0.0
        %1564 = vmatpush1.msra.mxu0 0.0
        %1565 = vmatprep.subr.mxu0 0.0
        %1566 = vmatpush1.msra.mxu0 0.0
        %1567 = vmatprep.subr.mxu0 0.0
        %1568 = vmatpush1.msra.mxu0 0.0
        %1569 = vmatprep.subr.mxu0 0.0
        %1570 = vmatpush1.msra.mxu0 0.0
        %1571 = vmatprep.subr.mxu0 0.0
        %1572 = vmatpush1.msra.mxu0 0.0
        %1573 = vmatprep.subr.mxu0 0.0
        %1574 = vmatpush1.msra.mxu0 0.0
        %1575 = vmatprep.subr.mxu0 0.0
        %1576 = vmatpush1.msra.mxu0 0.0
        %1577 = vmatprep.subr.mxu0 0.0
        %1578 = vmatpush1.msra.mxu0 0.0
        %1579 = vmatprep.subr.mxu0 0.0
        %1580 = vmatpush1.msra.mxu0 0.0
        %1581 = vmatprep.subr.mxu0 0.0
        %1582 = vmatpush1.msra.mxu0 0.0
        %1583 = vmatprep.subr.mxu0 0.0
        %1584 = vmatpush1.msra.mxu0 0.0
        %1585 = vmatprep.subr.mxu0 0.0
        %1586 = vmatpush1.msra.mxu0 0.0
        %1587 = vmatprep.subr.mxu0 0.0
        %1588 = vmatpush1.msra.mxu0 0.0
        %1589 = vmatprep.subr.mxu0 0.0
        %1590 = vmatpush1.msra.mxu0 0.0
        %1591 = vmatprep.subr.mxu0 0.0
        %1592 = vmatpush1.msra.mxu0 0.0
        %1593 = vmatprep.subr.mxu0 0.0
        %1594 = vmatpush1.msra.mxu0 0.0
        %1595 = vmatprep.subr.mxu0 0.0
        %1596 = vmatpush1.msra.mxu0 0.0
        %1597 = vmatprep.mubr.f32.mxu0 0.0
        %1598 = vmatmul.mubr.f32.gmra.mrb[0].mxu0 %v1522
        %v1599 = vpop.f32.mrb[0].mxu0
        %v1600 = vadd.f32 0.0, %v1599
        %v1601 = vpop.f32.mrb[0].mxu0
        %1602 = vmatprep.mubr.f32.mxu0 0.0
        %1603 = vmatmul.mubr.f32.gmra.mrb[0].mxu0 %v1525
        %v1604 = vpop.f32.mrb[0].mxu0
        %v1605 = vadd.f32 0.0, %v1604
        %v1606 = vpop.f32.mrb[0].mxu0
        %1607 = vmatprep.mubr.f32.mxu0 0.0
        %1608 = vmatmul.mubr.f32.gmra.mrb[0].mxu0 %v1528
        %v1609 = vpop.f32.mrb[0].mxu0
        %v1610 = vadd.f32 0.0, %v1609
        %v1611 = vpop.f32.mrb[0].mxu0
        %1612 = vmatprep.mubr.f32.mxu0 0.0
        %1613 = vmatmul.mubr.f32.gmra.mrb[0].mxu0 %v1531
        %v1614 = vpop.f32.mrb[0].mxu0
        %v1615 = vadd.f32 0.0, %v1614
        %v1616 = vpop.f32.mrb[0].mxu0
        %1617 = vdwg.mxu0
        %1618 = vxpose.xlu0.b32.start [1/16] %v301, 128
        %1619 = vxpose.xlu0.b32.cont [2/16] 0.0, 128
        %1620 = vxpose.xlu0.b32.cont [3/16] 0.0, 128
        %1621 = vxpose.xlu0.b32.cont [4/16] 0.0, 128
        %1622 = vxpose.xlu0.b32.cont [5/16] 0.0, 128
        %1623 = vxpose.xlu0.b32.cont [6/16] 0.0, 128
        %1624 = vxpose.xlu0.b32.cont [7/16] 0.0, 128
        %1625 = vxpose.xlu0.b32.cont [8/16] 0.0, 128
        %1626 = vxpose.xlu0.b32.cont [9/16] 0.0, 128
        %1627 = vxpose.xlu0.b32.cont [10/16] 0.0, 128
        %1628 = vxpose.xlu0.b32.cont [11/16] 0.0, 128
        %1629 = vxpose.xlu0.b32.cont [12/16] 0.0, 128
        %1630 = vxpose.xlu0.b32.cont [13/16] 0.0, 128
        %1631 = vxpose.xlu0.b32.cont [14/16] 0.0, 128
        %1632 = vxpose.xlu0.b32.cont [15/16] 0.0, 128
        %1633 = vxpose.xlu0.b32.end [16/16] 0.0, 128
        %v1634 = vpop.trf.xlu0
        %v1635 = vpop.trf.xlu0
        %v1636 = vpop.trf.xlu0
        %v1637 = vpop.trf.xlu0
        %v1638 = vpop.trf.xlu0
        %v1639 = vpop.trf.xlu0
        %v1640 = vpop.trf.xlu0
        %v1641 = vpop.trf.xlu0
        %v1642 = vpop.trf.xlu0
        %v1643 = vpop.trf.xlu0
        %v1644 = vpop.trf.xlu0
        %v1645 = vpop.trf.xlu0
        %v1646 = vpop.trf.xlu0
        %v1647 = vpop.trf.xlu0
        %v1648 = vpop.trf.xlu0
        %v1649 = vpop.trf.xlu0
        %v1651 = vsel %vm875, %v1634, 0
        %v1654 = vsel %vm875, %v1635, 0
        %v1657 = vsel %vm875, %v1636, 0
        %v1660 = vsel %vm875, %v1637, 0
        %1662 = vmatprep.subr.mxu0 0.0
        %1663 = vmatpush1.msra.mxu0 %v841
        %1664 = vmatprep.subr.mxu0 0.0
        %1665 = vmatpush1.msra.mxu0 0.0
        %1666 = vmatprep.subr.mxu0 0.0
        %1667 = vmatpush1.msra.mxu0 0.0
        %1668 = vmatprep.subr.mxu0 0.0
        %1669 = vmatpush1.msra.mxu0 0.0
        %1670 = vmatprep.subr.mxu0 0.0
        %1671 = vmatpush1.msra.mxu0 0.0
        %1672 = vmatprep.subr.mxu0 0.0
        %1673 = vmatpush1.msra.mxu0 0.0
        %1674 = vmatprep.subr.mxu0 0.0
        %1675 = vmatpush1.msra.mxu0 0.0
        %1676 = vmatprep.subr.mxu0 0.0
        %1677 = vmatpush1.msra.mxu0 0.0
        %1678 = vmatprep.subr.mxu0 0.0
        %1679 = vmatpush1.msra.mxu0 0.0
        %1680 = vmatprep.subr.mxu0 0.0
        %1681 = vmatpush1.msra.mxu0 0.0
        %1682 = vmatprep.subr.mxu0 0.0
        %1683 = vmatpush1.msra.mxu0 0.0
        %1684 = vmatprep.subr.mxu0 0.0
        %1685 = vmatpush1.msra.mxu0 0.0
        %1686 = vmatprep.subr.mxu0 0.0
        %1687 = vmatpush1.msra.mxu0 0.0
        %1688 = vmatprep.subr.mxu0 0.0
        %1689 = vmatpush1.msra.mxu0 0.0
        %1690 = vmatprep.subr.mxu0 0.0
        %1691 = vmatpush1.msra.mxu0 0.0
        %1692 = vmatprep.subr.mxu0 0.0
        %1693 = vmatpush1.msra.mxu0 0.0
        %1694 = vmatprep.subr.mxu0 0.0
        %1695 = vmatpush1.msra.mxu0 0.0
        %1696 = vmatprep.subr.mxu0 0.0
        %1697 = vmatpush1.msra.mxu0 0.0
        %1698 = vmatprep.subr.mxu0 0.0
        %1699 = vmatpush1.msra.mxu0 0.0
        %1700 = vmatprep.subr.mxu0 0.0
        %1701 = vmatpush1.msra.mxu0 0.0
        %1702 = vmatprep.subr.mxu0 0.0
        %1703 = vmatpush1.msra.mxu0 0.0
        %1704 = vmatprep.subr.mxu0 0.0
        %1705 = vmatpush1.msra.mxu0 0.0
        %1706 = vmatprep.subr.mxu0 0.0
        %1707 = vmatpush1.msra.mxu0 0.0
        %1708 = vmatprep.subr.mxu0 0.0
        %1709 = vmatpush1.msra.mxu0 0.0
        %1710 = vmatprep.subr.mxu0 0.0
        %1711 = vmatpush1.msra.mxu0 0.0
        %1712 = vmatprep.subr.mxu0 0.0
        %1713 = vmatpush1.msra.mxu0 0.0
        %1714 = vmatprep.subr.mxu0 0.0
        %1715 = vmatpush1.msra.mxu0 0.0
        %1716 = vmatprep.subr.mxu0 0.0
        %1717 = vmatpush1.msra.mxu0 0.0
        %1718 = vmatprep.subr.mxu0 0.0
        %1719 = vmatpush1.msra.mxu0 0.0
        %1720 = vmatprep.subr.mxu0 0.0
        %1721 = vmatpush1.msra.mxu0 0.0
        %1722 = vmatprep.subr.mxu0 0.0
        %1723 = vmatpush1.msra.mxu0 0.0
        %1724 = vmatprep.subr.mxu0 0.0
        %1725 = vmatpush1.msra.mxu0 0.0
        %1726 = vmatprep.mubr.f32.mxu0 0.0
        %1727 = vmatmul.mubr.f32.gmra.mrb[0].mxu0 %v1651
        %v1728 = vpop.f32.mrb[0].mxu0
        %v1729 = vadd.f32 0.0, %v1728
        %v1730 = vpop.f32.mrb[0].mxu0
        %1731 = vmatprep.mubr.f32.mxu0 0.0
        %1732 = vmatmul.mubr.f32.gmra.mrb[0].mxu0 %v1654
        %v1733 = vpop.f32.mrb[0].mxu0
        %v1734 = vadd.f32 0.0, %v1733
        %v1735 = vpop.f32.mrb[0].mxu0
        %1736 = vmatprep.mubr.f32.mxu0 0.0
        %1737 = vmatmul.mubr.f32.gmra.mrb[0].mxu0 %v1657
        %v1738 = vpop.f32.mrb[0].mxu0
        %v1739 = vadd.f32 0.0, %v1738
        %v1740 = vpop.f32.mrb[0].mxu0
        %1741 = vmatprep.mubr.f32.mxu0 0.0
        %1742 = vmatmul.mubr.f32.gmra.mrb[0].mxu0 %v1660
        %v1743 = vpop.f32.mrb[0].mxu0
        %v1744 = vadd.f32 0.0, %v1743
        %v1745 = vpop.f32.mrb[0].mxu0
        %1746 = vdwg.mxu0
        %1747 = vxpose.xlu0.b32.start [1/16] %v302, 128
        %1748 = vxpose.xlu0.b32.cont [2/16] 0.0, 128
        %1749 = vxpose.xlu0.b32.cont [3/16] 0.0, 128
        %1750 = vxpose.xlu0.b32.cont [4/16] 0.0, 128
        %1751 = vxpose.xlu0.b32.cont [5/16] 0.0, 128
        %1752 = vxpose.xlu0.b32.cont [6/16] 0.0, 128
        %1753 = vxpose.xlu0.b32.cont [7/16] 0.0, 128
        %1754 = vxpose.xlu0.b32.cont [8/16] 0.0, 128
        %1755 = vxpose.xlu0.b32.cont [9/16] 0.0, 128
        %1756 = vxpose.xlu0.b32.cont [10/16] 0.0, 128
        %1757 = vxpose.xlu0.b32.cont [11/16] 0.0, 128
        %1758 = vxpose.xlu0.b32.cont [12/16] 0.0, 128
        %1759 = vxpose.xlu0.b32.cont [13/16] 0.0, 128
        %1760 = vxpose.xlu0.b32.cont [14/16] 0.0, 128
        %1761 = vxpose.xlu0.b32.cont [15/16] 0.0, 128
        %1762 = vxpose.xlu0.b32.end [16/16] 0.0, 128
        %v1763 = vpop.trf.xlu0
        %v1764 = vpop.trf.xlu0
        %v1765 = vpop.trf.xlu0
        %v1766 = vpop.trf.xlu0
        %v1767 = vpop.trf.xlu0
        %v1768 = vpop.trf.xlu0
        %v1769 = vpop.trf.xlu0
        %v1770 = vpop.trf.xlu0
        %v1771 = vpop.trf.xlu0
        %v1772 = vpop.trf.xlu0
        %v1773 = vpop.trf.xlu0
        %v1774 = vpop.trf.xlu0
        %v1775 = vpop.trf.xlu0
        %v1776 = vpop.trf.xlu0
        %v1777 = vpop.trf.xlu0
        %v1778 = vpop.trf.xlu0
        %v1780 = vsel %vm875, %v1763, 0
        %v1783 = vsel %vm875, %v1764, 0
        %v1786 = vsel %vm875, %v1765, 0
        %v1789 = vsel %vm875, %v1766, 0
        %1791 = vmatprep.subr.mxu0 0.0
        %1792 = vmatpush1.msra.mxu0 %v842
        %1793 = vmatprep.subr.mxu0 0.0
        %1794 = vmatpush1.msra.mxu0 0.0
        %1795 = vmatprep.subr.mxu0 0.0
        %1796 = vmatpush1.msra.mxu0 0.0
        %1797 = vmatprep.subr.mxu0 0.0
        %1798 = vmatpush1.msra.mxu0 0.0
        %1799 = vmatprep.subr.mxu0 0.0
        %1800 = vmatpush1.msra.mxu0 0.0
        %1801 = vmatprep.subr.mxu0 0.0
        %1802 = vmatpush1.msra.mxu0 0.0
        %1803 = vmatprep.subr.mxu0 0.0
        %1804 = vmatpush1.msra.mxu0 0.0
        %1805 = vmatprep.subr.mxu0 0.0
        %1806 = vmatpush1.msra.mxu0 0.0
        %1807 = vmatprep.subr.mxu0 0.0
        %1808 = vmatpush1.msra.mxu0 0.0
        %1809 = vmatprep.subr.mxu0 0.0
        %1810 = vmatpush1.msra.mxu0 0.0
        %1811 = vmatprep.subr.mxu0 0.0
        %1812 = vmatpush1.msra.mxu0 0.0
        %1813 = vmatprep.subr.mxu0 0.0
        %1814 = vmatpush1.msra.mxu0 0.0
        %1815 = vmatprep.subr.mxu0 0.0
        %1816 = vmatpush1.msra.mxu0 0.0
        %1817 = vmatprep.subr.mxu0 0.0
        %1818 = vmatpush1.msra.mxu0 0.0
        %1819 = vmatprep.subr.mxu0 0.0
        %1820 = vmatpush1.msra.mxu0 0.0
        %1821 = vmatprep.subr.mxu0 0.0
        %1822 = vmatpush1.msra.mxu0 0.0
        %1823 = vmatprep.subr.mxu0 0.0
        %1824 = vmatpush1.msra.mxu0 0.0
        %1825 = vmatprep.subr.mxu0 0.0
        %1826 = vmatpush1.msra.mxu0 0.0
        %1827 = vmatprep.subr.mxu0 0.0
        %1828 = vmatpush1.msra.mxu0 0.0
        %1829 = vmatprep.subr.mxu0 0.0
        %1830 = vmatpush1.msra.mxu0 0.0
        %1831 = vmatprep.subr.mxu0 0.0
        %1832 = vmatpush1.msra.mxu0 0.0
        %1833 = vmatprep.subr.mxu0 0.0
        %1834 = vmatpush1.msra.mxu0 0.0
        %1835 = vmatprep.subr.mxu0 0.0
        %1836 = vmatpush1.msra.mxu0 0.0
        %1837 = vmatprep.subr.mxu0 0.0
        %1838 = vmatpush1.msra.mxu0 0.0
        %1839 = vmatprep.subr.mxu0 0.0
        %1840 = vmatpush1.msra.mxu0 0.0
        %1841 = vmatprep.subr.mxu0 0.0
        %1842 = vmatpush1.msra.mxu0 0.0
        %1843 = vmatprep.subr.mxu0 0.0
        %1844 = vmatpush1.msra.mxu0 0.0
        %1845 = vmatprep.subr.mxu0 0.0
        %1846 = vmatpush1.msra.mxu0 0.0
        %1847 = vmatprep.subr.mxu0 0.0
        %1848 = vmatpush1.msra.mxu0 0.0
        %1849 = vmatprep.subr.mxu0 0.0
        %1850 = vmatpush1.msra.mxu0 0.0
        %1851 = vmatprep.subr.mxu0 0.0
        %1852 = vmatpush1.msra.mxu0 0.0
        %1853 = vmatprep.subr.mxu0 0.0
        %1854 = vmatpush1.msra.mxu0 0.0
        %1855 = vmatprep.mubr.f32.mxu0 0.0
        %1856 = vmatmul.mubr.f32.gmra.mrb[0].mxu0 %v1780
        %v1857 = vpop.f32.mrb[0].mxu0
        %v1858 = vadd.f32 0.0, %v1857
        %v1859 = vpop.f32.mrb[0].mxu0
        %1860 = vmatprep.mubr.f32.mxu0 0.0
        %1861 = vmatmul.mubr.f32.gmra.mrb[0].mxu0 %v1783
        %v1862 = vpop.f32.mrb[0].mxu0
        %v1863 = vadd.f32 0.0, %v1862
        %v1864 = vpop.f32.mrb[0].mxu0
        %1865 = vmatprep.mubr.f32.mxu0 0.0
        %1866 = vmatmul.mubr.f32.gmra.mrb[0].mxu0 %v1786
        %v1867 = vpop.f32.mrb[0].mxu0
        %v1868 = vadd.f32 0.0, %v1867
        %v1869 = vpop.f32.mrb[0].mxu0
        %1870 = vmatprep.mubr.f32.mxu0 0.0
        %1871 = vmatmul.mubr.f32.gmra.mrb[0].mxu0 %v1789
        %v1872 = vpop.f32.mrb[0].mxu0
        %v1873 = vadd.f32 0.0, %v1872
        %v1874 = vpop.f32.mrb[0].mxu0
        %1875 = vdwg.mxu0
        %1876 = vst.msk [vmem:[%s293] sm:$0xff] %vm674, %v955
        %1877 = vst.msk [vmem:[%s293 + $0x8] sm:$0xff] %vm674, %v960
        %1878 = vst.msk [vmem:[%s293 + $0x10] sm:$0xff] %vm674, %v965
        %1879 = vst.msk [vmem:[%s293 + $0x18] sm:$0xff] %vm674, %v970
        %1880 = vst.msk [vmem:[%s293 + $0x20] sm:$0xff] %vm674, %v1084
        %1881 = vst.msk [vmem:[%s293 + $0x28] sm:$0xff] %vm674, %v1089
        %1882 = vst.msk [vmem:[%s293 + $0x30] sm:$0xff] %vm674, %v1094
        %1883 = vst.msk [vmem:[%s293 + $0x38] sm:$0xff] %vm674, %v1099
        %1884 = vst.msk [vmem:[%s293 + $0x40] sm:$0xff] %vm674, %v1213
        %1885 = vst.msk [vmem:[%s293 + $0x48] sm:$0xff] %vm674, %v1218
        %1886 = vst.msk [vmem:[%s293 + $0x50] sm:$0xff] %vm674, %v1223
        %1887 = vst.msk [vmem:[%s293 + $0x58] sm:$0xff] %vm674, %v1228
        %1888 = vst.msk [vmem:[%s293 + $0x60] sm:$0xff] %vm674, %v1342
        %1889 = vst.msk [vmem:[%s293 + $0x68] sm:$0xff] %vm674, %v1347
        %1890 = vst.msk [vmem:[%s293 + $0x70] sm:$0xff] %vm674, %v1352
        %1891 = vst.msk [vmem:[%s293 + $0x78] sm:$0xff] %vm674, %v1357
        %1892 = vst.msk [vmem:[%s293 + $0x80] sm:$0xff] %vm674, %v1471
        %1893 = vst.msk [vmem:[%s293 + $0x88] sm:$0xff] %vm674, %v1476
        %1894 = vst.msk [vmem:[%s293 + $0x90] sm:$0xff] %vm674, %v1481
        %1895 = vst.msk [vmem:[%s293 + $0x98] sm:$0xff] %vm674, %v1486
        %1896 = vst.msk [vmem:[%s293 + $0xa0] sm:$0xff] %vm674, %v1600
        %1897 = vst.msk [vmem:[%s293 + $0xa8] sm:$0xff] %vm674, %v1605
        %1898 = vst.msk [vmem:[%s293 + $0xb0] sm:$0xff] %vm674, %v1610
        %1899 = vst.msk [vmem:[%s293 + $0xb8] sm:$0xff] %vm674, %v1615
        %1900 = vst.msk [vmem:[%s293 + $0xc0] sm:$0xff] %vm674, %v1729
        %1901 = vst.msk [vmem:[%s293 + $0xc8] sm:$0xff] %vm674, %v1734
        %1902 = vst.msk [vmem:[%s293 + $0xd0] sm:$0xff] %vm674, %v1739
        %1903 = vst.msk [vmem:[%s293 + $0xd8] sm:$0xff] %vm674, %v1744
        %1904 = vst.msk [vmem:[%s293 + $0xe0] sm:$0xff] %vm674, %v1858
        %1905 = vst.msk [vmem:[%s293 + $0xe8] sm:$0xff] %vm674, %v1863
        %1906 = vst.msk [vmem:[%s293 + $0xf0] sm:$0xff] %vm674, %v1868
        %1907 = vst.msk [vmem:[%s293 + $0xf8] sm:$0xff] %vm674, %v1873
        %s1908 = smul.u32 8, %s20
        %p1909 = scmp.lt.s32.totalorder %s1908, 15
        %s1910 = scalar_select %p1909, %s1908, 15
        %s1911 = smul.addr %s1910, 4
        %s1912 = smul.addr %s1911, 8
        %s1913 = scalar_lea.vmem %s6, %s1912
        // Predicated region
        $region49: #{tpu_custom_call.1} parent=43 // pred_check
          %p1914 = pneg %p174
        $region50: #{tpu_custom_call.1} parent=43 // pred_check_branch
          %1916 = sbr.rel (%p1914) target = $region52
        $region51: #{tpu_custom_call.1} parent=43 // pred_region
          %s1917 = smul.u32 8, %s20
        $region52: #{tpu_custom_call.1} parent=43 // pred_fallthru
          _
      $region44: #{tpu_custom_call.1} parent=5 // pred_fallthru
        _
      %p1918 = scmp.le.s32.totalorder 2, %s15
      // Predicated region
      $region53: #{tpu_custom_call.1} parent=5 // pred_check
        %p1919 = pneg %p1918
      $region54: #{tpu_custom_call.1} parent=5 // pred_check_branch
        %1921 = sbr.rel (%p1919) target = $region56
      $region55: #{tpu_custom_call.1} parent=5 // pred_region
        %s1922 = ssub.s32 %s15, 2
        // Predicated region
        $region57: #{tpu_custom_call.1} parent=55 // pred_check
          %p1923 = pneg %p180
        $region58: #{tpu_custom_call.1} parent=55 // pred_check_branch
          %1925 = sbr.rel (%p1923) target = $region60
        $region59: #{tpu_custom_call.1} parent=55 // pred_region
          %s1926 = smul.u32 8, %s21
          %p1927 = scmp.lt.s32.totalorder %s1926, 15
          %s1928 = scalar_select %p1927, %s1926, 15
          %s1929 = smul.addr %s1928, 4
          %s1930 = smul.addr %s1929, 8
          %s1931 = scalar_lea.vmem %s6, %s1930
        $region60: #{tpu_custom_call.1} parent=55 // pred_fallthru
          _
      $region56: #{tpu_custom_call.1} parent=5 // pred_fallthru
        _
    $region6: #{tpu_custom_call.1} parent=1 // loop_footer
      %s19 = sadd.s32 1, %s15
    $region7: #{tpu_custom_call.1} parent=1 // loop_footer_branch
      %14 = sbr.rel target = $region3
    $region8: #{tpu_custom_call.1} parent=1 // loop_exit
      _
    %1932 = vsyncpa [#allocation3], 1
    %s1933 = scalar_lea.sflag [#allocation3], 1
    %1934 = vsyncpa %s1933, 1

// kernel: tpu_custom_call.1
$region0: #{tpu_custom_call.1}
  #allocation0 [shape = 'u32[]', space=smem, size = 0x4, offset = 0x4, fixed_abs, tag = 'smem constant byte address 0x4 - core index']
  #allocation1 [shape = 'u32[144,128]{1,0:T(1,128)}', space=vmem, size = 0x12000, scoped, tag = 'internal scratch']
  %s0 = inlined_call_operand.vmem [shape: s32[16,1,1], index: 0, kind: input, shape index: {}]
  %s1 = inlined_call_operand.hbm [shape: f32[16,8,32], index: 1, kind: input, shape index: {}]
  %s2 = inlined_call_operand.vmem [shape: f32[32,32], index: 2, kind: input, shape index: {}]
  %s3 = inlined_call_operand.vmem [shape: f32[1,32], index: 3, kind: input, shape index: {}]
  %s4 = inlined_call_operand.vmem [shape: f32[32,4], index: 4, kind: input, shape index: {}]
  %s5 = inlined_call_operand.vmem [shape: f32[1,4], index: 5, kind: input, shape index: {}]
  %s6 = inlined_call_operand.vmem [shape: f32[16,32,4], index: 6, kind: output, shape index: {}]
  %s7 = sld [smem:[#allocation0]]
  $region61: #{tpu_custom_call.1} parent=0
    _
  %s9 = ssub.s32 1, %s7
  %s10 = scalar_select 0, %s9, %s7
  $region1: #{tpu_custom_call.1} parent=0
    #allocation2 [shape = 'u8[65536]{0}', space=vmem, size = 0x10000, scoped, tag = 'input window, operand 1']
    #allocation3 [shape = 's32[2]{0}', space=sflag, size = 0x8, scoped, tag = 'scoped memory for tpu_custom_call.1']
    %11 = vsyncpa [#allocation3], 0
    %s12 = scalar_lea.sflag [#allocation3], 1
    %13 = vsyncpa %s12, 0
    loop: start=0, step=1, limit=4
    $region2: #{tpu_custom_call.1} parent=1 // loop_pre_header
      _
    $region3: #{tpu_custom_call.1} parent=1 // loop_header
      %s15 = sphi 0, %s19
      %p16 = scmp.ge.s32.totalorder %s15, 4
      %s25 = sphi 0, %s27
      %s28 = sphi 0, %s25
      %s29 = sphi 0, %s28
      %s45 = sphi 0, %s29
      %s51 = sphi 0, %s53
      %s54 = sphi 0, %s51
      %s55 = sphi 0, %s54
      %s71 = sphi 0, %s55
      %s75 = sphi 0, %s75
      %s77 = sphi 0, %s75
      %s78 = sphi 0, %s77
      %s92 = sphi 0, %s78
      %s96 = sphi 0, %s96
      %s98 = sphi 0, %s96
      %s99 = sphi 0, %s98
      %s113 = sphi 0, %s99
      %s117 = sphi 0, %s117
      %s119 = sphi 0, %s117
      %s120 = sphi 0, %s119
      %s134 = sphi 0, %s120
      %s138 = sphi 0, %s138
      %s140 = sphi 0, %s138
      %s141 = sphi 0, %s140
      %s155 = sphi 0, %s141
      %s161 = sphi 0, %s163
      %s164 = sphi 0, %s161
      %s165 = sphi 0, %s164
      %s181 = sphi 0, %s165
    $region4: #{tpu_custom_call.1} parent=1 // loop_header_branch
      %18 = sbr.rel (%p16) target = $region8
    $region5: #{tpu_custom_call.1} parent=1 // loop_body
      %s20 = ssub.s32 %s15, 1
      %s21 = ssub.s32 %s15, 2
      %s22 = sadd.s32 %s15, 1
      %s23 = ssub.s32 %s15, %s22
      %p24 = scmp.eq.s32.totalorder %s23, 0
      %s26 = sadd.s32 %s25, 1
      %s27 = scalar_select %p24, %s25, %s26
      %p30 = pneg %p24
      %p31 = scmp.eq.s32.totalorder %s15, 1
      %p32 = por %p30, %p31
      %p33 = scmp.ne.s32.totalorder %s25, %s28
      %p34 = scmp.eq.s32.totalorder %s15, 0
      %p35 = por %p33, %p34
      %p36 = scmp.ne.s32.totalorder %s25, %s28
      %p37 = scmp.eq.s32.totalorder %s20, 1
      %p38 = por %p36, %p37
      %p39 = scmp.ne.s32.totalorder %s28, %s29
      %p40 = scmp.eq.s32.totalorder %s20, 0
      %p41 = por %p39, %p40
      %p42 = scmp.ne.s32.totalorder %s28, %s29
      %p43 = scmp.eq.s32.totalorder %s21, 1
      %p44 = por %p42, %p43
      %p46 = scmp.ne.s32.totalorder %s29, %s45
      %p47 = scmp.eq.s32.totalorder %s21, 0
      %p48 = por %p46, %p47
      %s49 = ssub.s32 %s15, %s22
      %p50 = scmp.eq.s32.totalorder %s49, 0
      %s52 = sadd.s32 %s51, 1
      %s53 = scalar_select %p50, %s51, %s52
      %p56 = pneg %p50
      %p57 = scmp.eq.s32.totalorder %s15, 1
      %p58 = por %p56, %p57
      %p59 = scmp.ne.s32.totalorder %s51, %s54
      %p60 = scmp.eq.s32.totalorder %s15, 0
      %p61 = por %p59, %p60
      %p62 = scmp.ne.s32.totalorder %s51, %s54
      %p63 = scmp.eq.s32.totalorder %s20, 1
      %p64 = por %p62, %p63
      %p65 = scmp.ne.s32.totalorder %s54, %s55
      %p66 = scmp.eq.s32.totalorder %s20, 0
      %p67 = por %p65, %p66
      %p68 = scmp.ne.s32.totalorder %s54, %s55
      %p69 = scmp.eq.s32.totalorder %s21, 1
      %p70 = por %p68, %p69
      %p72 = scmp.ne.s32.totalorder %s55, %s71
      %p73 = scmp.eq.s32.totalorder %s21, 0
      %p74 = por %p72, %p73
      %s76 = sadd.s32 %s75, 1
      %p79 = scmp.eq.s32.totalorder %s15, 1
      %p80 = scmp.ne.s32.totalorder %s75, %s77
      %p81 = scmp.eq.s32.totalorder %s15, 0
      %p82 = por %p80, %p81
      %p83 = scmp.ne.s32.totalorder %s75, %s77
      %p84 = scmp.eq.s32.totalorder %s20, 1
      %p85 = por %p83, %p84
      %p86 = scmp.ne.s32.totalorder %s77, %s78
      %p87 = scmp.eq.s32.totalorder %s20, 0
      %p88 = por %p86, %p87
      %p89 = scmp.ne.s32.totalorder %s77, %s78
      %p90 = scmp.eq.s32.totalorder %s21, 1
      %p91 = por %p89, %p90
      %p93 = scmp.ne.s32.totalorder %s78, %s92
      %p94 = scmp.eq.s32.totalorder %s21, 0
      %p95 = por %p93, %p94
      %s97 = sadd.s32 %s96, 1
      %p100 = scmp.eq.s32.totalorder %s15, 1
      %p101 = scmp.ne.s32.totalorder %s96, %s98
      %p102 = scmp.eq.s32.totalorder %s15, 0
      %p103 = por %p101, %p102
      %p104 = scmp.ne.s32.totalorder %s96, %s98
      %p105 = scmp.eq.s32.totalorder %s20, 1
      %p106 = por %p104, %p105
      %p107 = scmp.ne.s32.totalorder %s98, %s99
      %p108 = scmp.eq.s32.totalorder %s20, 0
      %p109 = por %p107, %p108
      %p110 = scmp.ne.s32.totalorder %s98, %s99
      %p111 = scmp.eq.s32.totalorder %s21, 1
      %p112 = por %p110, %p111
      %p114 = scmp.ne.s32.totalorder %s99, %s113
      %p115 = scmp.eq.s32.totalorder %s21, 0
      %p116 = por %p114, %p115
      %s118 = sadd.s32 %s117, 1
      %p121 = scmp.eq.s32.totalorder %s15, 1
      %p122 = scmp.ne.s32.totalorder %s117, %s119
      %p123 = scmp.eq.s32.totalorder %s15, 0
      %p124 = por %p122, %p123
      %p125 = scmp.ne.s32.totalorder %s117, %s119
      %p126 = scmp.eq.s32.totalorder %s20, 1
      %p127 = por %p125, %p126
      %p128 = scmp.ne.s32.totalorder %s119, %s120
      %p129 = scmp.eq.s32.totalorder %s20, 0
      %p130 = por %p128, %p129
      %p131 = scmp.ne.s32.totalorder %s119, %s120
      %p132 = scmp.eq.s32.totalorder %s21, 1
      %p133 = por %p131, %p132
      %p135 = scmp.ne.s32.totalorder %s120, %s134
      %p136 = scmp.eq.s32.totalorder %s21, 0
      %p137 = por %p135, %p136
      %s139 = sadd.s32 %s138, 1
      %p142 = scmp.eq.s32.totalorder %s15, 1
      %p143 = scmp.ne.s32.totalorder %s138, %s140
      %p144 = scmp.eq.s32.totalorder %s15, 0
      %p145 = por %p143, %p144
      %p146 = scmp.ne.s32.totalorder %s138, %s140
      %p147 = scmp.eq.s32.totalorder %s20, 1
      %p148 = por %p146, %p147
      %p149 = scmp.ne.s32.totalorder %s140, %s141
      %p150 = scmp.eq.s32.totalorder %s20, 0
      %p151 = por %p149, %p150
      %p152 = scmp.ne.s32.totalorder %s140, %s141
      %p153 = scmp.eq.s32.totalorder %s21, 1
      %p154 = por %p152, %p153
      %p156 = scmp.ne.s32.totalorder %s141, %s155
      %p157 = scmp.eq.s32.totalorder %s21, 0
      %p158 = por %p156, %p157
      %s159 = ssub.s32 %s15, %s22
      %p160 = scmp.eq.s32.totalorder %s159, 0
      %s162 = sadd.s32 %s161, 1
      %s163 = scalar_select %p160, %s161, %s162
      %p166 = pneg %p160
      %p167 = scmp.eq.s32.totalorder %s15, 1
      %p168 = por %p166, %p167
      %p169 = scmp.ne.s32.totalorder %s161, %s164
      %p170 = scmp.eq.s32.totalorder %s15, 0
      %p171 = por %p169, %p170
      %p172 = scmp.ne.s32.totalorder %s161, %s164
      %p173 = scmp.eq.s32.totalorder %s20, 1
      %p174 = por %p172, %p173
      %p175 = scmp.ne.s32.totalorder %s164, %s165
      %p176 = scmp.eq.s32.totalorder %s20, 0
      %p177 = por %p175, %p176
      %p178 = scmp.ne.s32.totalorder %s164, %s165
      %p179 = scmp.eq.s32.totalorder %s21, 1
      %p180 = por %p178, %p179
      %p182 = scmp.ne.s32.totalorder %s165, %s181
      %p183 = scmp.eq.s32.totalorder %s21, 0
      %p184 = por %p182, %p183
      %p185 = scmp.le.s32.totalorder 1, %s15
      %p186 = scmp.lt.s32.totalorder %s15, 3
      %p187 = pnand %p185, %p186
      %p188 = pneg %p187
      // Predicated region
      $region9: #{tpu_custom_call.1} parent=5 // pred_check
        _
      $region10: #{tpu_custom_call.1} parent=5 // pred_check_branch
        %190 = sbr.rel (%p187) target = $region12
      $region11: #{tpu_custom_call.1} parent=5 // pred_region
        %s191 = ssub.s32 %s15, 1
        // Predicated region
        $region13: #{tpu_custom_call.1} parent=11 // pred_check
          %p192 = pneg %p88
        $region14: #{tpu_custom_call.1} parent=11 // pred_check_branch
          %194 = sbr.rel (%p192) target = $region16
        $region15: #{tpu_custom_call.1} parent=11 // pred_region
          _
        $region16: #{tpu_custom_call.1} parent=11 // pred_fallthru
          _
        // Predicated region
        $region17: #{tpu_custom_call.1} parent=11 // pred_check
          %p195 = pneg %p109
        $region18: #{tpu_custom_call.1} parent=11 // pred_check_branch
          %197 = sbr.rel (%p195) target = $region20
        $region19: #{tpu_custom_call.1} parent=11 // pred_region
          _
        $region20: #{tpu_custom_call.1} parent=11 // pred_fallthru
          _
        // Predicated region
        $region21: #{tpu_custom_call.1} parent=11 // pred_check
          %p198 = pneg %p130
        $region22: #{tpu_custom_call.1} parent=11 // pred_check_branch
          %200 = sbr.rel (%p198) target = $region24
        $region23: #{tpu_custom_call.1} parent=11 // pred_region
          _
        $region24: #{tpu_custom_call.1} parent=11 // pred_fallthru
          _
        // Predicated region
        $region25: #{tpu_custom_call.1} parent=11 // pred_check
          %p201 = pneg %p151
        $region26: #{tpu_custom_call.1} parent=11 // pred_check_branch
          %203 = sbr.rel (%p201) target = $region28
        $region27: #{tpu_custom_call.1} parent=11 // pred_region
          _
        $region28: #{tpu_custom_call.1} parent=11 // pred_fallthru
          _
      $region12: #{tpu_custom_call.1} parent=5 // pred_fallthru
        _
      %p204 = scmp.lt.s32.totalorder %s15, 2
      // Predicated region
      $region29: #{tpu_custom_call.1} parent=5 // pred_check
        %p205 = pneg %p204
      $region30: #{tpu_custom_call.1} parent=5 // pred_check_branch
        %207 = sbr.rel (%p205) target = $region32
      $region31: #{tpu_custom_call.1} parent=5 // pred_region
        // Predicated region
        $region33: #{tpu_custom_call.1} parent=31 // pred_check
          %p208 = pneg %p35
        $region34: #{tpu_custom_call.1} parent=31 // pred_check_branch
          %210 = sbr.rel (%p208) target = $region36
        $region35: #{tpu_custom_call.1} parent=31 // pred_region
          %s211 = smul.u32 8, %s15
          %p212 = scmp.lt.s32.totalorder %s211, 15
          %s213 = scalar_select %p212, %s211, 15
          %s214 = scalar_lea.vmem %s0, %s213
          %s215 = smul.u32 8, %s15
        $region36: #{tpu_custom_call.1} parent=31 // pred_fallthru
          _
        // Predicated region
        $region37: #{tpu_custom_call.1} parent=31 // pred_check
          %p216 = pneg %p61
        $region38: #{tpu_custom_call.1} parent=31 // pred_check_branch
          %218 = sbr.rel (%p216) target = $region40
        $region39: #{tpu_custom_call.1} parent=31 // pred_region
          %s219 = sand.u32 %s51, 1
          %s220 = scalar_lea.sflag [#allocation3], %s219
          %s221 = sand.u32 %s51, 1
          %s222 = smul.addr %s221, 64
          %s223 = scalar_lea.vmem [#allocation2], %s222
          %s224 = smul.u32 8, %s15
          %s226 = ssub.s32 1024, 1024
          %227 = vsyncadd %s220, %s226
          %s228 = smul.addr %s224, 128
          %s229 = scalar_lea.hbm %s1, %s228
          %s230 = sshll.u32 %s223, 4
          %s231 = int_to_ptr.vmem [resolvable:$true] %s230
          %236 = dma.hbm_to_vmem [thread:$0]  %s229, 1024, %s231, %s220, 128, 128, 8
        $region40: #{tpu_custom_call.1} parent=31 // pred_fallthru
          _
      $region32: #{tpu_custom_call.1} parent=5 // pred_fallthru
        _
      %p237 = scmp.le.s32.totalorder 1, %s15
      %p238 = scmp.lt.s32.totalorder %s15, 3
      %p239 = pnand %p237, %p238
      %p240 = pneg %p239
      // Predicated region
      $region41: #{tpu_custom_call.1} parent=5 // pred_check
        _
      $region42: #{tpu_custom_call.1} parent=5 // pred_check_branch
        %242 = sbr.rel (%p239) target = $region44
      $region43: #{tpu_custom_call.1} parent=5 // pred_region
        %s243 = ssub.s32 %s15, 1
        %s244 = sand.u32 %s54, 1
        %s245 = scalar_lea.sflag [#allocation3], %s244
        %s246 = sand.u32 %s54, 1
        %s247 = smul.addr %s246, 64
        %s248 = scalar_lea.vmem [#allocation2], %s247
        // Predicated region
        $region45: #{tpu_custom_call.1} parent=43 // pred_check
          %p249 = pneg %p67
        $region46: #{tpu_custom_call.1} parent=43 // pred_check_branch
          %251 = sbr.rel (%p249) target = $region48
        $region47: #{tpu_custom_call.1} parent=43 // pred_region
          %252 = dma.done %s245, 1024
        $region48: #{tpu_custom_call.1} parent=43 // pred_fallthru
          _
        %s253 = smul.u32 8, %s20
        %p254 = scmp.lt.s32.totalorder %s253, 15
        %s255 = scalar_select %p254, %s253, 15
        %s256 = scalar_lea.vmem %s0, %s255
        %p257 = pneg %p41
        %p258 = pneg %p38
        %s259 = sand.u32 %s54, 1
        %s260 = scalar_lea.sflag [#allocation3], %s259
        %s261 = sand.u32 %s54, 1
        %s262 = smul.addr %s261, 64
        %s263 = scalar_lea.vmem [#allocation2], %s262
        %p264 = pneg %p67
        %p265 = pneg %p64
        %p266 = pneg %p88
        %p267 = pneg %p85
        %p268 = pneg %p109
        %p269 = pneg %p106
        %p270 = pneg %p130
        %p271 = pneg %p127
        %p272 = pneg %p151
        %p273 = pneg %p148
        %p274 = pneg %p177
        %p275 = pneg %p174
        %s276 = smul.u32 8, %s20
        %p277 = scmp.lt.s32.totalorder %s276, 15
        %s278 = scalar_select %p277, %s276, 15
        %s279 = smul.addr %s278, 4
        %s280 = smul.addr %s279, 8
        %s281 = scalar_lea.vmem %s6, %s280
        %s282 = smul.u32 8, %s20
        %p283 = scmp.lt.s32.totalorder %s282, 15
        %s284 = scalar_select %p283, %s282, 15
        %s285 = scalar_lea.vmem %s0, %s284
        %s286 = smul.u32 8, %s20
        %s287 = smul.u32 8, %s20
        %s288 = smul.u32 8, %s20
        %p289 = scmp.lt.s32.totalorder %s288, 15
        %s290 = scalar_select %p289, %s288, 15
        %s291 = smul.addr %s290, 4
        %s292 = smul.addr %s291, 8
        %s293 = scalar_lea.vmem %s6, %s292
        %s294 = smul.u32 8, %s20
        %v295 = vld [vmem:[%s248] sm:$0xff]
        %v296 = vld [vmem:[%s248 + $0x8] sm:$0xff]
        %v297 = vld [vmem:[%s248 + $0x10] sm:$0xff]
        %v298 = vld [vmem:[%s248 + $0x18] sm:$0xff]
        %v299 = vld [vmem:[%s248 + $0x20] sm:$0xff]
        %v300 = vld [vmem:[%s248 + $0x28] sm:$0xff]
        %v301 = vld [vmem:[%s248 + $0x30] sm:$0xff]
        %v302 = vld [vmem:[%s248 + $0x38] sm:$0xff]
        %v303 = vld [vmem:[%s2] sm:$0xff]
        %v304 = vld [vmem:[%s2 + $0x8] sm:$0xff]
        %v305 = vld [vmem:[%s2 + $0x10] sm:$0xff]
        %v306 = vld [vmem:[%s2 + $0x18] sm:$0xff]
        %v307 = vld [vmem:[%s3] sm:$0x1]
        %v309 = vlaneseq
        %v310 = vshrl.u32 %v309, 7
        %v311 = vsub.s32 0, %v310
        %v312 = vrot.slane %v307, %v311
        %vm314 = vcmask 261120
        %v316 = vsel %vm314, %v295, 0
        %v319 = vsel %vm314, %v296, 0
        %v322 = vsel %vm314, %v297, 0
        %v325 = vsel %vm314, %v298, 0
        %v328 = vsel %vm314, %v299, 0
        %v331 = vsel %vm314, %v300, 0
        %v334 = vsel %vm314, %v301, 0
        %v337 = vsel %vm314, %v302, 0
        %339 = vmatprep.subr.mxu0 0.0
        %340 = vmatpush1.msra.mxu0 %v303
        %341 = vmatprep.subr.mxu0 0.0
        %342 = vmatpush1.msra.mxu0 %v304
        %343 = vmatprep.subr.mxu0 0.0
        %344 = vmatpush1.msra.mxu0 %v305
        %345 = vmatprep.subr.mxu0 0.0
        %346 = vmatpush1.msra.mxu0 %v306
        %347 = vmatprep.subr.mxu0 0.0
        %348 = vmatpush1.msra.mxu0 0.0
        %349 = vmatprep.subr.mxu0 0.0
        %350 = vmatpush1.msra.mxu0 0.0
        %351 = vmatprep.subr.mxu0 0.0
        %352 = vmatpush1.msra.mxu0 0.0
        %353 = vmatprep.subr.mxu0 0.0
        %354 = vmatpush1.msra.mxu0 0.0
        %355 = vmatprep.subr.mxu0 0.0
        %356 = vmatpush1.msra.mxu0 0.0
        %357 = vmatprep.subr.mxu0 0.0
        %358 = vmatpush1.msra.mxu0 0.0
        %359 = vmatprep.subr.mxu0 0.0
        %360 = vmatpush1.msra.mxu0 0.0
        %361 = vmatprep.subr.mxu0 0.0
        %362 = vmatpush1.msra.mxu0 0.0
        %363 = vmatprep.subr.mxu0 0.0
        %364 = vmatpush1.msra.mxu0 0.0
        %365 = vmatprep.subr.mxu0 0.0
        %366 = vmatpush1.msra.mxu0 0.0
        %367 = vmatprep.subr.mxu0 0.0
        %368 = vmatpush1.msra.mxu0 0.0
        %369 = vmatprep.subr.mxu0 0.0
        %370 = vmatpush1.msra.mxu0 0.0
        %371 = vmatprep.subr.mxu0 0.0
        %372 = vmatpush1.msra.mxu0 0.0
        %373 = vmatprep.subr.mxu0 0.0
        %374 = vmatpush1.msra.mxu0 0.0
        %375 = vmatprep.subr.mxu0 0.0
        %376 = vmatpush1.msra.mxu0 0.0
        %377 = vmatprep.subr.mxu0 0.0
        %378 = vmatpush1.msra.mxu0 0.0
        %379 = vmatprep.subr.mxu0 0.0
        %380 = vmatpush1.msra.mxu0 0.0
        %381 = vmatprep.subr.mxu0 0.0
        %382 = vmatpush1.msra.mxu0 0.0
        %383 = vmatprep.subr.mxu0 0.0
        %384 = vmatpush1.msra.mxu0 0.0
        %385 = vmatprep.subr.mxu0 0.0
        %386 = vmatpush1.msra.mxu0 0.0
        %387 = vmatprep.subr.mxu0 0.0
        %388 = vmatpush1.msra.mxu0 0.0
        %389 = vmatprep.subr.mxu0 0.0
        %390 = vmatpush1.msra.mxu0 0.0
        %391 = vmatprep.subr.mxu0 0.0
        %392 = vmatpush1.msra.mxu0 0.0
        %393 = vmatprep.subr.mxu0 0.0
        %394 = vmatpush1.msra.mxu0 0.0
        %395 = vmatprep.subr.mxu0 0.0
        %396 = vmatpush1.msra.mxu0 0.0
        %397 = vmatprep.subr.mxu0 0.0
        %398 = vmatpush1.msra.mxu0 0.0
        %399 = vmatprep.subr.mxu0 0.0
        %400 = vmatpush1.msra.mxu0 0.0
        %401 = vmatprep.subr.mxu0 0.0
        %402 = vmatpush1.msra.mxu0 0.0
        %403 = vmatprep.mubr.f32.mxu0 0.0
        %404 = vmatmul.mubr.f32.gmra.mrb[0].mxu0 %v316
        %v405 = vpop.f32.mrb[0].mxu0
        %v406 = vadd.f32 %v312, %v405
        %v407 = vpop.f32.mrb[0].mxu0
        %408 = vmatprep.mubr.f32.mxu0 0.0
        %409 = vmatmul.mubr.f32.gmra.mrb[0].mxu0 %v319
        %v410 = vpop.f32.mrb[0].mxu0
        %v411 = vadd.f32 %v312, %v410
        %v412 = vpop.f32.mrb[0].mxu0
        %413 = vmatprep.mubr.f32.mxu0 0.0
        %414 = vmatmul.mubr.f32.gmra.mrb[0].mxu0 %v322
        %v415 = vpop.f32.mrb[0].mxu0
        %v416 = vadd.f32 %v312, %v415
        %v417 = vpop.f32.mrb[0].mxu0
        %418 = vmatprep.mubr.f32.mxu0 0.0
        %419 = vmatmul.mubr.f32.gmra.mrb[0].mxu0 %v325
        %v420 = vpop.f32.mrb[0].mxu0
        %v421 = vadd.f32 %v312, %v420
        %v422 = vpop.f32.mrb[0].mxu0
        %423 = vmatprep.mubr.f32.mxu0 0.0
        %424 = vmatmul.mubr.f32.gmra.mrb[0].mxu0 %v328
        %v425 = vpop.f32.mrb[0].mxu0
        %v426 = vadd.f32 %v312, %v425
        %v427 = vpop.f32.mrb[0].mxu0
        %428 = vmatprep.mubr.f32.mxu0 0.0
        %429 = vmatmul.mubr.f32.gmra.mrb[0].mxu0 %v331
        %v430 = vpop.f32.mrb[0].mxu0
        %v431 = vadd.f32 %v312, %v430
        %v432 = vpop.f32.mrb[0].mxu0
        %433 = vmatprep.mubr.f32.mxu0 0.0
        %434 = vmatmul.mubr.f32.gmra.mrb[0].mxu0 %v334
        %v435 = vpop.f32.mrb[0].mxu0
        %v436 = vadd.f32 %v312, %v435
        %v437 = vpop.f32.mrb[0].mxu0
        %438 = vmatprep.mubr.f32.mxu0 0.0
        %439 = vmatmul.mubr.f32.gmra.mrb[0].mxu0 %v337
        %v440 = vpop.f32.mrb[0].mxu0
        %v441 = vadd.f32 %v312, %v440
        %v442 = vpop.f32.mrb[0].mxu0
        %443 = vdwg.mxu0
        %v444 = vmax.f32 %v406, 0.0
        %v445 = vmax.f32 %v411, 0.0
        %v446 = vmax.f32 %v416, 0.0
        %v447 = vmax.f32 %v421, 0.0
        %v448 = vmax.f32 %v426, 0.0
        %v449 = vmax.f32 %v431, 0.0
        %v450 = vmax.f32 %v436, 0.0
        %v451 = vmax.f32 %v441, 0.0
        %v452 = vld [vmem:[%s4] sm:$0xff]
        %v453 = vld [vmem:[%s4 + $0x8] sm:$0xff]
        %v454 = vld [vmem:[%s4 + $0x10] sm:$0xff]
        %v455 = vld [vmem:[%s4 + $0x18] sm:$0xff]
        %v456 = vld [vmem:[%s5] sm:$0x1]
        %v458 = vlaneseq
        %v459 = vshrl.u32 %v458, 7
        %v460 = vsub.s32 0, %v459
        %v461 = vrot.slane %v456, %v460
        %v464 = vsel %vm314, %v444, 0
        %v467 = vsel %vm314, %v445, 0
        %v470 = vsel %vm314, %v446, 0
        %v473 = vsel %vm314, %v447, 0
        %v476 = vsel %vm314, %v448, 0
        %v479 = vsel %vm314, %v449, 0
        %v482 = vsel %vm314, %v450, 0
        %v485 = vsel %vm314, %v451, 0
        %487 = vmatprep.subr.mxu0 0.0
        %488 = vmatpush1.msra.mxu0 %v452
        %489 = vmatprep.subr.mxu0 0.0
        %490 = vmatpush1.msra.mxu0 %v453
        %491 = vmatprep.subr.mxu0 0.0
        %492 = vmatpush1.msra.mxu0 %v454
        %493 = vmatprep.subr.mxu0 0.0
        %494 = vmatpush1.msra.mxu0 %v455
        %495 = vmatprep.subr.mxu0 0.0
        %496 = vmatpush1.msra.mxu0 0.0
        %497 = vmatprep.subr.mxu0 0.0
        %498 = vmatpush1.msra.mxu0 0.0
        %499 = vmatprep.subr.mxu0 0.0
        %500 = vmatpush1.msra.mxu0 0.0
        %501 = vmatprep.subr.mxu0 0.0
        %502 = vmatpush1.msra.mxu0 0.0
        %503 = vmatprep.subr.mxu0 0.0
        %504 = vmatpush1.msra.mxu0 0.0
        %505 = vmatprep.subr.mxu0 0.0
        %506 = vmatpush1.msra.mxu0 0.0
        %507 = vmatprep.subr.mxu0 0.0
        %508 = vmatpush1.msra.mxu0 0.0
        %509 = vmatprep.subr.mxu0 0.0
        %510 = vmatpush1.msra.mxu0 0.0
        %511 = vmatprep.subr.mxu0 0.0
        %512 = vmatpush1.msra.mxu0 0.0
        %513 = vmatprep.subr.mxu0 0.0
        %514 = vmatpush1.msra.mxu0 0.0
        %515 = vmatprep.subr.mxu0 0.0
        %516 = vmatpush1.msra.mxu0 0.0
        %517 = vmatprep.subr.mxu0 0.0
        %518 = vmatpush1.msra.mxu0 0.0
        %519 = vmatprep.subr.mxu0 0.0
        %520 = vmatpush1.msra.mxu0 0.0
        %521 = vmatprep.subr.mxu0 0.0
        %522 = vmatpush1.msra.mxu0 0.0
        %523 = vmatprep.subr.mxu0 0.0
        %524 = vmatpush1.msra.mxu0 0.0
        %525 = vmatprep.subr.mxu0 0.0
        %526 = vmatpush1.msra.mxu0 0.0
        %527 = vmatprep.subr.mxu0 0.0
        %528 = vmatpush1.msra.mxu0 0.0
        %529 = vmatprep.subr.mxu0 0.0
        %530 = vmatpush1.msra.mxu0 0.0
        %531 = vmatprep.subr.mxu0 0.0
        %532 = vmatpush1.msra.mxu0 0.0
        %533 = vmatprep.subr.mxu0 0.0
        %534 = vmatpush1.msra.mxu0 0.0
        %535 = vmatprep.subr.mxu0 0.0
        %536 = vmatpush1.msra.mxu0 0.0
        %537 = vmatprep.subr.mxu0 0.0
        %538 = vmatpush1.msra.mxu0 0.0
        %539 = vmatprep.subr.mxu0 0.0
        %540 = vmatpush1.msra.mxu0 0.0
        %541 = vmatprep.subr.mxu0 0.0
        %542 = vmatpush1.msra.mxu0 0.0
        %543 = vmatprep.subr.mxu0 0.0
        %544 = vmatpush1.msra.mxu0 0.0
        %545 = vmatprep.subr.mxu0 0.0
        %546 = vmatpush1.msra.mxu0 0.0
        %547 = vmatprep.subr.mxu0 0.0
        %548 = vmatpush1.msra.mxu0 0.0
        %549 = vmatprep.subr.mxu0 0.0
        %550 = vmatpush1.msra.mxu0 0.0
        %551 = vmatprep.mubr.f32.mxu0 0.0
        %552 = vmatmul.mubr.f32.gmra.mrb[0].mxu0 %v464
        %v553 = vpop.f32.mrb[0].mxu0
        %v554 = vadd.f32 %v461, %v553
        %v555 = vpop.f32.mrb[0].mxu0
        %556 = vmatprep.mubr.f32.mxu0 0.0
        %557 = vmatmul.mubr.f32.gmra.mrb[0].mxu0 %v467
        %v558 = vpop.f32.mrb[0].mxu0
        %v559 = vadd.f32 %v461, %v558
        %v560 = vpop.f32.mrb[0].mxu0
        %561 = vmatprep.mubr.f32.mxu0 0.0
        %562 = vmatmul.mubr.f32.gmra.mrb[0].mxu0 %v470
        %v563 = vpop.f32.mrb[0].mxu0
        %v564 = vadd.f32 %v461, %v563
        %v565 = vpop.f32.mrb[0].mxu0
        %566 = vmatprep.mubr.f32.mxu0 0.0
        %567 = vmatmul.mubr.f32.gmra.mrb[0].mxu0 %v473
        %v568 = vpop.f32.mrb[0].mxu0
        %v569 = vadd.f32 %v461, %v568
        %v570 = vpop.f32.mrb[0].mxu0
        %571 = vmatprep.mubr.f32.mxu0 0.0
        %572 = vmatmul.mubr.f32.gmra.mrb[0].mxu0 %v476
        %v573 = vpop.f32.mrb[0].mxu0
        %v574 = vadd.f32 %v461, %v573
        %v575 = vpop.f32.mrb[0].mxu0
        %576 = vmatprep.mubr.f32.mxu0 0.0
        %577 = vmatmul.mubr.f32.gmra.mrb[0].mxu0 %v479
        %v578 = vpop.f32.mrb[0].mxu0
        %v579 = vadd.f32 %v461, %v578
        %v580 = vpop.f32.mrb[0].mxu0
        %581 = vmatprep.mubr.f32.mxu0 0.0
        %582 = vmatmul.mubr.f32.gmra.mrb[0].mxu0 %v482
        %v583 = vpop.f32.mrb[0].mxu0
        %v584 = vadd.f32 %v461, %v583
        %v585 = vpop.f32.mrb[0].mxu0
        %586 = vmatprep.mubr.f32.mxu0 0.0
        %587 = vmatmul.mubr.f32.gmra.mrb[0].mxu0 %v485
        %v588 = vpop.f32.mrb[0].mxu0
        %v589 = vadd.f32 %v461, %v588
        %v590 = vpop.f32.mrb[0].mxu0
        %591 = vdwg.mxu0
        %v592 = vld [vmem:[%s285] sm:$0x1]
        %v593 = vld [vmem:[%s285 + $0x1] sm:$0x1]
        %v594 = vld [vmem:[%s285 + $0x2] sm:$0x1]
        %v595 = vld [vmem:[%s285 + $0x3] sm:$0x1]
        %v596 = vld [vmem:[%s285 + $0x4] sm:$0x1]
        %v597 = vld [vmem:[%s285 + $0x5] sm:$0x1]
        %v598 = vld [vmem:[%s285 + $0x6] sm:$0x1]
        %v599 = vld [vmem:[%s285 + $0x7] sm:$0x1]
        %v600 = vlaneseq
        %v601 = vshrl.u32 %v600, 7
        %v602 = vlaneseq
        %v603 = vshrl.u32 %v602, 7
        %v604 = vsub.s32 0, %v603
        %v605 = vrot.slane %v592, %v604
        %v606 = vlaneseq
        %v607 = vshrl.u32 %v606, 7
        %v608 = vsub.s32 0, %v607
        %v609 = vrot.slane %v593, %v608
        %v610 = vlaneseq
        %v611 = vshrl.u32 %v610, 7
        %v612 = vsub.s32 0, %v611
        %v613 = vrot.slane %v594, %v612
        %v614 = vlaneseq
        %v615 = vshrl.u32 %v614, 7
        %v616 = vsub.s32 0, %v615
        %v617 = vrot.slane %v595, %v616
        %v618 = vlaneseq
        %v619 = vshrl.u32 %v618, 7
        %v620 = vsub.s32 0, %v619
        %v621 = vrot.slane %v596, %v620
        %v622 = vlaneseq
        %v623 = vshrl.u32 %v622, 7
        %v624 = vsub.s32 0, %v623
        %v625 = vrot.slane %v597, %v624
        %v626 = vlaneseq
        %v627 = vshrl.u32 %v626, 7
        %v628 = vsub.s32 0, %v627
        %v629 = vrot.slane %v598, %v628
        %v630 = vlaneseq
        %v631 = vshrl.u32 %v630, 7
        %v632 = vsub.s32 0, %v631
        %v633 = vrot.slane %v599, %v632
        %634 = vset.pattern.permute.xlu0 0
        %635 = vperm.xlu0 %634, %v605
        %v636 = vpop.permute.xlu0 %635
        %637 = vset.pattern.permute.xlu0 0
        %638 = vperm.xlu0 %637, %v609
        %v639 = vpop.permute.xlu0 %638
        %640 = vset.pattern.permute.xlu0 0
        %641 = vperm.xlu0 %640, %v613
        %v642 = vpop.permute.xlu0 %641
        %643 = vset.pattern.permute.xlu0 0
        %644 = vperm.xlu0 %643, %v617
        %v645 = vpop.permute.xlu0 %644
        %646 = vset.pattern.permute.xlu0 0
        %647 = vperm.xlu0 %646, %v621
        %v648 = vpop.permute.xlu0 %647
        %649 = vset.pattern.permute.xlu0 0
        %650 = vperm.xlu0 %649, %v625
        %v651 = vpop.permute.xlu0 %650
        %652 = vset.pattern.permute.xlu0 0
        %653 = vperm.xlu0 %652, %v629
        %v654 = vpop.permute.xlu0 %653
        %655 = vset.pattern.permute.xlu0 0
        %656 = vperm.xlu0 %655, %v633
        %v657 = vpop.permute.xlu0 %656
        %vm658 = vcmp.lt.s32.totalorder %v601, %v636
        %vm659 = vcmp.lt.s32.totalorder %v601, %v639
        %vm660 = vcmp.lt.s32.totalorder %v601, %v642
        %vm661 = vcmp.lt.s32.totalorder %v601, %v645
        %vm662 = vcmp.lt.s32.totalorder %v601, %v648
        %vm663 = vcmp.lt.s32.totalorder %v601, %v651
        %vm664 = vcmp.lt.s32.totalorder %v601, %v654
        %vm665 = vcmp.lt.s32.totalorder %v601, %v657
        %v666 = vsel %vm658, %v554, -1e+30
        %v667 = vsel %vm659, %v559, -1e+30
        %v668 = vsel %vm660, %v564, -1e+30
        %v669 = vsel %vm661, %v569, -1e+30
        %v670 = vsel %vm662, %v574, -1e+30
        %v671 = vsel %vm663, %v579, -1e+30
        %v672 = vsel %vm664, %v584, -1e+30
        %v673 = vsel %vm665, %v589, -1e+30
        %vm674 = vcmask 31744
        %v675 = vsel %vm674, %v666, -inf
        %v676 = vrot.slane %v675, 4
        %v677 = vmax.f32 %v675, %v676
        %v678 = vrot.slane %v677, 2
        %v679 = vmax.f32 %v677, %v678
        %v680 = vrot.slane %v679, 1
        %v681 = vmax.f32 %v679, %v680
        %v682 = vsel %vm674, %v667, -inf
        %v683 = vrot.slane %v682, 4
        %v684 = vmax.f32 %v682, %v683
        %v685 = vrot.slane %v684, 2
        %v686 = vmax.f32 %v684, %v685
        %v687 = vrot.slane %v686, 1
        %v688 = vmax.f32 %v686, %v687
        %v689 = vsel %vm674, %v668, -inf
        %v690 = vrot.slane %v689, 4
        %v691 = vmax.f32 %v689, %v690
        %v692 = vrot.slane %v691, 2
        %v693 = vmax.f32 %v691, %v692
        %v694 = vrot.slane %v693, 1
        %v695 = vmax.f32 %v693, %v694
        %v696 = vsel %vm674, %v669, -inf
        %v697 = vrot.slane %v696, 4
        %v698 = vmax.f32 %v696, %v697
        %v699 = vrot.slane %v698, 2
        %v700 = vmax.f32 %v698, %v699
        %v701 = vrot.slane %v700, 1
        %v702 = vmax.f32 %v700, %v701
        %v703 = vsel %vm674, %v670, -inf
        %v704 = vrot.slane %v703, 4
        %v705 = vmax.f32 %v703, %v704
        %v706 = vrot.slane %v705, 2
        %v707 = vmax.f32 %v705, %v706
        %v708 = vrot.slane %v707, 1
        %v709 = vmax.f32 %v707, %v708
        %v710 = vsel %vm674, %v671, -inf
        %v711 = vrot.slane %v710, 4
        %v712 = vmax.f32 %v710, %v711
        %v713 = vrot.slane %v712, 2
        %v714 = vmax.f32 %v712, %v713
        %v715 = vrot.slane %v714, 1
        %v716 = vmax.f32 %v714, %v715
        %v717 = vsel %vm674, %v672, -inf
        %v718 = vrot.slane %v717, 4
        %v719 = vmax.f32 %v717, %v718
        %v720 = vrot.slane %v719, 2
        %v721 = vmax.f32 %v719, %v720
        %v722 = vrot.slane %v721, 1
        %v723 = vmax.f32 %v721, %v722
        %v724 = vsel %vm674, %v673, -inf
        %v725 = vrot.slane %v724, 4
        %v726 = vmax.f32 %v724, %v725
        %v727 = vrot.slane %v726, 2
        %v728 = vmax.f32 %v726, %v727
        %v729 = vrot.slane %v728, 1
        %v730 = vmax.f32 %v728, %v729
        %v731 = vsub.f32 %v666, %v681
        %v732 = vsub.f32 %v667, %v688
        %v733 = vsub.f32 %v668, %v695
        %v734 = vsub.f32 %v669, %v702
        %v735 = vsub.f32 %v670, %v709
        %v736 = vsub.f32 %v671, %v716
        %v737 = vsub.f32 %v672, %v723
        %v738 = vsub.f32 %v673, %v730
        %v739 = vmul.f32 %v731, 1.442695
        %v740 = vpow.pop %v739
        %v741 = vmul.f32 %v732, 1.442695
        %v742 = vpow.pop %v741
        %v743 = vmul.f32 %v733, 1.442695
        %v744 = vpow.pop %v743
        %v745 = vmul.f32 %v734, 1.442695
        %v746 = vpow.pop %v745
        %v747 = vmul.f32 %v735, 1.442695
        %v748 = vpow.pop %v747
        %v749 = vmul.f32 %v736, 1.442695
        %v750 = vpow.pop %v749
        %v751 = vmul.f32 %v737, 1.442695
        %v752 = vpow.pop %v751
        %v753 = vmul.f32 %v738, 1.442695
        %v754 = vpow.pop %v753
        %v755 = vsel %vm658, %v740, 0.0
        %v756 = vsel %vm659, %v742, 0.0
        %v757 = vsel %vm660, %v744, 0.0
        %v758 = vsel %vm661, %v746, 0.0
        %v759 = vsel %vm662, %v748, 0.0
        %v760 = vsel %vm663, %v750, 0.0
        %v761 = vsel %vm664, %v752, 0.0
        %v762 = vsel %vm665, %v754, 0.0
        %v763 = vsel %vm674, %v755, 0.0
        %v764 = vrot.slane %v763, 4
        %v765 = vadd.f32 %v763, %v764
        %v766 = vrot.slane %v765, 2
        %v767 = vadd.f32 %v765, %v766
        %v768 = vrot.slane %v767, 1
        %v769 = vadd.f32 %v767, %v768
        %v770 = vsel %vm674, %v756, 0.0
        %v771 = vrot.slane %v770, 4
        %v772 = vadd.f32 %v770, %v771
        %v773 = vrot.slane %v772, 2
        %v774 = vadd.f32 %v772, %v773
        %v775 = vrot.slane %v774, 1
        %v776 = vadd.f32 %v774, %v775
        %v777 = vsel %vm674, %v757, 0.0
        %v778 = vrot.slane %v777, 4
        %v779 = vadd.f32 %v777, %v778
        %v780 = vrot.slane %v779, 2
        %v781 = vadd.f32 %v779, %v780
        %v782 = vrot.slane %v781, 1
        %v783 = vadd.f32 %v781, %v782
        %v784 = vsel %vm674, %v758, 0.0
        %v785 = vrot.slane %v784, 4
        %v786 = vadd.f32 %v784, %v785
        %v787 = vrot.slane %v786, 2
        %v788 = vadd.f32 %v786, %v787
        %v789 = vrot.slane %v788, 1
        %v790 = vadd.f32 %v788, %v789
        %v791 = vsel %vm674, %v759, 0.0
        %v792 = vrot.slane %v791, 4
        %v793 = vadd.f32 %v791, %v792
        %v794 = vrot.slane %v793, 2
        %v795 = vadd.f32 %v793, %v794
        %v796 = vrot.slane %v795, 1
        %v797 = vadd.f32 %v795, %v796
        %v798 = vsel %vm674, %v760, 0.0
        %v799 = vrot.slane %v798, 4
        %v800 = vadd.f32 %v798, %v799
        %v801 = vrot.slane %v800, 2
        %v802 = vadd.f32 %v800, %v801
        %v803 = vrot.slane %v802, 1
        %v804 = vadd.f32 %v802, %v803
        %v805 = vsel %vm674, %v761, 0.0
        %v806 = vrot.slane %v805, 4
        %v807 = vadd.f32 %v805, %v806
        %v808 = vrot.slane %v807, 2
        %v809 = vadd.f32 %v807, %v808
        %v810 = vrot.slane %v809, 1
        %v811 = vadd.f32 %v809, %v810
        %v812 = vsel %vm674, %v762, 0.0
        %v813 = vrot.slane %v812, 4
        %v814 = vadd.f32 %v812, %v813
        %v815 = vrot.slane %v814, 2
        %v816 = vadd.f32 %v814, %v815
        %v817 = vrot.slane %v816, 1
        %v818 = vadd.f32 %v816, %v817
        %v819 = vmax.f32 %v769, 1e-30
        %v820 = vmax.f32 %v776, 1e-30
        %v821 = vmax.f32 %v783, 1e-30
        %v822 = vmax.f32 %v790, 1e-30
        %v823 = vmax.f32 %v797, 1e-30
        %v824 = vmax.f32 %v804, 1e-30
        %v825 = vmax.f32 %v811, 1e-30
        %v826 = vmax.f32 %v818, 1e-30
        %v827 = vrcp.pop %v819
        %v828 = vrcp.pop %v820
        %v829 = vrcp.pop %v821
        %v830 = vrcp.pop %v822
        %v831 = vrcp.pop %v823
        %v832 = vrcp.pop %v824
        %v833 = vrcp.pop %v825
        %v834 = vrcp.pop %v826
        %v835 = vmul.f32 %v755, %v827
        %v836 = vmul.f32 %v756, %v828
        %v837 = vmul.f32 %v757, %v829
        %v838 = vmul.f32 %v758, %v830
        %v839 = vmul.f32 %v759, %v831
        %v840 = vmul.f32 %v760, %v832
        %v841 = vmul.f32 %v761, %v833
        %v842 = vmul.f32 %v762, %v834
        %843 = vxpose.xlu0.b32.start [1/16] %v295, 128
        %844 = vxpose.xlu0.b32.cont [2/16] 0.0, 128
        %845 = vxpose.xlu0.b32.cont [3/16] 0.0, 128
        %846 = vxpose.xlu0.b32.cont [4/16] 0.0, 128
        %847 = vxpose.xlu0.b32.cont [5/16] 0.0, 128
        %848 = vxpose.xlu0.b32.cont [6/16] 0.0, 128
        %849 = vxpose.xlu0.b32.cont [7/16] 0.0, 128
        %850 = vxpose.xlu0.b32.cont [8/16] 0.0, 128
        %851 = vxpose.xlu0.b32.cont [9/16] 0.0, 128
        %852 = vxpose.xlu0.b32.cont [10/16] 0.0, 128
        %853 = vxpose.xlu0.b32.cont [11/16] 0.0, 128
        %854 = vxpose.xlu0.b32.cont [12/16] 0.0, 128
        %855 = vxpose.xlu0.b32.cont [13/16] 0.0, 128
        %856 = vxpose.xlu0.b32.cont [14/16] 0.0, 128
        %857 = vxpose.xlu0.b32.cont [15/16] 0.0, 128
        %858 = vxpose.xlu0.b32.end [16/16] 0.0, 128
        %v859 = vpop.trf.xlu0
        %v860 = vpop.trf.xlu0
        %v861 = vpop.trf.xlu0
        %v862 = vpop.trf.xlu0
        %v863 = vpop.trf.xlu0
        %v864 = vpop.trf.xlu0
        %v865 = vpop.trf.xlu0
        %v866 = vpop.trf.xlu0
        %v867 = vpop.trf.xlu0
        %v868 = vpop.trf.xlu0
        %v869 = vpop.trf.xlu0
        %v870 = vpop.trf.xlu0
        %v871 = vpop.trf.xlu0
        %v872 = vpop.trf.xlu0
        %v873 = vpop.trf.xlu0
        %v874 = vpop.trf.xlu0
        %vm875 = vcmask 64512
        %v877 = vsel %vm875, %v859, 0
        %v880 = vsel %vm875, %v860, 0
        %v883 = vsel %vm875, %v861, 0
        %v886 = vsel %vm875, %v862, 0
        %888 = vmatprep.subr.mxu0 0.0
        %889 = vmatpush1.msra.mxu0 %v835
        %890 = vmatprep.subr.mxu0 0.0
        %891 = vmatpush1.msra.mxu0 0.0
        %892 = vmatprep.subr.mxu0 0.0
        %893 = vmatpush1.msra.mxu0 0.0
        %894 = vmatprep.subr.mxu0 0.0
        %895 = vmatpush1.msra.mxu0 0.0
        %896 = vmatprep.subr.mxu0 0.0
        %897 = vmatpush1.msra.mxu0 0.0
        %898 = vmatprep.subr.mxu0 0.0
        %899 = vmatpush1.msra.mxu0 0.0
        %900 = vmatprep.subr.mxu0 0.0
        %901 = vmatpush1.msra.mxu0 0.0
        %902 = vmatprep.subr.mxu0 0.0
        %903 = vmatpush1.msra.mxu0 0.0
        %904 = vmatprep.subr.mxu0 0.0
        %905 = vmatpush1.msra.mxu0 0.0
        %906 = vmatprep.subr.mxu0 0.0
        %907 = vmatpush1.msra.mxu0 0.0
        %908 = vmatprep.subr.mxu0 0.0
        %909 = vmatpush1.msra.mxu0 0.0
        %910 = vmatprep.subr.mxu0 0.0
        %911 = vmatpush1.msra.mxu0 0.0
        %912 = vmatprep.subr.mxu0 0.0
        %913 = vmatpush1.msra.mxu0 0.0
        %914 = vmatprep.subr.mxu0 0.0
        %915 = vmatpush1.msra.mxu0 0.0
        %916 = vmatprep.subr.mxu0 0.0
        %917 = vmatpush1.msra.mxu0 0.0
        %918 = vmatprep.subr.mxu0 0.0
        %919 = vmatpush1.msra.mxu0 0.0
        %920 = vmatprep.subr.mxu0 0.0
        %921 = vmatpush1.msra.mxu0 0.0
        %922 = vmatprep.subr.mxu0 0.0
        %923 = vmatpush1.msra.mxu0 0.0
        %924 = vmatprep.subr.mxu0 0.0
        %925 = vmatpush1.msra.mxu0 0.0
        %926 = vmatprep.subr.mxu0 0.0
        %927 = vmatpush1.msra.mxu0 0.0
        %928 = vmatprep.subr.mxu0 0.0
        %929 = vmatpush1.msra.mxu0 0.0
        %930 = vmatprep.subr.mxu0 0.0
        %931 = vmatpush1.msra.mxu0 0.0
        %932 = vmatprep.subr.mxu0 0.0
        %933 = vmatpush1.msra.mxu0 0.0
        %934 = vmatprep.subr.mxu0 0.0
        %935 = vmatpush1.msra.mxu0 0.0
        %936 = vmatprep.subr.mxu0 0.0
        %937 = vmatpush1.msra.mxu0 0.0
        %938 = vmatprep.subr.mxu0 0.0
        %939 = vmatpush1.msra.mxu0 0.0
        %940 = vmatprep.subr.mxu0 0.0
        %941 = vmatpush1.msra.mxu0 0.0
        %942 = vmatprep.subr.mxu0 0.0
        %943 = vmatpush1.msra.mxu0 0.0
        %944 = vmatprep.subr.mxu0 0.0
        %945 = vmatpush1.msra.mxu0 0.0
        %946 = vmatprep.subr.mxu0 0.0
        %947 = vmatpush1.msra.mxu0 0.0
        %948 = vmatprep.subr.mxu0 0.0
        %949 = vmatpush1.msra.mxu0 0.0
        %950 = vmatprep.subr.mxu0 0.0
        %951 = vmatpush1.msra.mxu0 0.0
        %952 = vmatprep.mubr.f32.mxu0 0.0
        %953 = vmatmul.mubr.f32.gmra.mrb[0].mxu0 %v877
        %v954 = vpop.f32.mrb[0].mxu0
        %v955 = vadd.f32 0.0, %v954
        %v956 = vpop.f32.mrb[0].mxu0
        %957 = vmatprep.mubr.f32.mxu0 0.0
        %958 = vmatmul.mubr.f32.gmra.mrb[0].mxu0 %v880
        %v959 = vpop.f32.mrb[0].mxu0
        %v960 = vadd.f32 0.0, %v959
        %v961 = vpop.f32.mrb[0].mxu0
        %962 = vmatprep.mubr.f32.mxu0 0.0
        %963 = vmatmul.mubr.f32.gmra.mrb[0].mxu0 %v883
        %v964 = vpop.f32.mrb[0].mxu0
        %v965 = vadd.f32 0.0, %v964
        %v966 = vpop.f32.mrb[0].mxu0
        %967 = vmatprep.mubr.f32.mxu0 0.0
        %968 = vmatmul.mubr.f32.gmra.mrb[0].mxu0 %v886
        %v969 = vpop.f32.mrb[0].mxu0
        %v970 = vadd.f32 0.0, %v969
        %v971 = vpop.f32.mrb[0].mxu0
        %972 = vdwg.mxu0
        %973 = vst.msk [vmem:[%s293] sm:$0xff] %vm674, %v955
        %974 = vst.msk [vmem:[%s293 + $0x8] sm:$0xff] %vm674, %v960
        %975 = vst.msk [vmem:[%s293 + $0x10] sm:$0xff] %vm674, %v965
        %976 = vst.msk [vmem:[%s293 + $0x18] sm:$0xff] %vm674, %v970
        %977 = vxpose.xlu0.b32.start [1/16] %v296, 128
        %978 = vxpose.xlu0.b32.cont [2/16] 0.0, 128
        %979 = vxpose.xlu0.b32.cont [3/16] 0.0, 128
        %980 = vxpose.xlu0.b32.cont [4/16] 0.0, 128
        %981 = vxpose.xlu0.b32.cont [5/16] 0.0, 128
        %982 = vxpose.xlu0.b32.cont [6/16] 0.0, 128
        %983 = vxpose.xlu0.b32.cont [7/16] 0.0, 128
        %984 = vxpose.xlu0.b32.cont [8/16] 0.0, 128
        %985 = vxpose.xlu0.b32.cont [9/16] 0.0, 128
        %986 = vxpose.xlu0.b32.cont [10/16] 0.0, 128
        %987 = vxpose.xlu0.b32.cont [11/16] 0.0, 128
        %988 = vxpose.xlu0.b32.cont [12/16] 0.0, 128
        %989 = vxpose.xlu0.b32.cont [13/16] 0.0, 128
        %990 = vxpose.xlu0.b32.cont [14/16] 0.0, 128
        %991 = vxpose.xlu0.b32.cont [15/16] 0.0, 128
        %992 = vxpose.xlu0.b32.end [16/16] 0.0, 128
        %v993 = vpop.trf.xlu0
        %v994 = vpop.trf.xlu0
        %v995 = vpop.trf.xlu0
        %v996 = vpop.trf.xlu0
        %v997 = vpop.trf.xlu0
        %v998 = vpop.trf.xlu0
        %v999 = vpop.trf.xlu0
        %v1000 = vpop.trf.xlu0
        %v1001 = vpop.trf.xlu0
        %v1002 = vpop.trf.xlu0
        %v1003 = vpop.trf.xlu0
        %v1004 = vpop.trf.xlu0
        %v1005 = vpop.trf.xlu0
        %v1006 = vpop.trf.xlu0
        %v1007 = vpop.trf.xlu0
        %v1008 = vpop.trf.xlu0
        %v1010 = vsel %vm875, %v993, 0
        %v1013 = vsel %vm875, %v994, 0
        %v1016 = vsel %vm875, %v995, 0
        %v1019 = vsel %vm875, %v996, 0
        %1021 = vmatprep.subr.mxu0 0.0
        %1022 = vmatpush1.msra.mxu0 %v836
        %1023 = vmatprep.subr.mxu0 0.0
        %1024 = vmatpush1.msra.mxu0 0.0
        %1025 = vmatprep.subr.mxu0 0.0
        %1026 = vmatpush1.msra.mxu0 0.0
        %1027 = vmatprep.subr.mxu0 0.0
        %1028 = vmatpush1.msra.mxu0 0.0
        %1029 = vmatprep.subr.mxu0 0.0
        %1030 = vmatpush1.msra.mxu0 0.0
        %1031 = vmatprep.subr.mxu0 0.0
        %1032 = vmatpush1.msra.mxu0 0.0
        %1033 = vmatprep.subr.mxu0 0.0
        %1034 = vmatpush1.msra.mxu0 0.0
        %1035 = vmatprep.subr.mxu0 0.0
        %1036 = vmatpush1.msra.mxu0 0.0
        %1037 = vmatprep.subr.mxu0 0.0
        %1038 = vmatpush1.msra.mxu0 0.0
        %1039 = vmatprep.subr.mxu0 0.0
        %1040 = vmatpush1.msra.mxu0 0.0
        %1041 = vmatprep.subr.mxu0 0.0
        %1042 = vmatpush1.msra.mxu0 0.0
        %1043 = vmatprep.subr.mxu0 0.0
        %1044 = vmatpush1.msra.mxu0 0.0
        %1045 = vmatprep.subr.mxu0 0.0
        %1046 = vmatpush1.msra.mxu0 0.0
        %1047 = vmatprep.subr.mxu0 0.0
        %1048 = vmatpush1.msra.mxu0 0.0
        %1049 = vmatprep.subr.mxu0 0.0
        %1050 = vmatpush1.msra.mxu0 0.0
        %1051 = vmatprep.subr.mxu0 0.0
        %1052 = vmatpush1.msra.mxu0 0.0
        %1053 = vmatprep.subr.mxu0 0.0
        %1054 = vmatpush1.msra.mxu0 0.0
        %1055 = vmatprep.subr.mxu0 0.0
        %1056 = vmatpush1.msra.mxu0 0.0
        %1057 = vmatprep.subr.mxu0 0.0
        %1058 = vmatpush1.msra.mxu0 0.0
        %1059 = vmatprep.subr.mxu0 0.0
        %1060 = vmatpush1.msra.mxu0 0.0
        %1061 = vmatprep.subr.mxu0 0.0
        %1062 = vmatpush1.msra.mxu0 0.0
        %1063 = vmatprep.subr.mxu0 0.0
        %1064 = vmatpush1.msra.mxu0 0.0
        %1065 = vmatprep.subr.mxu0 0.0
        %1066 = vmatpush1.msra.mxu0 0.0
        %1067 = vmatprep.subr.mxu0 0.0
        %1068 = vmatpush1.msra.mxu0 0.0
        %1069 = vmatprep.subr.mxu0 0.0
        %1070 = vmatpush1.msra.mxu0 0.0
        %1071 = vmatprep.subr.mxu0 0.0
        %1072 = vmatpush1.msra.mxu0 0.0
        %1073 = vmatprep.subr.mxu0 0.0
        %1074 = vmatpush1.msra.mxu0 0.0
        %1075 = vmatprep.subr.mxu0 0.0
        %1076 = vmatpush1.msra.mxu0 0.0
        %1077 = vmatprep.subr.mxu0 0.0
        %1078 = vmatpush1.msra.mxu0 0.0
        %1079 = vmatprep.subr.mxu0 0.0
        %1080 = vmatpush1.msra.mxu0 0.0
        %1081 = vmatprep.subr.mxu0 0.0
        %1082 = vmatpush1.msra.mxu0 0.0
        %1083 = vmatprep.subr.mxu0 0.0
        %1084 = vmatpush1.msra.mxu0 0.0
        %1085 = vmatprep.mubr.f32.mxu0 0.0
        %1086 = vmatmul.mubr.f32.gmra.mrb[0].mxu0 %v1010
        %v1087 = vpop.f32.mrb[0].mxu0
        %v1088 = vadd.f32 0.0, %v1087
        %v1089 = vpop.f32.mrb[0].mxu0
        %1090 = vmatprep.mubr.f32.mxu0 0.0
        %1091 = vmatmul.mubr.f32.gmra.mrb[0].mxu0 %v1013
        %v1092 = vpop.f32.mrb[0].mxu0
        %v1093 = vadd.f32 0.0, %v1092
        %v1094 = vpop.f32.mrb[0].mxu0
        %1095 = vmatprep.mubr.f32.mxu0 0.0
        %1096 = vmatmul.mubr.f32.gmra.mrb[0].mxu0 %v1016
        %v1097 = vpop.f32.mrb[0].mxu0
        %v1098 = vadd.f32 0.0, %v1097
        %v1099 = vpop.f32.mrb[0].mxu0
        %1100 = vmatprep.mubr.f32.mxu0 0.0
        %1101 = vmatmul.mubr.f32.gmra.mrb[0].mxu0 %v1019
        %v1102 = vpop.f32.mrb[0].mxu0
        %v1103 = vadd.f32 0.0, %v1102
        %v1104 = vpop.f32.mrb[0].mxu0
        %1105 = vdwg.mxu0
        %s1106 = scalar_lea.vmem %s293, 32
        %1107 = vst.msk [vmem:[%s1106] sm:$0xff] %vm674, %v1088
        %1108 = vst.msk [vmem:[%s1106 + $0x8] sm:$0xff] %vm674, %v1093
        %1109 = vst.msk [vmem:[%s1106 + $0x10] sm:$0xff] %vm674, %v1098
        %1110 = vst.msk [vmem:[%s1106 + $0x18] sm:$0xff] %vm674, %v1103
        %1111 = vxpose.xlu0.b32.start [1/16] %v297, 128
        %1112 = vxpose.xlu0.b32.cont [2/16] 0.0, 128
        %1113 = vxpose.xlu0.b32.cont [3/16] 0.0, 128
        %1114 = vxpose.xlu0.b32.cont [4/16] 0.0, 128
        %1115 = vxpose.xlu0.b32.cont [5/16] 0.0, 128
        %1116 = vxpose.xlu0.b32.cont [6/16] 0.0, 128
        %1117 = vxpose.xlu0.b32.cont [7/16] 0.0, 128
        %1118 = vxpose.xlu0.b32.cont [8/16] 0.0, 128
        %1119 = vxpose.xlu0.b32.cont [9/16] 0.0, 128
        %1120 = vxpose.xlu0.b32.cont [10/16] 0.0, 128
        %1121 = vxpose.xlu0.b32.cont [11/16] 0.0, 128
        %1122 = vxpose.xlu0.b32.cont [12/16] 0.0, 128
        %1123 = vxpose.xlu0.b32.cont [13/16] 0.0, 128
        %1124 = vxpose.xlu0.b32.cont [14/16] 0.0, 128
        %1125 = vxpose.xlu0.b32.cont [15/16] 0.0, 128
        %1126 = vxpose.xlu0.b32.end [16/16] 0.0, 128
        %v1127 = vpop.trf.xlu0
        %v1128 = vpop.trf.xlu0
        %v1129 = vpop.trf.xlu0
        %v1130 = vpop.trf.xlu0
        %v1131 = vpop.trf.xlu0
        %v1132 = vpop.trf.xlu0
        %v1133 = vpop.trf.xlu0
        %v1134 = vpop.trf.xlu0
        %v1135 = vpop.trf.xlu0
        %v1136 = vpop.trf.xlu0
        %v1137 = vpop.trf.xlu0
        %v1138 = vpop.trf.xlu0
        %v1139 = vpop.trf.xlu0
        %v1140 = vpop.trf.xlu0
        %v1141 = vpop.trf.xlu0
        %v1142 = vpop.trf.xlu0
        %v1144 = vsel %vm875, %v1127, 0
        %v1147 = vsel %vm875, %v1128, 0
        %v1150 = vsel %vm875, %v1129, 0
        %v1153 = vsel %vm875, %v1130, 0
        %1155 = vmatprep.subr.mxu0 0.0
        %1156 = vmatpush1.msra.mxu0 %v837
        %1157 = vmatprep.subr.mxu0 0.0
        %1158 = vmatpush1.msra.mxu0 0.0
        %1159 = vmatprep.subr.mxu0 0.0
        %1160 = vmatpush1.msra.mxu0 0.0
        %1161 = vmatprep.subr.mxu0 0.0
        %1162 = vmatpush1.msra.mxu0 0.0
        %1163 = vmatprep.subr.mxu0 0.0
        %1164 = vmatpush1.msra.mxu0 0.0
        %1165 = vmatprep.subr.mxu0 0.0
        %1166 = vmatpush1.msra.mxu0 0.0
        %1167 = vmatprep.subr.mxu0 0.0
        %1168 = vmatpush1.msra.mxu0 0.0
        %1169 = vmatprep.subr.mxu0 0.0
        %1170 = vmatpush1.msra.mxu0 0.0
        %1171 = vmatprep.subr.mxu0 0.0
        %1172 = vmatpush1.msra.mxu0 0.0
        %1173 = vmatprep.subr.mxu0 0.0
        %1174 = vmatpush1.msra.mxu0 0.0
        %1175 = vmatprep.subr.mxu0 0.0
        %1176 = vmatpush1.msra.mxu0 0.0
        %1177 = vmatprep.subr.mxu0 0.0
        %1178 = vmatpush1.msra.mxu0 0.0
        %1179 = vmatprep.subr.mxu0 0.0
        %1180 = vmatpush1.msra.mxu0 0.0
        %1181 = vmatprep.subr.mxu0 0.0
        %1182 = vmatpush1.msra.mxu0 0.0
        %1183 = vmatprep.subr.mxu0 0.0
        %1184 = vmatpush1.msra.mxu0 0.0
        %1185 = vmatprep.subr.mxu0 0.0
        %1186 = vmatpush1.msra.mxu0 0.0
        %1187 = vmatprep.subr.mxu0 0.0
        %1188 = vmatpush1.msra.mxu0 0.0
        %1189 = vmatprep.subr.mxu0 0.0
        %1190 = vmatpush1.msra.mxu0 0.0
        %1191 = vmatprep.subr.mxu0 0.0
        %1192 = vmatpush1.msra.mxu0 0.0
        %1193 = vmatprep.subr.mxu0 0.0
        %1194 = vmatpush1.msra.mxu0 0.0
        %1195 = vmatprep.subr.mxu0 0.0
        %1196 = vmatpush1.msra.mxu0 0.0
        %1197 = vmatprep.subr.mxu0 0.0
        %1198 = vmatpush1.msra.mxu0 0.0
        %1199 = vmatprep.subr.mxu0 0.0
        %1200 = vmatpush1.msra.mxu0 0.0
        %1201 = vmatprep.subr.mxu0 0.0
        %1202 = vmatpush1.msra.mxu0 0.0
        %1203 = vmatprep.subr.mxu0 0.0
        %1204 = vmatpush1.msra.mxu0 0.0
        %1205 = vmatprep.subr.mxu0 0.0
        %1206 = vmatpush1.msra.mxu0 0.0
        %1207 = vmatprep.subr.mxu0 0.0
        %1208 = vmatpush1.msra.mxu0 0.0
        %1209 = vmatprep.subr.mxu0 0.0
        %1210 = vmatpush1.msra.mxu0 0.0
        %1211 = vmatprep.subr.mxu0 0.0
        %1212 = vmatpush1.msra.mxu0 0.0
        %1213 = vmatprep.subr.mxu0 0.0
        %1214 = vmatpush1.msra.mxu0 0.0
        %1215 = vmatprep.subr.mxu0 0.0
        %1216 = vmatpush1.msra.mxu0 0.0
        %1217 = vmatprep.subr.mxu0 0.0
        %1218 = vmatpush1.msra.mxu0 0.0
        %1219 = vmatprep.mubr.f32.mxu0 0.0
        %1220 = vmatmul.mubr.f32.gmra.mrb[0].mxu0 %v1144
        %v1221 = vpop.f32.mrb[0].mxu0
        %v1222 = vadd.f32 0.0, %v1221
        %v1223 = vpop.f32.mrb[0].mxu0
        %1224 = vmatprep.mubr.f32.mxu0 0.0
        %1225 = vmatmul.mubr.f32.gmra.mrb[0].mxu0 %v1147
        %v1226 = vpop.f32.mrb[0].mxu0
        %v1227 = vadd.f32 0.0, %v1226
        %v1228 = vpop.f32.mrb[0].mxu0
        %1229 = vmatprep.mubr.f32.mxu0 0.0
        %1230 = vmatmul.mubr.f32.gmra.mrb[0].mxu0 %v1150
        %v1231 = vpop.f32.mrb[0].mxu0
        %v1232 = vadd.f32 0.0, %v1231
        %v1233 = vpop.f32.mrb[0].mxu0
        %1234 = vmatprep.mubr.f32.mxu0 0.0
        %1235 = vmatmul.mubr.f32.gmra.mrb[0].mxu0 %v1153
        %v1236 = vpop.f32.mrb[0].mxu0
        %v1237 = vadd.f32 0.0, %v1236
        %v1238 = vpop.f32.mrb[0].mxu0
        %1239 = vdwg.mxu0
        %s1240 = scalar_lea.vmem %s293, 64
        %1241 = vst.msk [vmem:[%s1240] sm:$0xff] %vm674, %v1222
        %1242 = vst.msk [vmem:[%s1240 + $0x8] sm:$0xff] %vm674, %v1227
        %1243 = vst.msk [vmem:[%s1240 + $0x10] sm:$0xff] %vm674, %v1232
        %1244 = vst.msk [vmem:[%s1240 + $0x18] sm:$0xff] %vm674, %v1237
        %1245 = vxpose.xlu0.b32.start [1/16] %v298, 128
        %1246 = vxpose.xlu0.b32.cont [2/16] 0.0, 128
        %1247 = vxpose.xlu0.b32.cont [3/16] 0.0, 128
        %1248 = vxpose.xlu0.b32.cont [4/16] 0.0, 128
        %1249 = vxpose.xlu0.b32.cont [5/16] 0.0, 128
        %1250 = vxpose.xlu0.b32.cont [6/16] 0.0, 128
        %1251 = vxpose.xlu0.b32.cont [7/16] 0.0, 128
        %1252 = vxpose.xlu0.b32.cont [8/16] 0.0, 128
        %1253 = vxpose.xlu0.b32.cont [9/16] 0.0, 128
        %1254 = vxpose.xlu0.b32.cont [10/16] 0.0, 128
        %1255 = vxpose.xlu0.b32.cont [11/16] 0.0, 128
        %1256 = vxpose.xlu0.b32.cont [12/16] 0.0, 128
        %1257 = vxpose.xlu0.b32.cont [13/16] 0.0, 128
        %1258 = vxpose.xlu0.b32.cont [14/16] 0.0, 128
        %1259 = vxpose.xlu0.b32.cont [15/16] 0.0, 128
        %1260 = vxpose.xlu0.b32.end [16/16] 0.0, 128
        %v1261 = vpop.trf.xlu0
        %v1262 = vpop.trf.xlu0
        %v1263 = vpop.trf.xlu0
        %v1264 = vpop.trf.xlu0
        %v1265 = vpop.trf.xlu0
        %v1266 = vpop.trf.xlu0
        %v1267 = vpop.trf.xlu0
        %v1268 = vpop.trf.xlu0
        %v1269 = vpop.trf.xlu0
        %v1270 = vpop.trf.xlu0
        %v1271 = vpop.trf.xlu0
        %v1272 = vpop.trf.xlu0
        %v1273 = vpop.trf.xlu0
        %v1274 = vpop.trf.xlu0
        %v1275 = vpop.trf.xlu0
        %v1276 = vpop.trf.xlu0
        %v1278 = vsel %vm875, %v1261, 0
        %v1281 = vsel %vm875, %v1262, 0
        %v1284 = vsel %vm875, %v1263, 0
        %v1287 = vsel %vm875, %v1264, 0
        %1289 = vmatprep.subr.mxu0 0.0
        %1290 = vmatpush1.msra.mxu0 %v838
        %1291 = vmatprep.subr.mxu0 0.0
        %1292 = vmatpush1.msra.mxu0 0.0
        %1293 = vmatprep.subr.mxu0 0.0
        %1294 = vmatpush1.msra.mxu0 0.0
        %1295 = vmatprep.subr.mxu0 0.0
        %1296 = vmatpush1.msra.mxu0 0.0
        %1297 = vmatprep.subr.mxu0 0.0
        %1298 = vmatpush1.msra.mxu0 0.0
        %1299 = vmatprep.subr.mxu0 0.0
        %1300 = vmatpush1.msra.mxu0 0.0
        %1301 = vmatprep.subr.mxu0 0.0
        %1302 = vmatpush1.msra.mxu0 0.0
        %1303 = vmatprep.subr.mxu0 0.0
        %1304 = vmatpush1.msra.mxu0 0.0
        %1305 = vmatprep.subr.mxu0 0.0
        %1306 = vmatpush1.msra.mxu0 0.0
        %1307 = vmatprep.subr.mxu0 0.0
        %1308 = vmatpush1.msra.mxu0 0.0
        %1309 = vmatprep.subr.mxu0 0.0
        %1310 = vmatpush1.msra.mxu0 0.0
        %1311 = vmatprep.subr.mxu0 0.0
        %1312 = vmatpush1.msra.mxu0 0.0
        %1313 = vmatprep.subr.mxu0 0.0
        %1314 = vmatpush1.msra.mxu0 0.0
        %1315 = vmatprep.subr.mxu0 0.0
        %1316 = vmatpush1.msra.mxu0 0.0
        %1317 = vmatprep.subr.mxu0 0.0
        %1318 = vmatpush1.msra.mxu0 0.0
        %1319 = vmatprep.subr.mxu0 0.0
        %1320 = vmatpush1.msra.mxu0 0.0
        %1321 = vmatprep.subr.mxu0 0.0
        %1322 = vmatpush1.msra.mxu0 0.0
        %1323 = vmatprep.subr.mxu0 0.0
        %1324 = vmatpush1.msra.mxu0 0.0
        %1325 = vmatprep.subr.mxu0 0.0
        %1326 = vmatpush1.msra.mxu0 0.0
        %1327 = vmatprep.subr.mxu0 0.0
        %1328 = vmatpush1.msra.mxu0 0.0
        %1329 = vmatprep.subr.mxu0 0.0
        %1330 = vmatpush1.msra.mxu0 0.0
        %1331 = vmatprep.subr.mxu0 0.0
        %1332 = vmatpush1.msra.mxu0 0.0
        %1333 = vmatprep.subr.mxu0 0.0
        %1334 = vmatpush1.msra.mxu0 0.0
        %1335 = vmatprep.subr.mxu0 0.0
        %1336 = vmatpush1.msra.mxu0 0.0
        %1337 = vmatprep.subr.mxu0 0.0
        %1338 = vmatpush1.msra.mxu0 0.0
        %1339 = vmatprep.subr.mxu0 0.0
        %1340 = vmatpush1.msra.mxu0 0.0
        %1341 = vmatprep.subr.mxu0 0.0
        %1342 = vmatpush1.msra.mxu0 0.0
        %1343 = vmatprep.subr.mxu0 0.0
        %1344 = vmatpush1.msra.mxu0 0.0
        %1345 = vmatprep.subr.mxu0 0.0
        %1346 = vmatpush1.msra.mxu0 0.0
        %1347 = vmatprep.subr.mxu0 0.0
        %1348 = vmatpush1.msra.mxu0 0.0
        %1349 = vmatprep.subr.mxu0 0.0
        %1350 = vmatpush1.msra.mxu0 0.0
        %1351 = vmatprep.subr.mxu0 0.0
        %1352 = vmatpush1.msra.mxu0 0.0
        %1353 = vmatprep.mubr.f32.mxu0 0.0
        %1354 = vmatmul.mubr.f32.gmra.mrb[0].mxu0 %v1278
        %v1355 = vpop.f32.mrb[0].mxu0
        %v1356 = vadd.f32 0.0, %v1355
        %v1357 = vpop.f32.mrb[0].mxu0
        %1358 = vmatprep.mubr.f32.mxu0 0.0
        %1359 = vmatmul.mubr.f32.gmra.mrb[0].mxu0 %v1281
        %v1360 = vpop.f32.mrb[0].mxu0
        %v1361 = vadd.f32 0.0, %v1360
        %v1362 = vpop.f32.mrb[0].mxu0
        %1363 = vmatprep.mubr.f32.mxu0 0.0
        %1364 = vmatmul.mubr.f32.gmra.mrb[0].mxu0 %v1284
        %v1365 = vpop.f32.mrb[0].mxu0
        %v1366 = vadd.f32 0.0, %v1365
        %v1367 = vpop.f32.mrb[0].mxu0
        %1368 = vmatprep.mubr.f32.mxu0 0.0
        %1369 = vmatmul.mubr.f32.gmra.mrb[0].mxu0 %v1287
        %v1370 = vpop.f32.mrb[0].mxu0
        %v1371 = vadd.f32 0.0, %v1370
        %v1372 = vpop.f32.mrb[0].mxu0
        %1373 = vdwg.mxu0
        %s1374 = scalar_lea.vmem %s293, 96
        %1375 = vst.msk [vmem:[%s1374] sm:$0xff] %vm674, %v1356
        %1376 = vst.msk [vmem:[%s1374 + $0x8] sm:$0xff] %vm674, %v1361
        %1377 = vst.msk [vmem:[%s1374 + $0x10] sm:$0xff] %vm674, %v1366
        %1378 = vst.msk [vmem:[%s1374 + $0x18] sm:$0xff] %vm674, %v1371
        %1379 = vxpose.xlu0.b32.start [1/16] %v299, 128
        %1380 = vxpose.xlu0.b32.cont [2/16] 0.0, 128
        %1381 = vxpose.xlu0.b32.cont [3/16] 0.0, 128
        %1382 = vxpose.xlu0.b32.cont [4/16] 0.0, 128
        %1383 = vxpose.xlu0.b32.cont [5/16] 0.0, 128
        %1384 = vxpose.xlu0.b32.cont [6/16] 0.0, 128
        %1385 = vxpose.xlu0.b32.cont [7/16] 0.0, 128
        %1386 = vxpose.xlu0.b32.cont [8/16] 0.0, 128
        %1387 = vxpose.xlu0.b32.cont [9/16] 0.0, 128
        %1388 = vxpose.xlu0.b32.cont [10/16] 0.0, 128
        %1389 = vxpose.xlu0.b32.cont [11/16] 0.0, 128
        %1390 = vxpose.xlu0.b32.cont [12/16] 0.0, 128
        %1391 = vxpose.xlu0.b32.cont [13/16] 0.0, 128
        %1392 = vxpose.xlu0.b32.cont [14/16] 0.0, 128
        %1393 = vxpose.xlu0.b32.cont [15/16] 0.0, 128
        %1394 = vxpose.xlu0.b32.end [16/16] 0.0, 128
        %v1395 = vpop.trf.xlu0
        %v1396 = vpop.trf.xlu0
        %v1397 = vpop.trf.xlu0
        %v1398 = vpop.trf.xlu0
        %v1399 = vpop.trf.xlu0
        %v1400 = vpop.trf.xlu0
        %v1401 = vpop.trf.xlu0
        %v1402 = vpop.trf.xlu0
        %v1403 = vpop.trf.xlu0
        %v1404 = vpop.trf.xlu0
        %v1405 = vpop.trf.xlu0
        %v1406 = vpop.trf.xlu0
        %v1407 = vpop.trf.xlu0
        %v1408 = vpop.trf.xlu0
        %v1409 = vpop.trf.xlu0
        %v1410 = vpop.trf.xlu0
        %v1412 = vsel %vm875, %v1395, 0
        %v1415 = vsel %vm875, %v1396, 0
        %v1418 = vsel %vm875, %v1397, 0
        %v1421 = vsel %vm875, %v1398, 0
        %1423 = vmatprep.subr.mxu0 0.0
        %1424 = vmatpush1.msra.mxu0 %v839
        %1425 = vmatprep.subr.mxu0 0.0
        %1426 = vmatpush1.msra.mxu0 0.0
        %1427 = vmatprep.subr.mxu0 0.0
        %1428 = vmatpush1.msra.mxu0 0.0
        %1429 = vmatprep.subr.mxu0 0.0
        %1430 = vmatpush1.msra.mxu0 0.0
        %1431 = vmatprep.subr.mxu0 0.0
        %1432 = vmatpush1.msra.mxu0 0.0
        %1433 = vmatprep.subr.mxu0 0.0
        %1434 = vmatpush1.msra.mxu0 0.0
        %1435 = vmatprep.subr.mxu0 0.0
        %1436 = vmatpush1.msra.mxu0 0.0
        %1437 = vmatprep.subr.mxu0 0.0
        %1438 = vmatpush1.msra.mxu0 0.0
        %1439 = vmatprep.subr.mxu0 0.0
        %1440 = vmatpush1.msra.mxu0 0.0
        %1441 = vmatprep.subr.mxu0 0.0
        %1442 = vmatpush1.msra.mxu0 0.0
        %1443 = vmatprep.subr.mxu0 0.0
        %1444 = vmatpush1.msra.mxu0 0.0
        %1445 = vmatprep.subr.mxu0 0.0
        %1446 = vmatpush1.msra.mxu0 0.0
        %1447 = vmatprep.subr.mxu0 0.0
        %1448 = vmatpush1.msra.mxu0 0.0
        %1449 = vmatprep.subr.mxu0 0.0
        %1450 = vmatpush1.msra.mxu0 0.0
        %1451 = vmatprep.subr.mxu0 0.0
        %1452 = vmatpush1.msra.mxu0 0.0
        %1453 = vmatprep.subr.mxu0 0.0
        %1454 = vmatpush1.msra.mxu0 0.0
        %1455 = vmatprep.subr.mxu0 0.0
        %1456 = vmatpush1.msra.mxu0 0.0
        %1457 = vmatprep.subr.mxu0 0.0
        %1458 = vmatpush1.msra.mxu0 0.0
        %1459 = vmatprep.subr.mxu0 0.0
        %1460 = vmatpush1.msra.mxu0 0.0
        %1461 = vmatprep.subr.mxu0 0.0
        %1462 = vmatpush1.msra.mxu0 0.0
        %1463 = vmatprep.subr.mxu0 0.0
        %1464 = vmatpush1.msra.mxu0 0.0
        %1465 = vmatprep.subr.mxu0 0.0
        %1466 = vmatpush1.msra.mxu0 0.0
        %1467 = vmatprep.subr.mxu0 0.0
        %1468 = vmatpush1.msra.mxu0 0.0
        %1469 = vmatprep.subr.mxu0 0.0
        %1470 = vmatpush1.msra.mxu0 0.0
        %1471 = vmatprep.subr.mxu0 0.0
        %1472 = vmatpush1.msra.mxu0 0.0
        %1473 = vmatprep.subr.mxu0 0.0
        %1474 = vmatpush1.msra.mxu0 0.0
        %1475 = vmatprep.subr.mxu0 0.0
        %1476 = vmatpush1.msra.mxu0 0.0
        %1477 = vmatprep.subr.mxu0 0.0
        %1478 = vmatpush1.msra.mxu0 0.0
        %1479 = vmatprep.subr.mxu0 0.0
        %1480 = vmatpush1.msra.mxu0 0.0
        %1481 = vmatprep.subr.mxu0 0.0
        %1482 = vmatpush1.msra.mxu0 0.0
        %1483 = vmatprep.subr.mxu0 0.0
        %1484 = vmatpush1.msra.mxu0 0.0
        %1485 = vmatprep.subr.mxu0 0.0
        %1486 = vmatpush1.msra.mxu0 0.0
        %1487 = vmatprep.mubr.f32.mxu0 0.0
        %1488 = vmatmul.mubr.f32.gmra.mrb[0].mxu0 %v1412
        %v1489 = vpop.f32.mrb[0].mxu0
        %v1490 = vadd.f32 0.0, %v1489
        %v1491 = vpop.f32.mrb[0].mxu0
        %1492 = vmatprep.mubr.f32.mxu0 0.0
        %1493 = vmatmul.mubr.f32.gmra.mrb[0].mxu0 %v1415
        %v1494 = vpop.f32.mrb[0].mxu0
        %v1495 = vadd.f32 0.0, %v1494
        %v1496 = vpop.f32.mrb[0].mxu0
        %1497 = vmatprep.mubr.f32.mxu0 0.0
        %1498 = vmatmul.mubr.f32.gmra.mrb[0].mxu0 %v1418
        %v1499 = vpop.f32.mrb[0].mxu0
        %v1500 = vadd.f32 0.0, %v1499
        %v1501 = vpop.f32.mrb[0].mxu0
        %1502 = vmatprep.mubr.f32.mxu0 0.0
        %1503 = vmatmul.mubr.f32.gmra.mrb[0].mxu0 %v1421
        %v1504 = vpop.f32.mrb[0].mxu0
        %v1505 = vadd.f32 0.0, %v1504
        %v1506 = vpop.f32.mrb[0].mxu0
        %1507 = vdwg.mxu0
        %s1508 = scalar_lea.vmem %s293, 128
        %1509 = vst.msk [vmem:[%s1508] sm:$0xff] %vm674, %v1490
        %1510 = vst.msk [vmem:[%s1508 + $0x8] sm:$0xff] %vm674, %v1495
        %1511 = vst.msk [vmem:[%s1508 + $0x10] sm:$0xff] %vm674, %v1500
        %1512 = vst.msk [vmem:[%s1508 + $0x18] sm:$0xff] %vm674, %v1505
        %1513 = vxpose.xlu0.b32.start [1/16] %v300, 128
        %1514 = vxpose.xlu0.b32.cont [2/16] 0.0, 128
        %1515 = vxpose.xlu0.b32.cont [3/16] 0.0, 128
        %1516 = vxpose.xlu0.b32.cont [4/16] 0.0, 128
        %1517 = vxpose.xlu0.b32.cont [5/16] 0.0, 128
        %1518 = vxpose.xlu0.b32.cont [6/16] 0.0, 128
        %1519 = vxpose.xlu0.b32.cont [7/16] 0.0, 128
        %1520 = vxpose.xlu0.b32.cont [8/16] 0.0, 128
        %1521 = vxpose.xlu0.b32.cont [9/16] 0.0, 128
        %1522 = vxpose.xlu0.b32.cont [10/16] 0.0, 128
        %1523 = vxpose.xlu0.b32.cont [11/16] 0.0, 128
        %1524 = vxpose.xlu0.b32.cont [12/16] 0.0, 128
        %1525 = vxpose.xlu0.b32.cont [13/16] 0.0, 128
        %1526 = vxpose.xlu0.b32.cont [14/16] 0.0, 128
        %1527 = vxpose.xlu0.b32.cont [15/16] 0.0, 128
        %1528 = vxpose.xlu0.b32.end [16/16] 0.0, 128
        %v1529 = vpop.trf.xlu0
        %v1530 = vpop.trf.xlu0
        %v1531 = vpop.trf.xlu0
        %v1532 = vpop.trf.xlu0
        %v1533 = vpop.trf.xlu0
        %v1534 = vpop.trf.xlu0
        %v1535 = vpop.trf.xlu0
        %v1536 = vpop.trf.xlu0
        %v1537 = vpop.trf.xlu0
        %v1538 = vpop.trf.xlu0
        %v1539 = vpop.trf.xlu0
        %v1540 = vpop.trf.xlu0
        %v1541 = vpop.trf.xlu0
        %v1542 = vpop.trf.xlu0
        %v1543 = vpop.trf.xlu0
        %v1544 = vpop.trf.xlu0
        %v1546 = vsel %vm875, %v1529, 0
        %v1549 = vsel %vm875, %v1530, 0
        %v1552 = vsel %vm875, %v1531, 0
        %v1555 = vsel %vm875, %v1532, 0
        %1557 = vmatprep.subr.mxu0 0.0
        %1558 = vmatpush1.msra.mxu0 %v840
        %1559 = vmatprep.subr.mxu0 0.0
        %1560 = vmatpush1.msra.mxu0 0.0
        %1561 = vmatprep.subr.mxu0 0.0
        %1562 = vmatpush1.msra.mxu0 0.0
        %1563 = vmatprep.subr.mxu0 0.0
        %1564 = vmatpush1.msra.mxu0 0.0
        %1565 = vmatprep.subr.mxu0 0.0
        %1566 = vmatpush1.msra.mxu0 0.0
        %1567 = vmatprep.subr.mxu0 0.0
        %1568 = vmatpush1.msra.mxu0 0.0
        %1569 = vmatprep.subr.mxu0 0.0
        %1570 = vmatpush1.msra.mxu0 0.0
        %1571 = vmatprep.subr.mxu0 0.0
        %1572 = vmatpush1.msra.mxu0 0.0
        %1573 = vmatprep.subr.mxu0 0.0
        %1574 = vmatpush1.msra.mxu0 0.0
        %1575 = vmatprep.subr.mxu0 0.0
        %1576 = vmatpush1.msra.mxu0 0.0
        %1577 = vmatprep.subr.mxu0 0.0
        %1578 = vmatpush1.msra.mxu0 0.0
        %1579 = vmatprep.subr.mxu0 0.0
        %1580 = vmatpush1.msra.mxu0 0.0
        %1581 = vmatprep.subr.mxu0 0.0
        %1582 = vmatpush1.msra.mxu0 0.0
        %1583 = vmatprep.subr.mxu0 0.0
        %1584 = vmatpush1.msra.mxu0 0.0
        %1585 = vmatprep.subr.mxu0 0.0
        %1586 = vmatpush1.msra.mxu0 0.0
        %1587 = vmatprep.subr.mxu0 0.0
        %1588 = vmatpush1.msra.mxu0 0.0
        %1589 = vmatprep.subr.mxu0 0.0
        %1590 = vmatpush1.msra.mxu0 0.0
        %1591 = vmatprep.subr.mxu0 0.0
        %1592 = vmatpush1.msra.mxu0 0.0
        %1593 = vmatprep.subr.mxu0 0.0
        %1594 = vmatpush1.msra.mxu0 0.0
        %1595 = vmatprep.subr.mxu0 0.0
        %1596 = vmatpush1.msra.mxu0 0.0
        %1597 = vmatprep.subr.mxu0 0.0
        %1598 = vmatpush1.msra.mxu0 0.0
        %1599 = vmatprep.subr.mxu0 0.0
        %1600 = vmatpush1.msra.mxu0 0.0
        %1601 = vmatprep.subr.mxu0 0.0
        %1602 = vmatpush1.msra.mxu0 0.0
        %1603 = vmatprep.subr.mxu0 0.0
        %1604 = vmatpush1.msra.mxu0 0.0
        %1605 = vmatprep.subr.mxu0 0.0
        %1606 = vmatpush1.msra.mxu0 0.0
        %1607 = vmatprep.subr.mxu0 0.0
        %1608 = vmatpush1.msra.mxu0 0.0
        %1609 = vmatprep.subr.mxu0 0.0
        %1610 = vmatpush1.msra.mxu0 0.0
        %1611 = vmatprep.subr.mxu0 0.0
        %1612 = vmatpush1.msra.mxu0 0.0
        %1613 = vmatprep.subr.mxu0 0.0
        %1614 = vmatpush1.msra.mxu0 0.0
        %1615 = vmatprep.subr.mxu0 0.0
        %1616 = vmatpush1.msra.mxu0 0.0
        %1617 = vmatprep.subr.mxu0 0.0
        %1618 = vmatpush1.msra.mxu0 0.0
        %1619 = vmatprep.subr.mxu0 0.0
        %1620 = vmatpush1.msra.mxu0 0.0
        %1621 = vmatprep.mubr.f32.mxu0 0.0
        %1622 = vmatmul.mubr.f32.gmra.mrb[0].mxu0 %v1546
        %v1623 = vpop.f32.mrb[0].mxu0
        %v1624 = vadd.f32 0.0, %v1623
        %v1625 = vpop.f32.mrb[0].mxu0
        %1626 = vmatprep.mubr.f32.mxu0 0.0
        %1627 = vmatmul.mubr.f32.gmra.mrb[0].mxu0 %v1549
        %v1628 = vpop.f32.mrb[0].mxu0
        %v1629 = vadd.f32 0.0, %v1628
        %v1630 = vpop.f32.mrb[0].mxu0
        %1631 = vmatprep.mubr.f32.mxu0 0.0
        %1632 = vmatmul.mubr.f32.gmra.mrb[0].mxu0 %v1552
        %v1633 = vpop.f32.mrb[0].mxu0
        %v1634 = vadd.f32 0.0, %v1633
        %v1635 = vpop.f32.mrb[0].mxu0
        %1636 = vmatprep.mubr.f32.mxu0 0.0
        %1637 = vmatmul.mubr.f32.gmra.mrb[0].mxu0 %v1555
        %v1638 = vpop.f32.mrb[0].mxu0
        %v1639 = vadd.f32 0.0, %v1638
        %v1640 = vpop.f32.mrb[0].mxu0
        %1641 = vdwg.mxu0
        %s1642 = scalar_lea.vmem %s293, 160
        %1643 = vst.msk [vmem:[%s1642] sm:$0xff] %vm674, %v1624
        %1644 = vst.msk [vmem:[%s1642 + $0x8] sm:$0xff] %vm674, %v1629
        %1645 = vst.msk [vmem:[%s1642 + $0x10] sm:$0xff] %vm674, %v1634
        %1646 = vst.msk [vmem:[%s1642 + $0x18] sm:$0xff] %vm674, %v1639
        %1647 = vxpose.xlu0.b32.start [1/16] %v301, 128
        %1648 = vxpose.xlu0.b32.cont [2/16] 0.0, 128
        %1649 = vxpose.xlu0.b32.cont [3/16] 0.0, 128
        %1650 = vxpose.xlu0.b32.cont [4/16] 0.0, 128
        %1651 = vxpose.xlu0.b32.cont [5/16] 0.0, 128
        %1652 = vxpose.xlu0.b32.cont [6/16] 0.0, 128
        %1653 = vxpose.xlu0.b32.cont [7/16] 0.0, 128
        %1654 = vxpose.xlu0.b32.cont [8/16] 0.0, 128
        %1655 = vxpose.xlu0.b32.cont [9/16] 0.0, 128
        %1656 = vxpose.xlu0.b32.cont [10/16] 0.0, 128
        %1657 = vxpose.xlu0.b32.cont [11/16] 0.0, 128
        %1658 = vxpose.xlu0.b32.cont [12/16] 0.0, 128
        %1659 = vxpose.xlu0.b32.cont [13/16] 0.0, 128
        %1660 = vxpose.xlu0.b32.cont [14/16] 0.0, 128
        %1661 = vxpose.xlu0.b32.cont [15/16] 0.0, 128
        %1662 = vxpose.xlu0.b32.end [16/16] 0.0, 128
        %v1663 = vpop.trf.xlu0
        %v1664 = vpop.trf.xlu0
        %v1665 = vpop.trf.xlu0
        %v1666 = vpop.trf.xlu0
        %v1667 = vpop.trf.xlu0
        %v1668 = vpop.trf.xlu0
        %v1669 = vpop.trf.xlu0
        %v1670 = vpop.trf.xlu0
        %v1671 = vpop.trf.xlu0
        %v1672 = vpop.trf.xlu0
        %v1673 = vpop.trf.xlu0
        %v1674 = vpop.trf.xlu0
        %v1675 = vpop.trf.xlu0
        %v1676 = vpop.trf.xlu0
        %v1677 = vpop.trf.xlu0
        %v1678 = vpop.trf.xlu0
        %v1680 = vsel %vm875, %v1663, 0
        %v1683 = vsel %vm875, %v1664, 0
        %v1686 = vsel %vm875, %v1665, 0
        %v1689 = vsel %vm875, %v1666, 0
        %1691 = vmatprep.subr.mxu0 0.0
        %1692 = vmatpush1.msra.mxu0 %v841
        %1693 = vmatprep.subr.mxu0 0.0
        %1694 = vmatpush1.msra.mxu0 0.0
        %1695 = vmatprep.subr.mxu0 0.0
        %1696 = vmatpush1.msra.mxu0 0.0
        %1697 = vmatprep.subr.mxu0 0.0
        %1698 = vmatpush1.msra.mxu0 0.0
        %1699 = vmatprep.subr.mxu0 0.0
        %1700 = vmatpush1.msra.mxu0 0.0
        %1701 = vmatprep.subr.mxu0 0.0
        %1702 = vmatpush1.msra.mxu0 0.0
        %1703 = vmatprep.subr.mxu0 0.0
        %1704 = vmatpush1.msra.mxu0 0.0
        %1705 = vmatprep.subr.mxu0 0.0
        %1706 = vmatpush1.msra.mxu0 0.0
        %1707 = vmatprep.subr.mxu0 0.0
        %1708 = vmatpush1.msra.mxu0 0.0
        %1709 = vmatprep.subr.mxu0 0.0
        %1710 = vmatpush1.msra.mxu0 0.0
        %1711 = vmatprep.subr.mxu0 0.0
        %1712 = vmatpush1.msra.mxu0 0.0
        %1713 = vmatprep.subr.mxu0 0.0
        %1714 = vmatpush1.msra.mxu0 0.0
        %1715 = vmatprep.subr.mxu0 0.0
        %1716 = vmatpush1.msra.mxu0 0.0
        %1717 = vmatprep.subr.mxu0 0.0
        %1718 = vmatpush1.msra.mxu0 0.0
        %1719 = vmatprep.subr.mxu0 0.0
        %1720 = vmatpush1.msra.mxu0 0.0
        %1721 = vmatprep.subr.mxu0 0.0
        %1722 = vmatpush1.msra.mxu0 0.0
        %1723 = vmatprep.subr.mxu0 0.0
        %1724 = vmatpush1.msra.mxu0 0.0
        %1725 = vmatprep.subr.mxu0 0.0
        %1726 = vmatpush1.msra.mxu0 0.0
        %1727 = vmatprep.subr.mxu0 0.0
        %1728 = vmatpush1.msra.mxu0 0.0
        %1729 = vmatprep.subr.mxu0 0.0
        %1730 = vmatpush1.msra.mxu0 0.0
        %1731 = vmatprep.subr.mxu0 0.0
        %1732 = vmatpush1.msra.mxu0 0.0
        %1733 = vmatprep.subr.mxu0 0.0
        %1734 = vmatpush1.msra.mxu0 0.0
        %1735 = vmatprep.subr.mxu0 0.0
        %1736 = vmatpush1.msra.mxu0 0.0
        %1737 = vmatprep.subr.mxu0 0.0
        %1738 = vmatpush1.msra.mxu0 0.0
        %1739 = vmatprep.subr.mxu0 0.0
        %1740 = vmatpush1.msra.mxu0 0.0
        %1741 = vmatprep.subr.mxu0 0.0
        %1742 = vmatpush1.msra.mxu0 0.0
        %1743 = vmatprep.subr.mxu0 0.0
        %1744 = vmatpush1.msra.mxu0 0.0
        %1745 = vmatprep.subr.mxu0 0.0
        %1746 = vmatpush1.msra.mxu0 0.0
        %1747 = vmatprep.subr.mxu0 0.0
        %1748 = vmatpush1.msra.mxu0 0.0
        %1749 = vmatprep.subr.mxu0 0.0
        %1750 = vmatpush1.msra.mxu0 0.0
        %1751 = vmatprep.subr.mxu0 0.0
        %1752 = vmatpush1.msra.mxu0 0.0
        %1753 = vmatprep.subr.mxu0 0.0
        %1754 = vmatpush1.msra.mxu0 0.0
        %1755 = vmatprep.mubr.f32.mxu0 0.0
        %1756 = vmatmul.mubr.f32.gmra.mrb[0].mxu0 %v1680
        %v1757 = vpop.f32.mrb[0].mxu0
        %v1758 = vadd.f32 0.0, %v1757
        %v1759 = vpop.f32.mrb[0].mxu0
        %1760 = vmatprep.mubr.f32.mxu0 0.0
        %1761 = vmatmul.mubr.f32.gmra.mrb[0].mxu0 %v1683
        %v1762 = vpop.f32.mrb[0].mxu0
        %v1763 = vadd.f32 0.0, %v1762
        %v1764 = vpop.f32.mrb[0].mxu0
        %1765 = vmatprep.mubr.f32.mxu0 0.0
        %1766 = vmatmul.mubr.f32.gmra.mrb[0].mxu0 %v1686
        %v1767 = vpop.f32.mrb[0].mxu0
        %v1768 = vadd.f32 0.0, %v1767
        %v1769 = vpop.f32.mrb[0].mxu0
        %1770 = vmatprep.mubr.f32.mxu0 0.0
        %1771 = vmatmul.mubr.f32.gmra.mrb[0].mxu0 %v1689
        %v1772 = vpop.f32.mrb[0].mxu0
        %v1773 = vadd.f32 0.0, %v1772
        %v1774 = vpop.f32.mrb[0].mxu0
        %1775 = vdwg.mxu0
        %s1776 = scalar_lea.vmem %s293, 192
        %1777 = vst.msk [vmem:[%s1776] sm:$0xff] %vm674, %v1758
        %1778 = vst.msk [vmem:[%s1776 + $0x8] sm:$0xff] %vm674, %v1763
        %1779 = vst.msk [vmem:[%s1776 + $0x10] sm:$0xff] %vm674, %v1768
        %1780 = vst.msk [vmem:[%s1776 + $0x18] sm:$0xff] %vm674, %v1773
        %1781 = vxpose.xlu0.b32.start [1/16] %v302, 128
        %1782 = vxpose.xlu0.b32.cont [2/16] 0.0, 128
        %1783 = vxpose.xlu0.b32.cont [3/16] 0.0, 128
        %1784 = vxpose.xlu0.b32.cont [4/16] 0.0, 128
        %1785 = vxpose.xlu0.b32.cont [5/16] 0.0, 128
        %1786 = vxpose.xlu0.b32.cont [6/16] 0.0, 128
        %1787 = vxpose.xlu0.b32.cont [7/16] 0.0, 128
        %1788 = vxpose.xlu0.b32.cont [8/16] 0.0, 128
        %1789 = vxpose.xlu0.b32.cont [9/16] 0.0, 128
        %1790 = vxpose.xlu0.b32.cont [10/16] 0.0, 128
        %1791 = vxpose.xlu0.b32.cont [11/16] 0.0, 128
        %1792 = vxpose.xlu0.b32.cont [12/16] 0.0, 128
        %1793 = vxpose.xlu0.b32.cont [13/16] 0.0, 128
        %1794 = vxpose.xlu0.b32.cont [14/16] 0.0, 128
        %1795 = vxpose.xlu0.b32.cont [15/16] 0.0, 128
        %1796 = vxpose.xlu0.b32.end [16/16] 0.0, 128
        %v1797 = vpop.trf.xlu0
        %v1798 = vpop.trf.xlu0
        %v1799 = vpop.trf.xlu0
        %v1800 = vpop.trf.xlu0
        %v1801 = vpop.trf.xlu0
        %v1802 = vpop.trf.xlu0
        %v1803 = vpop.trf.xlu0
        %v1804 = vpop.trf.xlu0
        %v1805 = vpop.trf.xlu0
        %v1806 = vpop.trf.xlu0
        %v1807 = vpop.trf.xlu0
        %v1808 = vpop.trf.xlu0
        %v1809 = vpop.trf.xlu0
        %v1810 = vpop.trf.xlu0
        %v1811 = vpop.trf.xlu0
        %v1812 = vpop.trf.xlu0
        %v1814 = vsel %vm875, %v1797, 0
        %v1817 = vsel %vm875, %v1798, 0
        %v1820 = vsel %vm875, %v1799, 0
        %v1823 = vsel %vm875, %v1800, 0
        %1825 = vmatprep.subr.mxu0 0.0
        %1826 = vmatpush1.msra.mxu0 %v842
        %1827 = vmatprep.subr.mxu0 0.0
        %1828 = vmatpush1.msra.mxu0 0.0
        %1829 = vmatprep.subr.mxu0 0.0
        %1830 = vmatpush1.msra.mxu0 0.0
        %1831 = vmatprep.subr.mxu0 0.0
        %1832 = vmatpush1.msra.mxu0 0.0
        %1833 = vmatprep.subr.mxu0 0.0
        %1834 = vmatpush1.msra.mxu0 0.0
        %1835 = vmatprep.subr.mxu0 0.0
        %1836 = vmatpush1.msra.mxu0 0.0
        %1837 = vmatprep.subr.mxu0 0.0
        %1838 = vmatpush1.msra.mxu0 0.0
        %1839 = vmatprep.subr.mxu0 0.0
        %1840 = vmatpush1.msra.mxu0 0.0
        %1841 = vmatprep.subr.mxu0 0.0
        %1842 = vmatpush1.msra.mxu0 0.0
        %1843 = vmatprep.subr.mxu0 0.0
        %1844 = vmatpush1.msra.mxu0 0.0
        %1845 = vmatprep.subr.mxu0 0.0
        %1846 = vmatpush1.msra.mxu0 0.0
        %1847 = vmatprep.subr.mxu0 0.0
        %1848 = vmatpush1.msra.mxu0 0.0
        %1849 = vmatprep.subr.mxu0 0.0
        %1850 = vmatpush1.msra.mxu0 0.0
        %1851 = vmatprep.subr.mxu0 0.0
        %1852 = vmatpush1.msra.mxu0 0.0
        %1853 = vmatprep.subr.mxu0 0.0
        %1854 = vmatpush1.msra.mxu0 0.0
        %1855 = vmatprep.subr.mxu0 0.0
        %1856 = vmatpush1.msra.mxu0 0.0
        %1857 = vmatprep.subr.mxu0 0.0
        %1858 = vmatpush1.msra.mxu0 0.0
        %1859 = vmatprep.subr.mxu0 0.0
        %1860 = vmatpush1.msra.mxu0 0.0
        %1861 = vmatprep.subr.mxu0 0.0
        %1862 = vmatpush1.msra.mxu0 0.0
        %1863 = vmatprep.subr.mxu0 0.0
        %1864 = vmatpush1.msra.mxu0 0.0
        %1865 = vmatprep.subr.mxu0 0.0
        %1866 = vmatpush1.msra.mxu0 0.0
        %1867 = vmatprep.subr.mxu0 0.0
        %1868 = vmatpush1.msra.mxu0 0.0
        %1869 = vmatprep.subr.mxu0 0.0
        %1870 = vmatpush1.msra.mxu0 0.0
        %1871 = vmatprep.subr.mxu0 0.0
        %1872 = vmatpush1.msra.mxu0 0.0
        %1873 = vmatprep.subr.mxu0 0.0
        %1874 = vmatpush1.msra.mxu0 0.0
        %1875 = vmatprep.subr.mxu0 0.0
        %1876 = vmatpush1.msra.mxu0 0.0
        %1877 = vmatprep.subr.mxu0 0.0
        %1878 = vmatpush1.msra.mxu0 0.0
        %1879 = vmatprep.subr.mxu0 0.0
        %1880 = vmatpush1.msra.mxu0 0.0
        %1881 = vmatprep.subr.mxu0 0.0
        %1882 = vmatpush1.msra.mxu0 0.0
        %1883 = vmatprep.subr.mxu0 0.0
        %1884 = vmatpush1.msra.mxu0 0.0
        %1885 = vmatprep.subr.mxu0 0.0
        %1886 = vmatpush1.msra.mxu0 0.0
        %1887 = vmatprep.subr.mxu0 0.0
        %1888 = vmatpush1.msra.mxu0 0.0
        %1889 = vmatprep.mubr.f32.mxu0 0.0
        %1890 = vmatmul.mubr.f32.gmra.mrb[0].mxu0 %v1814
        %v1891 = vpop.f32.mrb[0].mxu0
        %v1892 = vadd.f32 0.0, %v1891
        %v1893 = vpop.f32.mrb[0].mxu0
        %1894 = vmatprep.mubr.f32.mxu0 0.0
        %1895 = vmatmul.mubr.f32.gmra.mrb[0].mxu0 %v1817
        %v1896 = vpop.f32.mrb[0].mxu0
        %v1897 = vadd.f32 0.0, %v1896
        %v1898 = vpop.f32.mrb[0].mxu0
        %1899 = vmatprep.mubr.f32.mxu0 0.0
        %1900 = vmatmul.mubr.f32.gmra.mrb[0].mxu0 %v1820
        %v1901 = vpop.f32.mrb[0].mxu0
        %v1902 = vadd.f32 0.0, %v1901
        %v1903 = vpop.f32.mrb[0].mxu0
        %1904 = vmatprep.mubr.f32.mxu0 0.0
        %1905 = vmatmul.mubr.f32.gmra.mrb[0].mxu0 %v1823
        %v1906 = vpop.f32.mrb[0].mxu0
        %v1907 = vadd.f32 0.0, %v1906
        %v1908 = vpop.f32.mrb[0].mxu0
        %1909 = vdwg.mxu0
        %s1910 = scalar_lea.vmem %s293, 224
        %1911 = vst.msk [vmem:[%s1910] sm:$0xff] %vm674, %v1892
        %1912 = vst.msk [vmem:[%s1910 + $0x8] sm:$0xff] %vm674, %v1897
        %1913 = vst.msk [vmem:[%s1910 + $0x10] sm:$0xff] %vm674, %v1902
        %1914 = vst.msk [vmem:[%s1910 + $0x18] sm:$0xff] %vm674, %v1907
        %s1915 = smul.u32 8, %s20
        %p1916 = scmp.lt.s32.totalorder %s1915, 15
        %s1917 = scalar_select %p1916, %s1915, 15
        %s1918 = smul.addr %s1917, 4
        %s1919 = smul.addr %s1918, 8
        %s1920 = scalar_lea.vmem %s6, %s1919
        // Predicated region
        $region49: #{tpu_custom_call.1} parent=43 // pred_check
          %p1921 = pneg %p174
        $region50: #{tpu_custom_call.1} parent=43 // pred_check_branch
          %1923 = sbr.rel (%p1921) target = $region52
        $region51: #{tpu_custom_call.1} parent=43 // pred_region
          %s1924 = smul.u32 8, %s20
        $region52: #{tpu_custom_call.1} parent=43 // pred_fallthru
          _
      $region44: #{tpu_custom_call.1} parent=5 // pred_fallthru
        _
      %p1925 = scmp.le.s32.totalorder 2, %s15
      // Predicated region
      $region53: #{tpu_custom_call.1} parent=5 // pred_check
        %p1926 = pneg %p1925
      $region54: #{tpu_custom_call.1} parent=5 // pred_check_branch
        %1928 = sbr.rel (%p1926) target = $region56
      $region55: #{tpu_custom_call.1} parent=5 // pred_region
        %s1929 = ssub.s32 %s15, 2
        // Predicated region
        $region57: #{tpu_custom_call.1} parent=55 // pred_check
          %p1930 = pneg %p180
        $region58: #{tpu_custom_call.1} parent=55 // pred_check_branch
          %1932 = sbr.rel (%p1930) target = $region60
        $region59: #{tpu_custom_call.1} parent=55 // pred_region
          %s1933 = smul.u32 8, %s21
          %p1934 = scmp.lt.s32.totalorder %s1933, 15
          %s1935 = scalar_select %p1934, %s1933, 15
          %s1936 = smul.addr %s1935, 4
          %s1937 = smul.addr %s1936, 8
          %s1938 = scalar_lea.vmem %s6, %s1937
        $region60: #{tpu_custom_call.1} parent=55 // pred_fallthru
          _
      $region56: #{tpu_custom_call.1} parent=5 // pred_fallthru
        _
    $region6: #{tpu_custom_call.1} parent=1 // loop_footer
      %s19 = sadd.s32 1, %s15
    $region7: #{tpu_custom_call.1} parent=1 // loop_footer_branch
      %14 = sbr.rel target = $region3
    $region8: #{tpu_custom_call.1} parent=1 // loop_exit
      _
    %1939 = vsyncpa [#allocation3], 1
    %s1940 = scalar_lea.sflag [#allocation3], 1
    %1941 = vsyncpa %s1940, 1

</llo_original>
